<compile_context>
chip_gen: v7x
topology: tpu7x:2x2x1
jax: 0.10.0
libtpu: 0.0.40
codegen_flags: <defaults>
</compile_context>

<pallas_src>
import functools

import jax
import jax.numpy as jnp
from jax import lax
from jax.experimental import pallas as pl
from jax.experimental.pallas import tpu as pltpu


def _mha_kernel(*refs, num_heads, kv_shared, use_scratch):
    xq_ref = refs[0]
    if kv_shared:
        xk_ref = xv_ref = refs[1]
        w0 = 2
    else:
        xk_ref, xv_ref = refs[1], refs[2]
        w0 = 3
    (wq_ref, bq_ref, wkT_ref, bkT_ref, wvT_ref, bvT_ref,
     wo_ref, bo_ref, out_ref) = refs[w0:w0 + 9]
    if use_scratch:
        k_scr, v_scr = refs[w0 + 9:]

    def project_kT_vT(h, xk, xv, dtype):
        # K_h.T and V_h.T produced directly in (d, n) form: contract the embed
        # axis of the PyTorch-layout weight rows with the embed axis of x.
        khT = (lax.dot_general(wkT_ref[h], xk, (((1,), (1,)), ((), ())),
                               preferred_element_type=jnp.float32)
               + bkT_ref[h]).astype(dtype)                    # (d, n)
        vhT = (lax.dot_general(wvT_ref[h], xv, (((1,), (1,)), ((), ())),
                               preferred_element_type=jnp.float32)
               + bvT_ref[h]).astype(dtype)                    # (d, n)
        return khT, vhT

    if use_scratch:
        # Project K and V once per batch element.  The query-tile axis is the
        # innermost grid axis ("arbitrary") and the K/V block index is constant
        # across it, so the block is fetched once and the projections are
        # reused by every query tile of this batch element.
        @pl.when(pl.program_id(1) == 0)
        def _project_kv():
            xk = xk_ref[0]                                    # (n, c)
            xv = xk if kv_shared else xv_ref[0]
            for h in range(num_heads):
                khT, vhT = project_kT_vT(h, xk, xv, k_scr.dtype)
                k_scr[h] = khT
                v_scr[h] = vhT

    xq = xq_ref[0]                                            # (tq, c)
    dtype = xq.dtype
    tq, c = xq.shape

    if not use_scratch:
        xk = xk_ref[0]
        xv = xk if kv_shared else xv_ref[0]

    # f32 output-projection accumulator; single dense (tq, c) store at the end
    # (no per-head concatenate / masked partial stores).
    acc = jnp.zeros((tq, c), jnp.float32)
    for h in range(num_heads):
        # Q projection for this head; softmax scale is pre-folded into wq/bq.
        qh = (jnp.dot(xq, wq_ref[h], preferred_element_type=jnp.float32)
              + bq_ref[h]).astype(dtype)                      # (tq, d)

        if use_scratch:
            khT = k_scr[h]                                    # (d, n)
            vhT = v_scr[h]                                    # (d, n)
        else:
            khT, vhT = project_kT_vT(h, xk, xv, dtype)

        # q @ k.T as a plain (tq,d)x(d,n) matmul (no in-kernel transpose).
        s = jnp.dot(qh, khT, preferred_element_type=jnp.float32)   # (tq, n)

        # Numerically stable softmax; normalization via the EUP reciprocal.
        m = jnp.max(s, axis=-1, keepdims=True)
        e = jnp.exp(s - m)
        p = e * pl.reciprocal(jnp.sum(e, axis=-1, keepdims=True), approx=True)
        # dropout(p=0.0) -> identity

        # p @ v with V held transposed: contract the key axis of both.
        oh = lax.dot_general(p.astype(dtype), vhT, (((1,), (1,)), ((), ())),
                             preferred_element_type=jnp.float32)   # (tq, d)
        # Per-head slice of the output projection, accumulated in f32.
        acc = acc + jnp.dot(oh.astype(dtype), wo_ref[h],
                            preferred_element_type=jnp.float32)    # (tq, c)

    out_ref[0] = (acc + bo_ref[...]).astype(out_ref.dtype)


def _pick_q_tile(n):
    if n <= 256:
        return n
    for t in (256, 128, 64, 32, 16, 8):
        if n % t == 0:
            return t
    return n


def multihead_attention_pallas(xq, xk, xv, params, num_heads, q_tile=None):
    b, n, c = xq.shape
    assert c % num_heads == 0
    d = c // num_heads
    scale = float(d) ** -0.5

    wq, bq, wk, bk, wv, bv, wo, bo = params
    # Host-side weight pre-arrangement (per-head, scale folded into Q); done
    # once in XLA outside the kernel on tiny (c, c) tensors, so no in-kernel
    # transpose / relayout or per-tile scaling is needed.
    wq_h = wq.reshape(num_heads, d, c).transpose(0, 2, 1) * scale   # (h, c, d)
    bq_h = bq.reshape(num_heads, 1, d) * scale
    wkT_h = wk.reshape(num_heads, d, c)                             # (h, d, c)
    bkT_h = bk.reshape(num_heads, d, 1)
    wvT_h = wv.reshape(num_heads, d, c)
    bvT_h = bv.reshape(num_heads, d, 1)
    wo_h = wo.T.reshape(num_heads, d, c)                            # (h, d, c)
    bo_2 = bo.reshape(1, c)

    if q_tile is None:
        q_tile = _pick_q_tile(n)
    assert n % q_tile == 0 and (q_tile == n or q_tile % 8 == 0)
    n_q_tiles = n // q_tile
    # Only spend VMEM scratch (and the store/reload round trip) on the cached
    # K/V projection when more than one query tile will reuse it.
    use_scratch = n_q_tiles > 1

    # Encoder self-attention passes the same tensor for k and v -> DMA it once.
    kv_shared = xv is xk

    seq_q_spec = pl.BlockSpec((1, q_tile, c), lambda bi, qi: (bi, qi, 0))
    seq_kv_spec = pl.BlockSpec((1, n, c), lambda bi, qi: (bi, 0, 0))
    wq_spec = pl.BlockSpec((num_heads, c, d), lambda bi, qi: (0, 0, 0))
    bq_spec = pl.BlockSpec((num_heads, 1, d), lambda bi, qi: (0, 0, 0))
    wT_spec = pl.BlockSpec((num_heads, d, c), lambda bi, qi: (0, 0, 0))
    bT_spec = pl.BlockSpec((num_heads, d, 1), lambda bi, qi: (0, 0, 0))
    wo_spec = pl.BlockSpec((num_heads, d, c), lambda bi, qi: (0, 0, 0))
    bo_spec = pl.BlockSpec((1, c), lambda bi, qi: (0, 0))

    if kv_shared:
        seq_inputs = [xq, xk]
        seq_specs = [seq_q_spec, seq_kv_spec]
    else:
        seq_inputs = [xq, xk, xv]
        seq_specs = [seq_q_spec, seq_kv_spec, seq_kv_spec]

    scratch_shapes = ([pltpu.VMEM((num_heads, d, n), xq.dtype),
                       pltpu.VMEM((num_heads, d, n), xq.dtype)]
                      if use_scratch else [])

    kernel = functools.partial(_mha_kernel, num_heads=num_heads,
                               kv_shared=kv_shared, use_scratch=use_scratch)

    return pl.pallas_call(
        kernel,
        out_shape=jax.ShapeDtypeStruct((b, n, c), xq.dtype),
        grid_spec=pltpu.PrefetchScalarGridSpec(
            num_scalar_prefetch=0,
            grid=(b, n_q_tiles),
            in_specs=seq_specs + [wq_spec, bq_spec, wT_spec, bT_spec,
                                  wT_spec, bT_spec, wo_spec, bo_spec],
            out_specs=pl.BlockSpec((1, q_tile, c), lambda bi, qi: (bi, qi, 0)),
            scratch_shapes=scratch_shapes,
        ),
        compiler_params=pltpu.CompilerParams(
            dimension_semantics=("parallel", "arbitrary"),
            vmem_limit_bytes=32 * 1024 * 1024,
        ),
    )(*seq_inputs, wq_h, bq_h, wkT_h, bkT_h, wvT_h, bvT_h, wo_h, bo_2)


def _init_params(key, embed_dim):
    """Deterministic init mirroring the PyTorch module's _reset_parameters."""
    c = embed_dim
    ks = jax.random.split(key, 5)
    a = (6.0 / (c + c)) ** 0.5
    wq = jax.random.uniform(ks[0], (c, c), jnp.float32, -a, a)
    wk = jax.random.uniform(ks[1], (c, c), jnp.float32, -a, a)
    wv = jax.random.uniform(ks[2], (c, c), jnp.float32, -a, a)
    bq = jnp.zeros((c,), jnp.float32)
    bk = jnp.zeros((c,), jnp.float32)
    bv = jnp.zeros((c,), jnp.float32)
    bound = 1.0 / (c ** 0.5)
    wo = jax.random.uniform(ks[3], (c, c), jnp.float32, -bound, bound)
    bo = jax.random.uniform(ks[4], (c,), jnp.float32, -bound, bound)
    return (wq, bq, wk, bk, wv, bv, wo, bo)


def _reference(xq, xk, xv, params, num_heads):
    """Pure-JAX reference for correctness check."""
    wq, bq, wk, bk, wv, bv, wo, bo = params
    b, n, c = xq.shape
    d = c // num_heads
    scale = d ** (-0.5)
    q = xq @ wq.T + bq
    k = xk @ wk.T + bk
    v = xv @ wv.T + bv
    q = q.reshape(b, n, num_heads, d).transpose(0, 2, 1, 3)
    k = k.reshape(b, n, num_heads, d).transpose(0, 2, 1, 3)
    v = v.reshape(b, n, num_heads, d).transpose(0, 2, 1, 3)
    dots = jnp.einsum('bhid,bhjd->bhij', q, k) * scale
    attn = jax.nn.softmax(dots, axis=-1)
    out = jnp.einsum('bhij,bhjd->bhid', attn, v)
    out = out.transpose(0, 2, 1, 3).reshape(b, n, c)
    return out @ wo.T + bo


if __name__ == "__main__":
    key = jax.random.PRNGKey(0)
    k1, k2, k3, k4, k5 = jax.random.split(key, 5)

    # Case 1: encoder-style self-attention (q = k = v), spatial 4x4 -> n = 16,
    # embed_dim = 32, 8 heads; q_tile=8 exercises the query-tile grid axis and
    # the cached per-batch K/V projection (shared-kv input path + VMEM scratch).
    batch, hspat, wspat, embed_dim, num_heads = 2, 4, 4, 32, 8
    n = hspat * wspat
    x = jax.random.normal(k1, (batch, n, embed_dim), jnp.float32)
    params = _init_params(k4, embed_dim)

    out1 = multihead_attention_pallas(x, x, x, params, num_heads, q_tile=8)
    out1 = jax.block_until_ready(out1)
    ref1 = _reference(x, x, x, params, num_heads)
    assert out1.shape == (batch, n, embed_dim)
    assert jnp.allclose(out1, ref1, atol=1e-2, rtol=1e-2), \
        float(jnp.max(jnp.abs(out1 - ref1)))

    # Case 2: distinct q/k/v inputs (general MHA path), seq = 8, single query
    # tile -> scratch-free in-register K/V path.
    n2 = 8
    xq = jax.random.normal(k2, (batch, n2, embed_dim), jnp.float32)
    xk = jax.random.normal(k3, (batch, n2, embed_dim), jnp.float32)
    xv = jax.random.normal(k5, (batch, n2, embed_dim), jnp.float32)
    out2 = multihead_attention_pallas(xq, xk, xv, params, num_heads)
    out2 = jax.block_until_ready(out2)
    ref2 = _reference(xq, xk, xv, params, num_heads)
    assert out2.shape == (batch, n2, embed_dim)
    assert jnp.allclose(out2, ref2, atol=1e-2, rtol=1e-2), \
        float(jnp.max(jnp.abs(out2 - ref2)))

    print("KERNEL_OK")
</pallas_src>

<mosaic_0001>
module attributes {stable_mosaic.version = 11 : i64} {
  func.func @_mha_kernel(%arg0: i32, %arg1: i32, %arg2: memref<1x8x32xf32, #tpu.memory_space<vmem>>, %arg3: memref<1x16x32xf32, #tpu.memory_space<vmem>>, %arg4: memref<8x32x4xf32, #tpu.memory_space<vmem>>, %arg5: memref<8x1x4xf32, #tpu.memory_space<vmem>>, %arg6: memref<8x4x32xf32, #tpu.memory_space<vmem>>, %arg7: memref<8x4x1xf32, #tpu.memory_space<vmem>>, %arg8: memref<8x4x32xf32, #tpu.memory_space<vmem>>, %arg9: memref<8x4x1xf32, #tpu.memory_space<vmem>>, %arg10: memref<8x4x32xf32, #tpu.memory_space<vmem>>, %arg11: memref<1x32xf32, #tpu.memory_space<vmem>>, %arg12: memref<1x8x32xf32, #tpu.memory_space<vmem>>, %arg13: memref<8x4x16xf32, #tpu.memory_space<vmem>>, %arg14: memref<8x4x16xf32, #tpu.memory_space<vmem>>) attributes {dimension_semantics = [#tpu.dimension_semantics<parallel>, #tpu.dimension_semantics<arbitrary>], iteration_bounds = array<i64: 2, 2>, scalar_prefetch = 0 : i64, scratch_operands = 2 : i64, tpu.core_type = #tpu.core_type<tc>, window_params = [{transform_indices = @transform_0, window_bounds = array<i64: 1, 8, 32>}, {transform_indices = @transform_1, window_bounds = array<i64: 1, 16, 32>}, {pipeline_mode = #tpu.pipeline_mode<synchronous>, transform_indices = @transform_2, window_bounds = array<i64: 8, 32, 4>}, {pipeline_mode = #tpu.pipeline_mode<synchronous>, transform_indices = @transform_3, window_bounds = array<i64: 8, 1, 4>}, {pipeline_mode = #tpu.pipeline_mode<synchronous>, transform_indices = @transform_4, window_bounds = array<i64: 8, 4, 32>}, {pipeline_mode = #tpu.pipeline_mode<synchronous>, transform_indices = @transform_5, window_bounds = array<i64: 8, 4, 1>}, {pipeline_mode = #tpu.pipeline_mode<synchronous>, transform_indices = @transform_6, window_bounds = array<i64: 8, 4, 32>}, {pipeline_mode = #tpu.pipeline_mode<synchronous>, transform_indices = @transform_7, window_bounds = array<i64: 8, 4, 1>}, {pipeline_mode = #tpu.pipeline_mode<synchronous>, transform_indices = @transform_8, window_bounds = array<i64: 8, 4, 32>}, {pipeline_mode = #tpu.pipeline_mode<synchronous>, transform_indices = @transform_9, window_bounds = array<i64: 1, 32>}, {transform_indices = @transform_10, window_bounds = array<i64: 1, 8, 32>}]} {
    %c0_i32 = arith.constant 0 : i32
    %0 = arith.cmpi eq, %arg1, %c0_i32 : i32
    %1 = arith.extui %0 : i1 to i32
    %c0_i32_0 = arith.constant 0 : i32
    %2 = arith.cmpi ne, %1, %c0_i32_0 : i32
    scf.if %2 {
      %c0_169 = arith.constant 0 : index
      %c0_170 = arith.constant 0 : index
      %c0_171 = arith.constant 0 : index
      %228 = vector.load %arg3[%c0_169, %c0_170, %c0_171] : memref<1x16x32xf32, #tpu.memory_space<vmem>>, vector<1x16x32xf32>
      %229 = vector.shape_cast %228 : vector<1x16x32xf32> to vector<16x32xf32>
      %c0_172 = arith.constant 0 : index
      %c0_173 = arith.constant 0 : index
      %c0_174 = arith.constant 0 : index
      %230 = vector.load %arg6[%c0_172, %c0_173, %c0_174] : memref<8x4x32xf32, #tpu.memory_space<vmem>>, vector<1x4x32xf32>
      %231 = vector.shape_cast %230 : vector<1x4x32xf32> to vector<4x32xf32>
      %cst_175 = arith.constant dense<0.000000e+00> : vector<4x16xf32>
      %232 = tpu.matmul %231, %229, %cst_175 {dimension_numbers = #tpu.dot_dimension_numbers<[1], [1], [0], [0], [0, 0, 1, 0], [], []>} : vector<4x32xf32>, vector<16x32xf32>, vector<4x16xf32> -> vector<4x16xf32>
      %c0_176 = arith.constant 0 : index
      %c0_177 = arith.constant 0 : index
      %c0_178 = arith.constant 0 : index
      %233 = vector.load %arg7[%c0_176, %c0_177, %c0_178] : memref<8x4x1xf32, #tpu.memory_space<vmem>>, vector<1x4x1xf32>
      %234 = vector.shape_cast %233 : vector<1x4x1xf32> to vector<4x1xf32>
      %235 = vector.broadcast %234 : vector<4x1xf32> to vector<4x16xf32>
      %236 = arith.addf %232, %235 : vector<4x16xf32>
      %c0_179 = arith.constant 0 : index
      %c0_180 = arith.constant 0 : index
      %c0_181 = arith.constant 0 : index
      %237 = vector.load %arg8[%c0_179, %c0_180, %c0_181] : memref<8x4x32xf32, #tpu.memory_space<vmem>>, vector<1x4x32xf32>
      %238 = vector.shape_cast %237 : vector<1x4x32xf32> to vector<4x32xf32>
      %cst_182 = arith.constant dense<0.000000e+00> : vector<4x16xf32>
      %239 = tpu.matmul %238, %229, %cst_182 {dimension_numbers = #tpu.dot_dimension_numbers<[1], [1], [0], [0], [0, 0, 1, 0], [], []>} : vector<4x32xf32>, vector<16x32xf32>, vector<4x16xf32> -> vector<4x16xf32>
      %c0_183 = arith.constant 0 : index
      %c0_184 = arith.constant 0 : index
      %c0_185 = arith.constant 0 : index
      %240 = vector.load %arg9[%c0_183, %c0_184, %c0_185] : memref<8x4x1xf32, #tpu.memory_space<vmem>>, vector<1x4x1xf32>
      %241 = vector.shape_cast %240 : vector<1x4x1xf32> to vector<4x1xf32>
      %242 = vector.broadcast %241 : vector<4x1xf32> to vector<4x16xf32>
      %243 = arith.addf %239, %242 : vector<4x16xf32>
      %c0_186 = arith.constant 0 : index
      %c0_187 = arith.constant 0 : index
      %c0_188 = arith.constant 0 : index
      %244 = vector.load %arg13[%c0_186, %c0_187, %c0_188] : memref<8x4x16xf32, #tpu.memory_space<vmem>>, vector<1x4x16xf32>
      %245 = vector.shape_cast %244 : vector<1x4x16xf32> to vector<4x16xf32>
      %246 = vector.shape_cast %236 : vector<4x16xf32> to vector<1x4x16xf32>
      tpu.vector_store %arg13[%c0_186, %c0_187, %c0_188], %246 {strides = array<i32>} : memref<8x4x16xf32, #tpu.memory_space<vmem>>, vector<1x4x16xf32>,
      %c0_189 = arith.constant 0 : index
      %c0_190 = arith.constant 0 : index
      %c0_191 = arith.constant 0 : index
      %247 = vector.load %arg14[%c0_189, %c0_190, %c0_191] : memref<8x4x16xf32, #tpu.memory_space<vmem>>, vector<1x4x16xf32>
      %248 = vector.shape_cast %247 : vector<1x4x16xf32> to vector<4x16xf32>
      %249 = vector.shape_cast %243 : vector<4x16xf32> to vector<1x4x16xf32>
      tpu.vector_store %arg14[%c0_189, %c0_190, %c0_191], %249 {strides = array<i32>} : memref<8x4x16xf32, #tpu.memory_space<vmem>>, vector<1x4x16xf32>,
      %c1_192 = arith.constant 1 : index
      %c0_193 = arith.constant 0 : index
      %c0_194 = arith.constant 0 : index
      %250 = vector.load %arg6[%c1_192, %c0_193, %c0_194] : memref<8x4x32xf32, #tpu.memory_space<vmem>>, vector<1x4x32xf32>
      %251 = vector.shape_cast %250 : vector<1x4x32xf32> to vector<4x32xf32>
      %cst_195 = arith.constant dense<0.000000e+00> : vector<4x16xf32>
      %252 = tpu.matmul %251, %229, %cst_195 {dimension_numbers = #tpu.dot_dimension_numbers<[1], [1], [0], [0], [0, 0, 1, 0], [], []>} : vector<4x32xf32>, vector<16x32xf32>, vector<4x16xf32> -> vector<4x16xf32>
      %c1_196 = arith.constant 1 : index
      %c0_197 = arith.constant 0 : index
      %c0_198 = arith.constant 0 : index
      %253 = vector.load %arg7[%c1_196, %c0_197, %c0_198] : memref<8x4x1xf32, #tpu.memory_space<vmem>>, vector<1x4x1xf32>
      %254 = vector.shape_cast %253 : vector<1x4x1xf32> to vector<4x1xf32>
      %255 = vector.broadcast %254 : vector<4x1xf32> to vector<4x16xf32>
      %256 = arith.addf %252, %255 : vector<4x16xf32>
      %c1_199 = arith.constant 1 : index
      %c0_200 = arith.constant 0 : index
      %c0_201 = arith.constant 0 : index
      %257 = vector.load %arg8[%c1_199, %c0_200, %c0_201] : memref<8x4x32xf32, #tpu.memory_space<vmem>>, vector<1x4x32xf32>
      %258 = vector.shape_cast %257 : vector<1x4x32xf32> to vector<4x32xf32>
      %cst_202 = arith.constant dense<0.000000e+00> : vector<4x16xf32>
      %259 = tpu.matmul %258, %229, %cst_202 {dimension_numbers = #tpu.dot_dimension_numbers<[1], [1], [0], [0], [0, 0, 1, 0], [], []>} : vector<4x32xf32>, vector<16x32xf32>, vector<4x16xf32> -> vector<4x16xf32>
      %c1_203 = arith.constant 1 : index
      %c0_204 = arith.constant 0 : index
      %c0_205 = arith.constant 0 : index
      %260 = vector.load %arg9[%c1_203, %c0_204, %c0_205] : memref<8x4x1xf32, #tpu.memory_space<vmem>>, vector<1x4x1xf32>
      %261 = vector.shape_cast %260 : vector<1x4x1xf32> to vector<4x1xf32>
      %262 = vector.broadcast %261 : vector<4x1xf32> to vector<4x16xf32>
      %263 = arith.addf %259, %262 : vector<4x16xf32>
      %c1_206 = arith.constant 1 : index
      %c0_207 = arith.constant 0 : index
      %c0_208 = arith.constant 0 : index
      %264 = vector.load %arg13[%c1_206, %c0_207, %c0_208] : memref<8x4x16xf32, #tpu.memory_space<vmem>>, vector<1x4x16xf32>
      %265 = vector.shape_cast %264 : vector<1x4x16xf32> to vector<4x16xf32>
      %266 = vector.shape_cast %256 : vector<4x16xf32> to vector<1x4x16xf32>
      tpu.vector_store %arg13[%c1_206, %c0_207, %c0_208], %266 {strides = array<i32>} : memref<8x4x16xf32, #tpu.memory_space<vmem>>, vector<1x4x16xf32>,
      %c1_209 = arith.constant 1 : index
      %c0_210 = arith.constant 0 : index
      %c0_211 = arith.constant 0 : index
      %267 = vector.load %arg14[%c1_209, %c0_210, %c0_211] : memref<8x4x16xf32, #tpu.memory_space<vmem>>, vector<1x4x16xf32>
      %268 = vector.shape_cast %267 : vector<1x4x16xf32> to vector<4x16xf32>
      %269 = vector.shape_cast %263 : vector<4x16xf32> to vector<1x4x16xf32>
      tpu.vector_store %arg14[%c1_209, %c0_210, %c0_211], %269 {strides = array<i32>} : memref<8x4x16xf32, #tpu.memory_space<vmem>>, vector<1x4x16xf32>,
      %c2_212 = arith.constant 2 : index
      %c0_213 = arith.constant 0 : index
      %c0_214 = arith.constant 0 : index
      %270 = vector.load %arg6[%c2_212, %c0_213, %c0_214] : memref<8x4x32xf32, #tpu.memory_space<vmem>>, vector<1x4x32xf32>
      %271 = vector.shape_cast %270 : vector<1x4x32xf32> to vector<4x32xf32>
      %cst_215 = arith.constant dense<0.000000e+00> : vector<4x16xf32>
      %272 = tpu.matmul %271, %229, %cst_215 {dimension_numbers = #tpu.dot_dimension_numbers<[1], [1], [0], [0], [0, 0, 1, 0], [], []>} : vector<4x32xf32>, vector<16x32xf32>, vector<4x16xf32> -> vector<4x16xf32>
      %c2_216 = arith.constant 2 : index
      %c0_217 = arith.constant 0 : index
      %c0_218 = arith.constant 0 : index
      %273 = vector.load %arg7[%c2_216, %c0_217, %c0_218] : memref<8x4x1xf32, #tpu.memory_space<vmem>>, vector<1x4x1xf32>
      %274 = vector.shape_cast %273 : vector<1x4x1xf32> to vector<4x1xf32>
      %275 = vector.broadcast %274 : vector<4x1xf32> to vector<4x16xf32>
      %276 = arith.addf %272, %275 : vector<4x16xf32>
      %c2_219 = arith.constant 2 : index
      %c0_220 = arith.constant 0 : index
      %c0_221 = arith.constant 0 : index
      %277 = vector.load %arg8[%c2_219, %c0_220, %c0_221] : memref<8x4x32xf32, #tpu.memory_space<vmem>>, vector<1x4x32xf32>
      %278 = vector.shape_cast %277 : vector<1x4x32xf32> to vector<4x32xf32>
      %cst_222 = arith.constant dense<0.000000e+00> : vector<4x16xf32>
      %279 = tpu.matmul %278, %229, %cst_222 {dimension_numbers = #tpu.dot_dimension_numbers<[1], [1], [0], [0], [0, 0, 1, 0], [], []>} : vector<4x32xf32>, vector<16x32xf32>, vector<4x16xf32> -> vector<4x16xf32>
      %c2_223 = arith.constant 2 : index
      %c0_224 = arith.constant 0 : index
      %c0_225 = arith.constant 0 : index
      %280 = vector.load %arg9[%c2_223, %c0_224, %c0_225] : memref<8x4x1xf32, #tpu.memory_space<vmem>>, vector<1x4x1xf32>
      %281 = vector.shape_cast %280 : vector<1x4x1xf32> to vector<4x1xf32>
      %282 = vector.broadcast %281 : vector<4x1xf32> to vector<4x16xf32>
      %283 = arith.addf %279, %282 : vector<4x16xf32>
      %c2_226 = arith.constant 2 : index
      %c0_227 = arith.constant 0 : index
      %c0_228 = arith.constant 0 : index
      %284 = vector.load %arg13[%c2_226, %c0_227, %c0_228] : memref<8x4x16xf32, #tpu.memory_space<vmem>>, vector<1x4x16xf32>
      %285 = vector.shape_cast %284 : vector<1x4x16xf32> to vector<4x16xf32>
      %286 = vector.shape_cast %276 : vector<4x16xf32> to vector<1x4x16xf32>
      tpu.vector_store %arg13[%c2_226, %c0_227, %c0_228], %286 {strides = array<i32>} : memref<8x4x16xf32, #tpu.memory_space<vmem>>, vector<1x4x16xf32>,
      %c2_229 = arith.constant 2 : index
      %c0_230 = arith.constant 0 : index
      %c0_231 = arith.constant 0 : index
      %287 = vector.load %arg14[%c2_229, %c0_230, %c0_231] : memref<8x4x16xf32, #tpu.memory_space<vmem>>, vector<1x4x16xf32>
      %288 = vector.shape_cast %287 : vector<1x4x16xf32> to vector<4x16xf32>
      %289 = vector.shape_cast %283 : vector<4x16xf32> to vector<1x4x16xf32>
      tpu.vector_store %arg14[%c2_229, %c0_230, %c0_231], %289 {strides = array<i32>} : memref<8x4x16xf32, #tpu.memory_space<vmem>>, vector<1x4x16xf32>,
      %c3_232 = arith.constant 3 : index
      %c0_233 = arith.constant 0 : index
      %c0_234 = arith.constant 0 : index
      %290 = vector.load %arg6[%c3_232, %c0_233, %c0_234] : memref<8x4x32xf32, #tpu.memory_space<vmem>>, vector<1x4x32xf32>
      %291 = vector.shape_cast %290 : vector<1x4x32xf32> to vector<4x32xf32>
      %cst_235 = arith.constant dense<0.000000e+00> : vector<4x16xf32>
      %292 = tpu.matmul %291, %229, %cst_235 {dimension_numbers = #tpu.dot_dimension_numbers<[1], [1], [0], [0], [0, 0, 1, 0], [], []>} : vector<4x32xf32>, vector<16x32xf32>, vector<4x16xf32> -> vector<4x16xf32>
      %c3_236 = arith.constant 3 : index
      %c0_237 = arith.constant 0 : index
      %c0_238 = arith.constant 0 : index
      %293 = vector.load %arg7[%c3_236, %c0_237, %c0_238] : memref<8x4x1xf32, #tpu.memory_space<vmem>>, vector<1x4x1xf32>
      %294 = vector.shape_cast %293 : vector<1x4x1xf32> to vector<4x1xf32>
      %295 = vector.broadcast %294 : vector<4x1xf32> to vector<4x16xf32>
      %296 = arith.addf %292, %295 : vector<4x16xf32>
      %c3_239 = arith.constant 3 : index
      %c0_240 = arith.constant 0 : index
      %c0_241 = arith.constant 0 : index
      %297 = vector.load %arg8[%c3_239, %c0_240, %c0_241] : memref<8x4x32xf32, #tpu.memory_space<vmem>>, vector<1x4x32xf32>
      %298 = vector.shape_cast %297 : vector<1x4x32xf32> to vector<4x32xf32>
      %cst_242 = arith.constant dense<0.000000e+00> : vector<4x16xf32>
      %299 = tpu.matmul %298, %229, %cst_242 {dimension_numbers = #tpu.dot_dimension_numbers<[1], [1], [0], [0], [0, 0, 1, 0], [], []>} : vector<4x32xf32>, vector<16x32xf32>, vector<4x16xf32> -> vector<4x16xf32>
      %c3_243 = arith.constant 3 : index
      %c0_244 = arith.constant 0 : index
      %c0_245 = arith.constant 0 : index
      %300 = vector.load %arg9[%c3_243, %c0_244, %c0_245] : memref<8x4x1xf32, #tpu.memory_space<vmem>>, vector<1x4x1xf32>
      %301 = vector.shape_cast %300 : vector<1x4x1xf32> to vector<4x1xf32>
      %302 = vector.broadcast %301 : vector<4x1xf32> to vector<4x16xf32>
      %303 = arith.addf %299, %302 : vector<4x16xf32>
      %c3_246 = arith.constant 3 : index
      %c0_247 = arith.constant 0 : index
      %c0_248 = arith.constant 0 : index
      %304 = vector.load %arg13[%c3_246, %c0_247, %c0_248] : memref<8x4x16xf32, #tpu.memory_space<vmem>>, vector<1x4x16xf32>
      %305 = vector.shape_cast %304 : vector<1x4x16xf32> to vector<4x16xf32>
      %306 = vector.shape_cast %296 : vector<4x16xf32> to vector<1x4x16xf32>
      tpu.vector_store %arg13[%c3_246, %c0_247, %c0_248], %306 {strides = array<i32>} : memref<8x4x16xf32, #tpu.memory_space<vmem>>, vector<1x4x16xf32>,
      %c3_249 = arith.constant 3 : index
      %c0_250 = arith.constant 0 : index
      %c0_251 = arith.constant 0 : index
      %307 = vector.load %arg14[%c3_249, %c0_250, %c0_251] : memref<8x4x16xf32, #tpu.memory_space<vmem>>, vector<1x4x16xf32>
      %308 = vector.shape_cast %307 : vector<1x4x16xf32> to vector<4x16xf32>
      %309 = vector.shape_cast %303 : vector<4x16xf32> to vector<1x4x16xf32>
      tpu.vector_store %arg14[%c3_249, %c0_250, %c0_251], %309 {strides = array<i32>} : memref<8x4x16xf32, #tpu.memory_space<vmem>>, vector<1x4x16xf32>,
      %c4_252 = arith.constant 4 : index
      %c0_253 = arith.constant 0 : index
      %c0_254 = arith.constant 0 : index
      %310 = vector.load %arg6[%c4_252, %c0_253, %c0_254] : memref<8x4x32xf32, #tpu.memory_space<vmem>>, vector<1x4x32xf32>
      %311 = vector.shape_cast %310 : vector<1x4x32xf32> to vector<4x32xf32>
      %cst_255 = arith.constant dense<0.000000e+00> : vector<4x16xf32>
      %312 = tpu.matmul %311, %229, %cst_255 {dimension_numbers = #tpu.dot_dimension_numbers<[1], [1], [0], [0], [0, 0, 1, 0], [], []>} : vector<4x32xf32>, vector<16x32xf32>, vector<4x16xf32> -> vector<4x16xf32>
      %c4_256 = arith.constant 4 : index
      %c0_257 = arith.constant 0 : index
      %c0_258 = arith.constant 0 : index
      %313 = vector.load %arg7[%c4_256, %c0_257, %c0_258] : memref<8x4x1xf32, #tpu.memory_space<vmem>>, vector<1x4x1xf32>
      %314 = vector.shape_cast %313 : vector<1x4x1xf32> to vector<4x1xf32>
      %315 = vector.broadcast %314 : vector<4x1xf32> to vector<4x16xf32>
      %316 = arith.addf %312, %315 : vector<4x16xf32>
      %c4_259 = arith.constant 4 : index
      %c0_260 = arith.constant 0 : index
      %c0_261 = arith.constant 0 : index
      %317 = vector.load %arg8[%c4_259, %c0_260, %c0_261] : memref<8x4x32xf32, #tpu.memory_space<vmem>>, vector<1x4x32xf32>
      %318 = vector.shape_cast %317 : vector<1x4x32xf32> to vector<4x32xf32>
      %cst_262 = arith.constant dense<0.000000e+00> : vector<4x16xf32>
      %319 = tpu.matmul %318, %229, %cst_262 {dimension_numbers = #tpu.dot_dimension_numbers<[1], [1], [0], [0], [0, 0, 1, 0], [], []>} : vector<4x32xf32>, vector<16x32xf32>, vector<4x16xf32> -> vector<4x16xf32>
      %c4_263 = arith.constant 4 : index
      %c0_264 = arith.constant 0 : index
      %c0_265 = arith.constant 0 : index
      %320 = vector.load %arg9[%c4_263, %c0_264, %c0_265] : memref<8x4x1xf32, #tpu.memory_space<vmem>>, vector<1x4x1xf32>
      %321 = vector.shape_cast %320 : vector<1x4x1xf32> to vector<4x1xf32>
      %322 = vector.broadcast %321 : vector<4x1xf32> to vector<4x16xf32>
      %323 = arith.addf %319, %322 : vector<4x16xf32>
      %c4_266 = arith.constant 4 : index
      %c0_267 = arith.constant 0 : index
      %c0_268 = arith.constant 0 : index
      %324 = vector.load %arg13[%c4_266, %c0_267, %c0_268] : memref<8x4x16xf32, #tpu.memory_space<vmem>>, vector<1x4x16xf32>
      %325 = vector.shape_cast %324 : vector<1x4x16xf32> to vector<4x16xf32>
      %326 = vector.shape_cast %316 : vector<4x16xf32> to vector<1x4x16xf32>
      tpu.vector_store %arg13[%c4_266, %c0_267, %c0_268], %326 {strides = array<i32>} : memref<8x4x16xf32, #tpu.memory_space<vmem>>, vector<1x4x16xf32>,
      %c4_269 = arith.constant 4 : index
      %c0_270 = arith.constant 0 : index
      %c0_271 = arith.constant 0 : index
      %327 = vector.load %arg14[%c4_269, %c0_270, %c0_271] : memref<8x4x16xf32, #tpu.memory_space<vmem>>, vector<1x4x16xf32>
      %328 = vector.shape_cast %327 : vector<1x4x16xf32> to vector<4x16xf32>
      %329 = vector.shape_cast %323 : vector<4x16xf32> to vector<1x4x16xf32>
      tpu.vector_store %arg14[%c4_269, %c0_270, %c0_271], %329 {strides = array<i32>} : memref<8x4x16xf32, #tpu.memory_space<vmem>>, vector<1x4x16xf32>,
      %c5_272 = arith.constant 5 : index
      %c0_273 = arith.constant 0 : index
      %c0_274 = arith.constant 0 : index
      %330 = vector.load %arg6[%c5_272, %c0_273, %c0_274] : memref<8x4x32xf32, #tpu.memory_space<vmem>>, vector<1x4x32xf32>
      %331 = vector.shape_cast %330 : vector<1x4x32xf32> to vector<4x32xf32>
      %cst_275 = arith.constant dense<0.000000e+00> : vector<4x16xf32>
      %332 = tpu.matmul %331, %229, %cst_275 {dimension_numbers = #tpu.dot_dimension_numbers<[1], [1], [0], [0], [0, 0, 1, 0], [], []>} : vector<4x32xf32>, vector<16x32xf32>, vector<4x16xf32> -> vector<4x16xf32>
      %c5_276 = arith.constant 5 : index
      %c0_277 = arith.constant 0 : index
      %c0_278 = arith.constant 0 : index
      %333 = vector.load %arg7[%c5_276, %c0_277, %c0_278] : memref<8x4x1xf32, #tpu.memory_space<vmem>>, vector<1x4x1xf32>
      %334 = vector.shape_cast %333 : vector<1x4x1xf32> to vector<4x1xf32>
      %335 = vector.broadcast %334 : vector<4x1xf32> to vector<4x16xf32>
      %336 = arith.addf %332, %335 : vector<4x16xf32>
      %c5_279 = arith.constant 5 : index
      %c0_280 = arith.constant 0 : index
      %c0_281 = arith.constant 0 : index
      %337 = vector.load %arg8[%c5_279, %c0_280, %c0_281] : memref<8x4x32xf32, #tpu.memory_space<vmem>>, vector<1x4x32xf32>
      %338 = vector.shape_cast %337 : vector<1x4x32xf32> to vector<4x32xf32>
      %cst_282 = arith.constant dense<0.000000e+00> : vector<4x16xf32>
      %339 = tpu.matmul %338, %229, %cst_282 {dimension_numbers = #tpu.dot_dimension_numbers<[1], [1], [0], [0], [0, 0, 1, 0], [], []>} : vector<4x32xf32>, vector<16x32xf32>, vector<4x16xf32> -> vector<4x16xf32>
      %c5_283 = arith.constant 5 : index
      %c0_284 = arith.constant 0 : index
      %c0_285 = arith.constant 0 : index
      %340 = vector.load %arg9[%c5_283, %c0_284, %c0_285] : memref<8x4x1xf32, #tpu.memory_space<vmem>>, vector<1x4x1xf32>
      %341 = vector.shape_cast %340 : vector<1x4x1xf32> to vector<4x1xf32>
      %342 = vector.broadcast %341 : vector<4x1xf32> to vector<4x16xf32>
      %343 = arith.addf %339, %342 : vector<4x16xf32>
      %c5_286 = arith.constant 5 : index
      %c0_287 = arith.constant 0 : index
      %c0_288 = arith.constant 0 : index
      %344 = vector.load %arg13[%c5_286, %c0_287, %c0_288] : memref<8x4x16xf32, #tpu.memory_space<vmem>>, vector<1x4x16xf32>
      %345 = vector.shape_cast %344 : vector<1x4x16xf32> to vector<4x16xf32>
      %346 = vector.shape_cast %336 : vector<4x16xf32> to vector<1x4x16xf32>
      tpu.vector_store %arg13[%c5_286, %c0_287, %c0_288], %346 {strides = array<i32>} : memref<8x4x16xf32, #tpu.memory_space<vmem>>, vector<1x4x16xf32>,
      %c5_289 = arith.constant 5 : index
      %c0_290 = arith.constant 0 : index
      %c0_291 = arith.constant 0 : index
      %347 = vector.load %arg14[%c5_289, %c0_290, %c0_291] : memref<8x4x16xf32, #tpu.memory_space<vmem>>, vector<1x4x16xf32>
      %348 = vector.shape_cast %347 : vector<1x4x16xf32> to vector<4x16xf32>
      %349 = vector.shape_cast %343 : vector<4x16xf32> to vector<1x4x16xf32>
      tpu.vector_store %arg14[%c5_289, %c0_290, %c0_291], %349 {strides = array<i32>} : memref<8x4x16xf32, #tpu.memory_space<vmem>>, vector<1x4x16xf32>,
      %c6_292 = arith.constant 6 : index
      %c0_293 = arith.constant 0 : index
      %c0_294 = arith.constant 0 : index
      %350 = vector.load %arg6[%c6_292, %c0_293, %c0_294] : memref<8x4x32xf32, #tpu.memory_space<vmem>>, vector<1x4x32xf32>
      %351 = vector.shape_cast %350 : vector<1x4x32xf32> to vector<4x32xf32>
      %cst_295 = arith.constant dense<0.000000e+00> : vector<4x16xf32>
      %352 = tpu.matmul %351, %229, %cst_295 {dimension_numbers = #tpu.dot_dimension_numbers<[1], [1], [0], [0], [0, 0, 1, 0], [], []>} : vector<4x32xf32>, vector<16x32xf32>, vector<4x16xf32> -> vector<4x16xf32>
      %c6_296 = arith.constant 6 : index
      %c0_297 = arith.constant 0 : index
      %c0_298 = arith.constant 0 : index
      %353 = vector.load %arg7[%c6_296, %c0_297, %c0_298] : memref<8x4x1xf32, #tpu.memory_space<vmem>>, vector<1x4x1xf32>
      %354 = vector.shape_cast %353 : vector<1x4x1xf32> to vector<4x1xf32>
      %355 = vector.broadcast %354 : vector<4x1xf32> to vector<4x16xf32>
      %356 = arith.addf %352, %355 : vector<4x16xf32>
      %c6_299 = arith.constant 6 : index
      %c0_300 = arith.constant 0 : index
      %c0_301 = arith.constant 0 : index
      %357 = vector.load %arg8[%c6_299, %c0_300, %c0_301] : memref<8x4x32xf32, #tpu.memory_space<vmem>>, vector<1x4x32xf32>
      %358 = vector.shape_cast %357 : vector<1x4x32xf32> to vector<4x32xf32>
      %cst_302 = arith.constant dense<0.000000e+00> : vector<4x16xf32>
      %359 = tpu.matmul %358, %229, %cst_302 {dimension_numbers = #tpu.dot_dimension_numbers<[1], [1], [0], [0], [0, 0, 1, 0], [], []>} : vector<4x32xf32>, vector<16x32xf32>, vector<4x16xf32> -> vector<4x16xf32>
      %c6_303 = arith.constant 6 : index
      %c0_304 = arith.constant 0 : index
      %c0_305 = arith.constant 0 : index
      %360 = vector.load %arg9[%c6_303, %c0_304, %c0_305] : memref<8x4x1xf32, #tpu.memory_space<vmem>>, vector<1x4x1xf32>
      %361 = vector.shape_cast %360 : vector<1x4x1xf32> to vector<4x1xf32>
      %362 = vector.broadcast %361 : vector<4x1xf32> to vector<4x16xf32>
      %363 = arith.addf %359, %362 : vector<4x16xf32>
      %c6_306 = arith.constant 6 : index
      %c0_307 = arith.constant 0 : index
      %c0_308 = arith.constant 0 : index
      %364 = vector.load %arg13[%c6_306, %c0_307, %c0_308] : memref<8x4x16xf32, #tpu.memory_space<vmem>>, vector<1x4x16xf32>
      %365 = vector.shape_cast %364 : vector<1x4x16xf32> to vector<4x16xf32>
      %366 = vector.shape_cast %356 : vector<4x16xf32> to vector<1x4x16xf32>
      tpu.vector_store %arg13[%c6_306, %c0_307, %c0_308], %366 {strides = array<i32>} : memref<8x4x16xf32, #tpu.memory_space<vmem>>, vector<1x4x16xf32>,
      %c6_309 = arith.constant 6 : index
      %c0_310 = arith.constant 0 : index
      %c0_311 = arith.constant 0 : index
      %367 = vector.load %arg14[%c6_309, %c0_310, %c0_311] : memref<8x4x16xf32, #tpu.memory_space<vmem>>, vector<1x4x16xf32>
      %368 = vector.shape_cast %367 : vector<1x4x16xf32> to vector<4x16xf32>
      %369 = vector.shape_cast %363 : vector<4x16xf32> to vector<1x4x16xf32>
      tpu.vector_store %arg14[%c6_309, %c0_310, %c0_311], %369 {strides = array<i32>} : memref<8x4x16xf32, #tpu.memory_space<vmem>>, vector<1x4x16xf32>,
      %c7_312 = arith.constant 7 : index
      %c0_313 = arith.constant 0 : index
      %c0_314 = arith.constant 0 : index
      %370 = vector.load %arg6[%c7_312, %c0_313, %c0_314] : memref<8x4x32xf32, #tpu.memory_space<vmem>>, vector<1x4x32xf32>
      %371 = vector.shape_cast %370 : vector<1x4x32xf32> to vector<4x32xf32>
      %cst_315 = arith.constant dense<0.000000e+00> : vector<4x16xf32>
      %372 = tpu.matmul %371, %229, %cst_315 {dimension_numbers = #tpu.dot_dimension_numbers<[1], [1], [0], [0], [0, 0, 1, 0], [], []>} : vector<4x32xf32>, vector<16x32xf32>, vector<4x16xf32> -> vector<4x16xf32>
      %c7_316 = arith.constant 7 : index
      %c0_317 = arith.constant 0 : index
      %c0_318 = arith.constant 0 : index
      %373 = vector.load %arg7[%c7_316, %c0_317, %c0_318] : memref<8x4x1xf32, #tpu.memory_space<vmem>>, vector<1x4x1xf32>
      %374 = vector.shape_cast %373 : vector<1x4x1xf32> to vector<4x1xf32>
      %375 = vector.broadcast %374 : vector<4x1xf32> to vector<4x16xf32>
      %376 = arith.addf %372, %375 : vector<4x16xf32>
      %c7_319 = arith.constant 7 : index
      %c0_320 = arith.constant 0 : index
      %c0_321 = arith.constant 0 : index
      %377 = vector.load %arg8[%c7_319, %c0_320, %c0_321] : memref<8x4x32xf32, #tpu.memory_space<vmem>>, vector<1x4x32xf32>
      %378 = vector.shape_cast %377 : vector<1x4x32xf32> to vector<4x32xf32>
      %cst_322 = arith.constant dense<0.000000e+00> : vector<4x16xf32>
      %379 = tpu.matmul %378, %229, %cst_322 {dimension_numbers = #tpu.dot_dimension_numbers<[1], [1], [0], [0], [0, 0, 1, 0], [], []>} : vector<4x32xf32>, vector<16x32xf32>, vector<4x16xf32> -> vector<4x16xf32>
      %c7_323 = arith.constant 7 : index
      %c0_324 = arith.constant 0 : index
      %c0_325 = arith.constant 0 : index
      %380 = vector.load %arg9[%c7_323, %c0_324, %c0_325] : memref<8x4x1xf32, #tpu.memory_space<vmem>>, vector<1x4x1xf32>
      %381 = vector.shape_cast %380 : vector<1x4x1xf32> to vector<4x1xf32>
      %382 = vector.broadcast %381 : vector<4x1xf32> to vector<4x16xf32>
      %383 = arith.addf %379, %382 : vector<4x16xf32>
      %c7_326 = arith.constant 7 : index
      %c0_327 = arith.constant 0 : index
      %c0_328 = arith.constant 0 : index
      %384 = vector.load %arg13[%c7_326, %c0_327, %c0_328] : memref<8x4x16xf32, #tpu.memory_space<vmem>>, vector<1x4x16xf32>
      %385 = vector.shape_cast %384 : vector<1x4x16xf32> to vector<4x16xf32>
      %386 = vector.shape_cast %376 : vector<4x16xf32> to vector<1x4x16xf32>
      tpu.vector_store %arg13[%c7_326, %c0_327, %c0_328], %386 {strides = array<i32>} : memref<8x4x16xf32, #tpu.memory_space<vmem>>, vector<1x4x16xf32>,
      %c7_329 = arith.constant 7 : index
      %c0_330 = arith.constant 0 : index
      %c0_331 = arith.constant 0 : index
      %387 = vector.load %arg14[%c7_329, %c0_330, %c0_331] : memref<8x4x16xf32, #tpu.memory_space<vmem>>, vector<1x4x16xf32>
      %388 = vector.shape_cast %387 : vector<1x4x16xf32> to vector<4x16xf32>
      %389 = vector.shape_cast %383 : vector<4x16xf32> to vector<1x4x16xf32>
      tpu.vector_store %arg14[%c7_329, %c0_330, %c0_331], %389 {strides = array<i32>} : memref<8x4x16xf32, #tpu.memory_space<vmem>>, vector<1x4x16xf32>,
    } else {
    }
    %c0 = arith.constant 0 : index
    %c0_1 = arith.constant 0 : index
    %c0_2 = arith.constant 0 : index
    %3 = vector.load %arg2[%c0, %c0_1, %c0_2] : memref<1x8x32xf32, #tpu.memory_space<vmem>>, vector<1x8x32xf32>
    %4 = vector.shape_cast %3 : vector<1x8x32xf32> to vector<8x32xf32>
    %cst = arith.constant 0.000000e+00 : f32
    %5 = vector.broadcast %cst : f32 to vector<8x32xf32>
    %c0_3 = arith.constant 0 : index
    %c0_4 = arith.constant 0 : index
    %c0_5 = arith.constant 0 : index
    %6 = vector.load %arg4[%c0_3, %c0_4, %c0_5] : memref<8x32x4xf32, #tpu.memory_space<vmem>>, vector<1x32x4xf32>
    %7 = vector.shape_cast %6 : vector<1x32x4xf32> to vector<32x4xf32>
    %cst_6 = arith.constant dense<0.000000e+00> : vector<8x4xf32>
    %8 = tpu.matmul %4, %7, %cst_6 {dimension_numbers = #tpu.dot_dimension_numbers<[1], [0], [0], [1], [0, 0, 1, 1], [], []>} : vector<8x32xf32>, vector<32x4xf32>, vector<8x4xf32> -> vector<8x4xf32>
    %c0_7 = arith.constant 0 : index
    %c0_8 = arith.constant 0 : index
    %c0_9 = arith.constant 0 : index
    %9 = vector.load %arg5[%c0_7, %c0_8, %c0_9] : memref<8x1x4xf32, #tpu.memory_space<vmem>>, vector<1x1x4xf32>
    %10 = vector.shape_cast %9 : vector<1x1x4xf32> to vector<1x4xf32>
    %11 = vector.broadcast %10 : vector<1x4xf32> to vector<8x4xf32>
    %12 = arith.addf %8, %11 : vector<8x4xf32>
    %c0_10 = arith.constant 0 : index
    %c0_11 = arith.constant 0 : index
    %c0_12 = arith.constant 0 : index
    %13 = vector.load %arg13[%c0_10, %c0_11, %c0_12] : memref<8x4x16xf32, #tpu.memory_space<vmem>>, vector<1x4x16xf32>
    %14 = vector.shape_cast %13 : vector<1x4x16xf32> to vector<4x16xf32>
    %c0_13 = arith.constant 0 : index
    %c0_14 = arith.constant 0 : index
    %c0_15 = arith.constant 0 : index
    %15 = vector.load %arg14[%c0_13, %c0_14, %c0_15] : memref<8x4x16xf32, #tpu.memory_space<vmem>>, vector<1x4x16xf32>
    %16 = vector.shape_cast %15 : vector<1x4x16xf32> to vector<4x16xf32>
    %cst_16 = arith.constant dense<0.000000e+00> : vector<8x16xf32>
    %17 = tpu.matmul %12, %14, %cst_16 {dimension_numbers = #tpu.dot_dimension_numbers<[1], [0], [0], [1], [0, 0, 1, 1], [], []>} : vector<8x4xf32>, vector<4x16xf32>, vector<8x16xf32> -> vector<8x16xf32>
    %cst_17 = arith.constant dense<0xFF800000> : vector<8xf32>
    %18 = vector.multi_reduction <maximumf>, %17, %cst_17 [1] : vector<8x16xf32> to vector<8xf32>
    %19 = vector.shape_cast %18 : vector<8xf32> to vector<8x1xf32>
    %20 = vector.broadcast %19 : vector<8x1xf32> to vector<8x16xf32>
    %21 = arith.subf %17, %20 : vector<8x16xf32>
    %22 = math.exp %21 : vector<8x16xf32>
    %cst_18 = arith.constant dense<0.000000e+00> : vector<8xf32>
    %23 = vector.multi_reduction <add>, %22, %cst_18 [1] : vector<8x16xf32> to vector<8xf32>
    %24 = vector.shape_cast %23 : vector<8xf32> to vector<8x1xf32>
    %25 = tpu.reciprocal %24 {approx = true} : vector<8x1xf32> -> vector<8x1xf32>
    %26 = vector.broadcast %25 : vector<8x1xf32> to vector<8x16xf32>
    %27 = arith.mulf %22, %26 : vector<8x16xf32>
    %cst_19 = arith.constant dense<0.000000e+00> : vector<8x4xf32>
    %28 = tpu.matmul %27, %16, %cst_19 {dimension_numbers = #tpu.dot_dimension_numbers<[1], [1], [0], [0], [0, 0, 1, 0], [], []>} : vector<8x16xf32>, vector<4x16xf32>, vector<8x4xf32> -> vector<8x4xf32>
    %c0_20 = arith.constant 0 : index
    %c0_21 = arith.constant 0 : index
    %c0_22 = arith.constant 0 : index
    %29 = vector.load %arg10[%c0_20, %c0_21, %c0_22] : memref<8x4x32xf32, #tpu.memory_space<vmem>>, vector<1x4x32xf32>
    %30 = vector.shape_cast %29 : vector<1x4x32xf32> to vector<4x32xf32>
    %cst_23 = arith.constant dense<0.000000e+00> : vector<8x32xf32>
    %31 = tpu.matmul %28, %30, %cst_23 {dimension_numbers = #tpu.dot_dimension_numbers<[1], [0], [0], [1], [0, 0, 1, 1], [], []>} : vector<8x4xf32>, vector<4x32xf32>, vector<8x32xf32> -> vector<8x32xf32>
    %32 = arith.addf %5, %31 : vector<8x32xf32>
    %c1 = arith.constant 1 : index
    %c0_24 = arith.constant 0 : index
    %c0_25 = arith.constant 0 : index
    %33 = vector.load %arg4[%c1, %c0_24, %c0_25] : memref<8x32x4xf32, #tpu.memory_space<vmem>>, vector<1x32x4xf32>
    %34 = vector.shape_cast %33 : vector<1x32x4xf32> to vector<32x4xf32>
    %cst_26 = arith.constant dense<0.000000e+00> : vector<8x4xf32>
    %35 = tpu.matmul %4, %34, %cst_26 {dimension_numbers = #tpu.dot_dimension_numbers<[1], [0], [0], [1], [0, 0, 1, 1], [], []>} : vector<8x32xf32>, vector<32x4xf32>, vector<8x4xf32> -> vector<8x4xf32>
    %c1_27 = arith.constant 1 : index
    %c0_28 = arith.constant 0 : index
    %c0_29 = arith.constant 0 : index
    %36 = vector.load %arg5[%c1_27, %c0_28, %c0_29] : memref<8x1x4xf32, #tpu.memory_space<vmem>>, vector<1x1x4xf32>
    %37 = vector.shape_cast %36 : vector<1x1x4xf32> to vector<1x4xf32>
    %38 = vector.broadcast %37 : vector<1x4xf32> to vector<8x4xf32>
    %39 = arith.addf %35, %38 : vector<8x4xf32>
    %c1_30 = arith.constant 1 : index
    %c0_31 = arith.constant 0 : index
    %c0_32 = arith.constant 0 : index
    %40 = vector.load %arg13[%c1_30, %c0_31, %c0_32] : memref<8x4x16xf32, #tpu.memory_space<vmem>>, vector<1x4x16xf32>
    %41 = vector.shape_cast %40 : vector<1x4x16xf32> to vector<4x16xf32>
    %c1_33 = arith.constant 1 : index
    %c0_34 = arith.constant 0 : index
    %c0_35 = arith.constant 0 : index
    %42 = vector.load %arg14[%c1_33, %c0_34, %c0_35] : memref<8x4x16xf32, #tpu.memory_space<vmem>>, vector<1x4x16xf32>
    %43 = vector.shape_cast %42 : vector<1x4x16xf32> to vector<4x16xf32>
    %cst_36 = arith.constant dense<0.000000e+00> : vector<8x16xf32>
    %44 = tpu.matmul %39, %41, %cst_36 {dimension_numbers = #tpu.dot_dimension_numbers<[1], [0], [0], [1], [0, 0, 1, 1], [], []>} : vector<8x4xf32>, vector<4x16xf32>, vector<8x16xf32> -> vector<8x16xf32>
    %cst_37 = arith.constant dense<0xFF800000> : vector<8xf32>
    %45 = vector.multi_reduction <maximumf>, %44, %cst_37 [1] : vector<8x16xf32> to vector<8xf32>
    %46 = vector.shape_cast %45 : vector<8xf32> to vector<8x1xf32>
    %47 = vector.broadcast %46 : vector<8x1xf32> to vector<8x16xf32>
    %48 = arith.subf %44, %47 : vector<8x16xf32>
    %49 = math.exp %48 : vector<8x16xf32>
    %cst_38 = arith.constant dense<0.000000e+00> : vector<8xf32>
    %50 = vector.multi_reduction <add>, %49, %cst_38 [1] : vector<8x16xf32> to vector<8xf32>
    %51 = vector.shape_cast %50 : vector<8xf32> to vector<8x1xf32>
    %52 = tpu.reciprocal %51 {approx = true} : vector<8x1xf32> -> vector<8x1xf32>
    %53 = vector.broadcast %52 : vector<8x1xf32> to vector<8x16xf32>
    %54 = arith.mulf %49, %53 : vector<8x16xf32>
    %cst_39 = arith.constant dense<0.000000e+00> : vector<8x4xf32>
    %55 = tpu.matmul %54, %43, %cst_39 {dimension_numbers = #tpu.dot_dimension_numbers<[1], [1], [0], [0], [0, 0, 1, 0], [], []>} : vector<8x16xf32>, vector<4x16xf32>, vector<8x4xf32> -> vector<8x4xf32>
    %c1_40 = arith.constant 1 : index
    %c0_41 = arith.constant 0 : index
    %c0_42 = arith.constant 0 : index
    %56 = vector.load %arg10[%c1_40, %c0_41, %c0_42] : memref<8x4x32xf32, #tpu.memory_space<vmem>>, vector<1x4x32xf32>
    %57 = vector.shape_cast %56 : vector<1x4x32xf32> to vector<4x32xf32>
    %cst_43 = arith.constant dense<0.000000e+00> : vector<8x32xf32>
    %58 = tpu.matmul %55, %57, %cst_43 {dimension_numbers = #tpu.dot_dimension_numbers<[1], [0], [0], [1], [0, 0, 1, 1], [], []>} : vector<8x4xf32>, vector<4x32xf32>, vector<8x32xf32> -> vector<8x32xf32>
    %59 = arith.addf %32, %58 : vector<8x32xf32>
    %c2 = arith.constant 2 : index
    %c0_44 = arith.constant 0 : index
    %c0_45 = arith.constant 0 : index
    %60 = vector.load %arg4[%c2, %c0_44, %c0_45] : memref<8x32x4xf32, #tpu.memory_space<vmem>>, vector<1x32x4xf32>
    %61 = vector.shape_cast %60 : vector<1x32x4xf32> to vector<32x4xf32>
    %cst_46 = arith.constant dense<0.000000e+00> : vector<8x4xf32>
    %62 = tpu.matmul %4, %61, %cst_46 {dimension_numbers = #tpu.dot_dimension_numbers<[1], [0], [0], [1], [0, 0, 1, 1], [], []>} : vector<8x32xf32>, vector<32x4xf32>, vector<8x4xf32> -> vector<8x4xf32>
    %c2_47 = arith.constant 2 : index
    %c0_48 = arith.constant 0 : index
    %c0_49 = arith.constant 0 : index
    %63 = vector.load %arg5[%c2_47, %c0_48, %c0_49] : memref<8x1x4xf32, #tpu.memory_space<vmem>>, vector<1x1x4xf32>
    %64 = vector.shape_cast %63 : vector<1x1x4xf32> to vector<1x4xf32>
    %65 = vector.broadcast %64 : vector<1x4xf32> to vector<8x4xf32>
    %66 = arith.addf %62, %65 : vector<8x4xf32>
    %c2_50 = arith.constant 2 : index
    %c0_51 = arith.constant 0 : index
    %c0_52 = arith.constant 0 : index
    %67 = vector.load %arg13[%c2_50, %c0_51, %c0_52] : memref<8x4x16xf32, #tpu.memory_space<vmem>>, vector<1x4x16xf32>
    %68 = vector.shape_cast %67 : vector<1x4x16xf32> to vector<4x16xf32>
    %c2_53 = arith.constant 2 : index
    %c0_54 = arith.constant 0 : index
    %c0_55 = arith.constant 0 : index
    %69 = vector.load %arg14[%c2_53, %c0_54, %c0_55] : memref<8x4x16xf32, #tpu.memory_space<vmem>>, vector<1x4x16xf32>
    %70 = vector.shape_cast %69 : vector<1x4x16xf32> to vector<4x16xf32>
    %cst_56 = arith.constant dense<0.000000e+00> : vector<8x16xf32>
    %71 = tpu.matmul %66, %68, %cst_56 {dimension_numbers = #tpu.dot_dimension_numbers<[1], [0], [0], [1], [0, 0, 1, 1], [], []>} : vector<8x4xf32>, vector<4x16xf32>, vector<8x16xf32> -> vector<8x16xf32>
    %cst_57 = arith.constant dense<0xFF800000> : vector<8xf32>
    %72 = vector.multi_reduction <maximumf>, %71, %cst_57 [1] : vector<8x16xf32> to vector<8xf32>
    %73 = vector.shape_cast %72 : vector<8xf32> to vector<8x1xf32>
    %74 = vector.broadcast %73 : vector<8x1xf32> to vector<8x16xf32>
    %75 = arith.subf %71, %74 : vector<8x16xf32>
    %76 = math.exp %75 : vector<8x16xf32>
    %cst_58 = arith.constant dense<0.000000e+00> : vector<8xf32>
    %77 = vector.multi_reduction <add>, %76, %cst_58 [1] : vector<8x16xf32> to vector<8xf32>
    %78 = vector.shape_cast %77 : vector<8xf32> to vector<8x1xf32>
    %79 = tpu.reciprocal %78 {approx = true} : vector<8x1xf32> -> vector<8x1xf32>
    %80 = vector.broadcast %79 : vector<8x1xf32> to vector<8x16xf32>
    %81 = arith.mulf %76, %80 : vector<8x16xf32>
    %cst_59 = arith.constant dense<0.000000e+00> : vector<8x4xf32>
    %82 = tpu.matmul %81, %70, %cst_59 {dimension_numbers = #tpu.dot_dimension_numbers<[1], [1], [0], [0], [0, 0, 1, 0], [], []>} : vector<8x16xf32>, vector<4x16xf32>, vector<8x4xf32> -> vector<8x4xf32>
    %c2_60 = arith.constant 2 : index
    %c0_61 = arith.constant 0 : index
    %c0_62 = arith.constant 0 : index
    %83 = vector.load %arg10[%c2_60, %c0_61, %c0_62] : memref<8x4x32xf32, #tpu.memory_space<vmem>>, vector<1x4x32xf32>
    %84 = vector.shape_cast %83 : vector<1x4x32xf32> to vector<4x32xf32>
    %cst_63 = arith.constant dense<0.000000e+00> : vector<8x32xf32>
    %85 = tpu.matmul %82, %84, %cst_63 {dimension_numbers = #tpu.dot_dimension_numbers<[1], [0], [0], [1], [0, 0, 1, 1], [], []>} : vector<8x4xf32>, vector<4x32xf32>, vector<8x32xf32> -> vector<8x32xf32>
    %86 = arith.addf %59, %85 : vector<8x32xf32>
    %c3 = arith.constant 3 : index
    %c0_64 = arith.constant 0 : index
    %c0_65 = arith.constant 0 : index
    %87 = vector.load %arg4[%c3, %c0_64, %c0_65] : memref<8x32x4xf32, #tpu.memory_space<vmem>>, vector<1x32x4xf32>
    %88 = vector.shape_cast %87 : vector<1x32x4xf32> to vector<32x4xf32>
    %cst_66 = arith.constant dense<0.000000e+00> : vector<8x4xf32>
    %89 = tpu.matmul %4, %88, %cst_66 {dimension_numbers = #tpu.dot_dimension_numbers<[1], [0], [0], [1], [0, 0, 1, 1], [], []>} : vector<8x32xf32>, vector<32x4xf32>, vector<8x4xf32> -> vector<8x4xf32>
    %c3_67 = arith.constant 3 : index
    %c0_68 = arith.constant 0 : index
    %c0_69 = arith.constant 0 : index
    %90 = vector.load %arg5[%c3_67, %c0_68, %c0_69] : memref<8x1x4xf32, #tpu.memory_space<vmem>>, vector<1x1x4xf32>
    %91 = vector.shape_cast %90 : vector<1x1x4xf32> to vector<1x4xf32>
    %92 = vector.broadcast %91 : vector<1x4xf32> to vector<8x4xf32>
    %93 = arith.addf %89, %92 : vector<8x4xf32>
    %c3_70 = arith.constant 3 : index
    %c0_71 = arith.constant 0 : index
    %c0_72 = arith.constant 0 : index
    %94 = vector.load %arg13[%c3_70, %c0_71, %c0_72] : memref<8x4x16xf32, #tpu.memory_space<vmem>>, vector<1x4x16xf32>
    %95 = vector.shape_cast %94 : vector<1x4x16xf32> to vector<4x16xf32>
    %c3_73 = arith.constant 3 : index
    %c0_74 = arith.constant 0 : index
    %c0_75 = arith.constant 0 : index
    %96 = vector.load %arg14[%c3_73, %c0_74, %c0_75] : memref<8x4x16xf32, #tpu.memory_space<vmem>>, vector<1x4x16xf32>
    %97 = vector.shape_cast %96 : vector<1x4x16xf32> to vector<4x16xf32>
    %cst_76 = arith.constant dense<0.000000e+00> : vector<8x16xf32>
    %98 = tpu.matmul %93, %95, %cst_76 {dimension_numbers = #tpu.dot_dimension_numbers<[1], [0], [0], [1], [0, 0, 1, 1], [], []>} : vector<8x4xf32>, vector<4x16xf32>, vector<8x16xf32> -> vector<8x16xf32>
    %cst_77 = arith.constant dense<0xFF800000> : vector<8xf32>
    %99 = vector.multi_reduction <maximumf>, %98, %cst_77 [1] : vector<8x16xf32> to vector<8xf32>
    %100 = vector.shape_cast %99 : vector<8xf32> to vector<8x1xf32>
    %101 = vector.broadcast %100 : vector<8x1xf32> to vector<8x16xf32>
    %102 = arith.subf %98, %101 : vector<8x16xf32>
    %103 = math.exp %102 : vector<8x16xf32>
    %cst_78 = arith.constant dense<0.000000e+00> : vector<8xf32>
    %104 = vector.multi_reduction <add>, %103, %cst_78 [1] : vector<8x16xf32> to vector<8xf32>
    %105 = vector.shape_cast %104 : vector<8xf32> to vector<8x1xf32>
    %106 = tpu.reciprocal %105 {approx = true} : vector<8x1xf32> -> vector<8x1xf32>
    %107 = vector.broadcast %106 : vector<8x1xf32> to vector<8x16xf32>
    %108 = arith.mulf %103, %107 : vector<8x16xf32>
    %cst_79 = arith.constant dense<0.000000e+00> : vector<8x4xf32>
    %109 = tpu.matmul %108, %97, %cst_79 {dimension_numbers = #tpu.dot_dimension_numbers<[1], [1], [0], [0], [0, 0, 1, 0], [], []>} : vector<8x16xf32>, vector<4x16xf32>, vector<8x4xf32> -> vector<8x4xf32>
    %c3_80 = arith.constant 3 : index
    %c0_81 = arith.constant 0 : index
    %c0_82 = arith.constant 0 : index
    %110 = vector.load %arg10[%c3_80, %c0_81, %c0_82] : memref<8x4x32xf32, #tpu.memory_space<vmem>>, vector<1x4x32xf32>
    %111 = vector.shape_cast %110 : vector<1x4x32xf32> to vector<4x32xf32>
    %cst_83 = arith.constant dense<0.000000e+00> : vector<8x32xf32>
    %112 = tpu.matmul %109, %111, %cst_83 {dimension_numbers = #tpu.dot_dimension_numbers<[1], [0], [0], [1], [0, 0, 1, 1], [], []>} : vector<8x4xf32>, vector<4x32xf32>, vector<8x32xf32> -> vector<8x32xf32>
    %113 = arith.addf %86, %112 : vector<8x32xf32>
    %c4 = arith.constant 4 : index
    %c0_84 = arith.constant 0 : index
    %c0_85 = arith.constant 0 : index
    %114 = vector.load %arg4[%c4, %c0_84, %c0_85] : memref<8x32x4xf32, #tpu.memory_space<vmem>>, vector<1x32x4xf32>
    %115 = vector.shape_cast %114 : vector<1x32x4xf32> to vector<32x4xf32>
    %cst_86 = arith.constant dense<0.000000e+00> : vector<8x4xf32>
    %116 = tpu.matmul %4, %115, %cst_86 {dimension_numbers = #tpu.dot_dimension_numbers<[1], [0], [0], [1], [0, 0, 1, 1], [], []>} : vector<8x32xf32>, vector<32x4xf32>, vector<8x4xf32> -> vector<8x4xf32>
    %c4_87 = arith.constant 4 : index
    %c0_88 = arith.constant 0 : index
    %c0_89 = arith.constant 0 : index
    %117 = vector.load %arg5[%c4_87, %c0_88, %c0_89] : memref<8x1x4xf32, #tpu.memory_space<vmem>>, vector<1x1x4xf32>
    %118 = vector.shape_cast %117 : vector<1x1x4xf32> to vector<1x4xf32>
    %119 = vector.broadcast %118 : vector<1x4xf32> to vector<8x4xf32>
    %120 = arith.addf %116, %119 : vector<8x4xf32>
    %c4_90 = arith.constant 4 : index
    %c0_91 = arith.constant 0 : index
    %c0_92 = arith.constant 0 : index
    %121 = vector.load %arg13[%c4_90, %c0_91, %c0_92] : memref<8x4x16xf32, #tpu.memory_space<vmem>>, vector<1x4x16xf32>
    %122 = vector.shape_cast %121 : vector<1x4x16xf32> to vector<4x16xf32>
    %c4_93 = arith.constant 4 : index
    %c0_94 = arith.constant 0 : index
    %c0_95 = arith.constant 0 : index
    %123 = vector.load %arg14[%c4_93, %c0_94, %c0_95] : memref<8x4x16xf32, #tpu.memory_space<vmem>>, vector<1x4x16xf32>
    %124 = vector.shape_cast %123 : vector<1x4x16xf32> to vector<4x16xf32>
    %cst_96 = arith.constant dense<0.000000e+00> : vector<8x16xf32>
    %125 = tpu.matmul %120, %122, %cst_96 {dimension_numbers = #tpu.dot_dimension_numbers<[1], [0], [0], [1], [0, 0, 1, 1], [], []>} : vector<8x4xf32>, vector<4x16xf32>, vector<8x16xf32> -> vector<8x16xf32>
    %cst_97 = arith.constant dense<0xFF800000> : vector<8xf32>
    %126 = vector.multi_reduction <maximumf>, %125, %cst_97 [1] : vector<8x16xf32> to vector<8xf32>
    %127 = vector.shape_cast %126 : vector<8xf32> to vector<8x1xf32>
    %128 = vector.broadcast %127 : vector<8x1xf32> to vector<8x16xf32>
    %129 = arith.subf %125, %128 : vector<8x16xf32>
    %130 = math.exp %129 : vector<8x16xf32>
    %cst_98 = arith.constant dense<0.000000e+00> : vector<8xf32>
    %131 = vector.multi_reduction <add>, %130, %cst_98 [1] : vector<8x16xf32> to vector<8xf32>
    %132 = vector.shape_cast %131 : vector<8xf32> to vector<8x1xf32>
    %133 = tpu.reciprocal %132 {approx = true} : vector<8x1xf32> -> vector<8x1xf32>
    %134 = vector.broadcast %133 : vector<8x1xf32> to vector<8x16xf32>
    %135 = arith.mulf %130, %134 : vector<8x16xf32>
    %cst_99 = arith.constant dense<0.000000e+00> : vector<8x4xf32>
    %136 = tpu.matmul %135, %124, %cst_99 {dimension_numbers = #tpu.dot_dimension_numbers<[1], [1], [0], [0], [0, 0, 1, 0], [], []>} : vector<8x16xf32>, vector<4x16xf32>, vector<8x4xf32> -> vector<8x4xf32>
    %c4_100 = arith.constant 4 : index
    %c0_101 = arith.constant 0 : index
    %c0_102 = arith.constant 0 : index
    %137 = vector.load %arg10[%c4_100, %c0_101, %c0_102] : memref<8x4x32xf32, #tpu.memory_space<vmem>>, vector<1x4x32xf32>
    %138 = vector.shape_cast %137 : vector<1x4x32xf32> to vector<4x32xf32>
    %cst_103 = arith.constant dense<0.000000e+00> : vector<8x32xf32>
    %139 = tpu.matmul %136, %138, %cst_103 {dimension_numbers = #tpu.dot_dimension_numbers<[1], [0], [0], [1], [0, 0, 1, 1], [], []>} : vector<8x4xf32>, vector<4x32xf32>, vector<8x32xf32> -> vector<8x32xf32>
    %140 = arith.addf %113, %139 : vector<8x32xf32>
    %c5 = arith.constant 5 : index
    %c0_104 = arith.constant 0 : index
    %c0_105 = arith.constant 0 : index
    %141 = vector.load %arg4[%c5, %c0_104, %c0_105] : memref<8x32x4xf32, #tpu.memory_space<vmem>>, vector<1x32x4xf32>
    %142 = vector.shape_cast %141 : vector<1x32x4xf32> to vector<32x4xf32>
    %cst_106 = arith.constant dense<0.000000e+00> : vector<8x4xf32>
    %143 = tpu.matmul %4, %142, %cst_106 {dimension_numbers = #tpu.dot_dimension_numbers<[1], [0], [0], [1], [0, 0, 1, 1], [], []>} : vector<8x32xf32>, vector<32x4xf32>, vector<8x4xf32> -> vector<8x4xf32>
    %c5_107 = arith.constant 5 : index
    %c0_108 = arith.constant 0 : index
    %c0_109 = arith.constant 0 : index
    %144 = vector.load %arg5[%c5_107, %c0_108, %c0_109] : memref<8x1x4xf32, #tpu.memory_space<vmem>>, vector<1x1x4xf32>
    %145 = vector.shape_cast %144 : vector<1x1x4xf32> to vector<1x4xf32>
    %146 = vector.broadcast %145 : vector<1x4xf32> to vector<8x4xf32>
    %147 = arith.addf %143, %146 : vector<8x4xf32>
    %c5_110 = arith.constant 5 : index
    %c0_111 = arith.constant 0 : index
    %c0_112 = arith.constant 0 : index
    %148 = vector.load %arg13[%c5_110, %c0_111, %c0_112] : memref<8x4x16xf32, #tpu.memory_space<vmem>>, vector<1x4x16xf32>
    %149 = vector.shape_cast %148 : vector<1x4x16xf32> to vector<4x16xf32>
    %c5_113 = arith.constant 5 : index
    %c0_114 = arith.constant 0 : index
    %c0_115 = arith.constant 0 : index
    %150 = vector.load %arg14[%c5_113, %c0_114, %c0_115] : memref<8x4x16xf32, #tpu.memory_space<vmem>>, vector<1x4x16xf32>
    %151 = vector.shape_cast %150 : vector<1x4x16xf32> to vector<4x16xf32>
    %cst_116 = arith.constant dense<0.000000e+00> : vector<8x16xf32>
    %152 = tpu.matmul %147, %149, %cst_116 {dimension_numbers = #tpu.dot_dimension_numbers<[1], [0], [0], [1], [0, 0, 1, 1], [], []>} : vector<8x4xf32>, vector<4x16xf32>, vector<8x16xf32> -> vector<8x16xf32>
    %cst_117 = arith.constant dense<0xFF800000> : vector<8xf32>
    %153 = vector.multi_reduction <maximumf>, %152, %cst_117 [1] : vector<8x16xf32> to vector<8xf32>
    %154 = vector.shape_cast %153 : vector<8xf32> to vector<8x1xf32>
    %155 = vector.broadcast %154 : vector<8x1xf32> to vector<8x16xf32>
    %156 = arith.subf %152, %155 : vector<8x16xf32>
    %157 = math.exp %156 : vector<8x16xf32>
    %cst_118 = arith.constant dense<0.000000e+00> : vector<8xf32>
    %158 = vector.multi_reduction <add>, %157, %cst_118 [1] : vector<8x16xf32> to vector<8xf32>
    %159 = vector.shape_cast %158 : vector<8xf32> to vector<8x1xf32>
    %160 = tpu.reciprocal %159 {approx = true} : vector<8x1xf32> -> vector<8x1xf32>
    %161 = vector.broadcast %160 : vector<8x1xf32> to vector<8x16xf32>
    %162 = arith.mulf %157, %161 : vector<8x16xf32>
    %cst_119 = arith.constant dense<0.000000e+00> : vector<8x4xf32>
    %163 = tpu.matmul %162, %151, %cst_119 {dimension_numbers = #tpu.dot_dimension_numbers<[1], [1], [0], [0], [0, 0, 1, 0], [], []>} : vector<8x16xf32>, vector<4x16xf32>, vector<8x4xf32> -> vector<8x4xf32>
    %c5_120 = arith.constant 5 : index
    %c0_121 = arith.constant 0 : index
    %c0_122 = arith.constant 0 : index
    %164 = vector.load %arg10[%c5_120, %c0_121, %c0_122] : memref<8x4x32xf32, #tpu.memory_space<vmem>>, vector<1x4x32xf32>
    %165 = vector.shape_cast %164 : vector<1x4x32xf32> to vector<4x32xf32>
    %cst_123 = arith.constant dense<0.000000e+00> : vector<8x32xf32>
    %166 = tpu.matmul %163, %165, %cst_123 {dimension_numbers = #tpu.dot_dimension_numbers<[1], [0], [0], [1], [0, 0, 1, 1], [], []>} : vector<8x4xf32>, vector<4x32xf32>, vector<8x32xf32> -> vector<8x32xf32>
    %167 = arith.addf %140, %166 : vector<8x32xf32>
    %c6 = arith.constant 6 : index
    %c0_124 = arith.constant 0 : index
    %c0_125 = arith.constant 0 : index
    %168 = vector.load %arg4[%c6, %c0_124, %c0_125] : memref<8x32x4xf32, #tpu.memory_space<vmem>>, vector<1x32x4xf32>
    %169 = vector.shape_cast %168 : vector<1x32x4xf32> to vector<32x4xf32>
    %cst_126 = arith.constant dense<0.000000e+00> : vector<8x4xf32>
    %170 = tpu.matmul %4, %169, %cst_126 {dimension_numbers = #tpu.dot_dimension_numbers<[1], [0], [0], [1], [0, 0, 1, 1], [], []>} : vector<8x32xf32>, vector<32x4xf32>, vector<8x4xf32> -> vector<8x4xf32>
    %c6_127 = arith.constant 6 : index
    %c0_128 = arith.constant 0 : index
    %c0_129 = arith.constant 0 : index
    %171 = vector.load %arg5[%c6_127, %c0_128, %c0_129] : memref<8x1x4xf32, #tpu.memory_space<vmem>>, vector<1x1x4xf32>
    %172 = vector.shape_cast %171 : vector<1x1x4xf32> to vector<1x4xf32>
    %173 = vector.broadcast %172 : vector<1x4xf32> to vector<8x4xf32>
    %174 = arith.addf %170, %173 : vector<8x4xf32>
    %c6_130 = arith.constant 6 : index
    %c0_131 = arith.constant 0 : index
    %c0_132 = arith.constant 0 : index
    %175 = vector.load %arg13[%c6_130, %c0_131, %c0_132] : memref<8x4x16xf32, #tpu.memory_space<vmem>>, vector<1x4x16xf32>
    %176 = vector.shape_cast %175 : vector<1x4x16xf32> to vector<4x16xf32>
    %c6_133 = arith.constant 6 : index
    %c0_134 = arith.constant 0 : index
    %c0_135 = arith.constant 0 : index
    %177 = vector.load %arg14[%c6_133, %c0_134, %c0_135] : memref<8x4x16xf32, #tpu.memory_space<vmem>>, vector<1x4x16xf32>
    %178 = vector.shape_cast %177 : vector<1x4x16xf32> to vector<4x16xf32>
    %cst_136 = arith.constant dense<0.000000e+00> : vector<8x16xf32>
    %179 = tpu.matmul %174, %176, %cst_136 {dimension_numbers = #tpu.dot_dimension_numbers<[1], [0], [0], [1], [0, 0, 1, 1], [], []>} : vector<8x4xf32>, vector<4x16xf32>, vector<8x16xf32> -> vector<8x16xf32>
    %cst_137 = arith.constant dense<0xFF800000> : vector<8xf32>
    %180 = vector.multi_reduction <maximumf>, %179, %cst_137 [1] : vector<8x16xf32> to vector<8xf32>
    %181 = vector.shape_cast %180 : vector<8xf32> to vector<8x1xf32>
    %182 = vector.broadcast %181 : vector<8x1xf32> to vector<8x16xf32>
    %183 = arith.subf %179, %182 : vector<8x16xf32>
    %184 = math.exp %183 : vector<8x16xf32>
    %cst_138 = arith.constant dense<0.000000e+00> : vector<8xf32>
    %185 = vector.multi_reduction <add>, %184, %cst_138 [1] : vector<8x16xf32> to vector<8xf32>
    %186 = vector.shape_cast %185 : vector<8xf32> to vector<8x1xf32>
    %187 = tpu.reciprocal %186 {approx = true} : vector<8x1xf32> -> vector<8x1xf32>
    %188 = vector.broadcast %187 : vector<8x1xf32> to vector<8x16xf32>
    %189 = arith.mulf %184, %188 : vector<8x16xf32>
    %cst_139 = arith.constant dense<0.000000e+00> : vector<8x4xf32>
    %190 = tpu.matmul %189, %178, %cst_139 {dimension_numbers = #tpu.dot_dimension_numbers<[1], [1], [0], [0], [0, 0, 1, 0], [], []>} : vector<8x16xf32>, vector<4x16xf32>, vector<8x4xf32> -> vector<8x4xf32>
    %c6_140 = arith.constant 6 : index
    %c0_141 = arith.constant 0 : index
    %c0_142 = arith.constant 0 : index
    %191 = vector.load %arg10[%c6_140, %c0_141, %c0_142] : memref<8x4x32xf32, #tpu.memory_space<vmem>>, vector<1x4x32xf32>
    %192 = vector.shape_cast %191 : vector<1x4x32xf32> to vector<4x32xf32>
    %cst_143 = arith.constant dense<0.000000e+00> : vector<8x32xf32>
    %193 = tpu.matmul %190, %192, %cst_143 {dimension_numbers = #tpu.dot_dimension_numbers<[1], [0], [0], [1], [0, 0, 1, 1], [], []>} : vector<8x4xf32>, vector<4x32xf32>, vector<8x32xf32> -> vector<8x32xf32>
    %194 = arith.addf %167, %193 : vector<8x32xf32>
    %c7 = arith.constant 7 : index
    %c0_144 = arith.constant 0 : index
    %c0_145 = arith.constant 0 : index
    %195 = vector.load %arg4[%c7, %c0_144, %c0_145] : memref<8x32x4xf32, #tpu.memory_space<vmem>>, vector<1x32x4xf32>
    %196 = vector.shape_cast %195 : vector<1x32x4xf32> to vector<32x4xf32>
    %cst_146 = arith.constant dense<0.000000e+00> : vector<8x4xf32>
    %197 = tpu.matmul %4, %196, %cst_146 {dimension_numbers = #tpu.dot_dimension_numbers<[1], [0], [0], [1], [0, 0, 1, 1], [], []>} : vector<8x32xf32>, vector<32x4xf32>, vector<8x4xf32> -> vector<8x4xf32>
    %c7_147 = arith.constant 7 : index
    %c0_148 = arith.constant 0 : index
    %c0_149 = arith.constant 0 : index
    %198 = vector.load %arg5[%c7_147, %c0_148, %c0_149] : memref<8x1x4xf32, #tpu.memory_space<vmem>>, vector<1x1x4xf32>
    %199 = vector.shape_cast %198 : vector<1x1x4xf32> to vector<1x4xf32>
    %200 = vector.broadcast %199 : vector<1x4xf32> to vector<8x4xf32>
    %201 = arith.addf %197, %200 : vector<8x4xf32>
    %c7_150 = arith.constant 7 : index
    %c0_151 = arith.constant 0 : index
    %c0_152 = arith.constant 0 : index
    %202 = vector.load %arg13[%c7_150, %c0_151, %c0_152] : memref<8x4x16xf32, #tpu.memory_space<vmem>>, vector<1x4x16xf32>
    %203 = vector.shape_cast %202 : vector<1x4x16xf32> to vector<4x16xf32>
    %c7_153 = arith.constant 7 : index
    %c0_154 = arith.constant 0 : index
    %c0_155 = arith.constant 0 : index
    %204 = vector.load %arg14[%c7_153, %c0_154, %c0_155] : memref<8x4x16xf32, #tpu.memory_space<vmem>>, vector<1x4x16xf32>
    %205 = vector.shape_cast %204 : vector<1x4x16xf32> to vector<4x16xf32>
    %cst_156 = arith.constant dense<0.000000e+00> : vector<8x16xf32>
    %206 = tpu.matmul %201, %203, %cst_156 {dimension_numbers = #tpu.dot_dimension_numbers<[1], [0], [0], [1], [0, 0, 1, 1], [], []>} : vector<8x4xf32>, vector<4x16xf32>, vector<8x16xf32> -> vector<8x16xf32>
    %cst_157 = arith.constant dense<0xFF800000> : vector<8xf32>
    %207 = vector.multi_reduction <maximumf>, %206, %cst_157 [1] : vector<8x16xf32> to vector<8xf32>
    %208 = vector.shape_cast %207 : vector<8xf32> to vector<8x1xf32>
    %209 = vector.broadcast %208 : vector<8x1xf32> to vector<8x16xf32>
    %210 = arith.subf %206, %209 : vector<8x16xf32>
    %211 = math.exp %210 : vector<8x16xf32>
    %cst_158 = arith.constant dense<0.000000e+00> : vector<8xf32>
    %212 = vector.multi_reduction <add>, %211, %cst_158 [1] : vector<8x16xf32> to vector<8xf32>
    %213 = vector.shape_cast %212 : vector<8xf32> to vector<8x1xf32>
    %214 = tpu.reciprocal %213 {approx = true} : vector<8x1xf32> -> vector<8x1xf32>
    %215 = vector.broadcast %214 : vector<8x1xf32> to vector<8x16xf32>
    %216 = arith.mulf %211, %215 : vector<8x16xf32>
    %cst_159 = arith.constant dense<0.000000e+00> : vector<8x4xf32>
    %217 = tpu.matmul %216, %205, %cst_159 {dimension_numbers = #tpu.dot_dimension_numbers<[1], [1], [0], [0], [0, 0, 1, 0], [], []>} : vector<8x16xf32>, vector<4x16xf32>, vector<8x4xf32> -> vector<8x4xf32>
    %c7_160 = arith.constant 7 : index
    %c0_161 = arith.constant 0 : index
    %c0_162 = arith.constant 0 : index
    %218 = vector.load %arg10[%c7_160, %c0_161, %c0_162] : memref<8x4x32xf32, #tpu.memory_space<vmem>>, vector<1x4x32xf32>
    %219 = vector.shape_cast %218 : vector<1x4x32xf32> to vector<4x32xf32>
    %cst_163 = arith.constant dense<0.000000e+00> : vector<8x32xf32>
    %220 = tpu.matmul %217, %219, %cst_163 {dimension_numbers = #tpu.dot_dimension_numbers<[1], [0], [0], [1], [0, 0, 1, 1], [], []>} : vector<8x4xf32>, vector<4x32xf32>, vector<8x32xf32> -> vector<8x32xf32>
    %221 = arith.addf %194, %220 : vector<8x32xf32>
    %c0_164 = arith.constant 0 : index
    %c0_165 = arith.constant 0 : index
    %222 = vector.load %arg11[%c0_164, %c0_165] : memref<1x32xf32, #tpu.memory_space<vmem>>, vector<1x32xf32>
    %223 = vector.broadcast %222 : vector<1x32xf32> to vector<8x32xf32>
    %224 = arith.addf %221, %223 : vector<8x32xf32>
    %c0_166 = arith.constant 0 : index
    %c0_167 = arith.constant 0 : index
    %c0_168 = arith.constant 0 : index
    %225 = vector.load %arg12[%c0_166, %c0_167, %c0_168] : memref<1x8x32xf32, #tpu.memory_space<vmem>>, vector<1x8x32xf32>
    %226 = vector.shape_cast %225 : vector<1x8x32xf32> to vector<8x32xf32>
    %227 = vector.shape_cast %224 : vector<8x32xf32> to vector<1x8x32xf32>
    tpu.vector_store %arg12[%c0_166, %c0_167, %c0_168], %227 {strides = array<i32>} : memref<1x8x32xf32, #tpu.memory_space<vmem>>, vector<1x8x32xf32>,
    return
  }
  func.func @transform_0(%arg0: i32, %arg1: i32) -> (i32, i32, i32) {
    %c0_i32 = arith.constant 0 : i32
    %c0_i32_0 = arith.constant 0 : i32
    return %arg0, %arg1, %c0_i32 : i32, i32, i32
  }
  func.func @transform_1(%arg0: i32, %arg1: i32) -> (i32, i32, i32) {
    %c0_i32 = arith.constant 0 : i32
    %c0_i32_0 = arith.constant 0 : i32
    %c0_i32_1 = arith.constant 0 : i32
    return %arg0, %c0_i32, %c0_i32_0 : i32, i32, i32
  }
  func.func @transform_2(%arg0: i32, %arg1: i32) -> (i32, i32, i32) {
    %c0_i32 = arith.constant 0 : i32
    %c0_i32_0 = arith.constant 0 : i32
    %c0_i32_1 = arith.constant 0 : i32
    %c0_i32_2 = arith.constant 0 : i32
    return %c0_i32, %c0_i32_0, %c0_i32_1 : i32, i32, i32
  }
  func.func @transform_3(%arg0: i32, %arg1: i32) -> (i32, i32, i32) {
    %c0_i32 = arith.constant 0 : i32
    %c0_i32_0 = arith.constant 0 : i32
    %c0_i32_1 = arith.constant 0 : i32
    %c0_i32_2 = arith.constant 0 : i32
    return %c0_i32, %c0_i32_0, %c0_i32_1 : i32, i32, i32
  }
  func.func @transform_4(%arg0: i32, %arg1: i32) -> (i32, i32, i32) {
    %c0_i32 = arith.constant 0 : i32
    %c0_i32_0 = arith.constant 0 : i32
    %c0_i32_1 = arith.constant 0 : i32
    %c0_i32_2 = arith.constant 0 : i32
    return %c0_i32, %c0_i32_0, %c0_i32_1 : i32, i32, i32
  }
  func.func @transform_5(%arg0: i32, %arg1: i32) -> (i32, i32, i32) {
    %c0_i32 = arith.constant 0 : i32
    %c0_i32_0 = arith.constant 0 : i32
    %c0_i32_1 = arith.constant 0 : i32
    %c0_i32_2 = arith.constant 0 : i32
    return %c0_i32, %c0_i32_0, %c0_i32_1 : i32, i32, i32
  }
  func.func @transform_6(%arg0: i32, %arg1: i32) -> (i32, i32, i32) {
    %c0_i32 = arith.constant 0 : i32
    %c0_i32_0 = arith.constant 0 : i32
    %c0_i32_1 = arith.constant 0 : i32
    %c0_i32_2 = arith.constant 0 : i32
    return %c0_i32, %c0_i32_0, %c0_i32_1 : i32, i32, i32
  }
  func.func @transform_7(%arg0: i32, %arg1: i32) -> (i32, i32, i32) {
    %c0_i32 = arith.constant 0 : i32
    %c0_i32_0 = arith.constant 0 : i32
    %c0_i32_1 = arith.constant 0 : i32
    %c0_i32_2 = arith.constant 0 : i32
    return %c0_i32, %c0_i32_0, %c0_i32_1 : i32, i32, i32
  }
  func.func @transform_8(%arg0: i32, %arg1: i32) -> (i32, i32, i32) {
    %c0_i32 = arith.constant 0 : i32
    %c0_i32_0 = arith.constant 0 : i32
    %c0_i32_1 = arith.constant 0 : i32
    %c0_i32_2 = arith.constant 0 : i32
    return %c0_i32, %c0_i32_0, %c0_i32_1 : i32, i32, i32
  }
  func.func @transform_9(%arg0: i32, %arg1: i32) -> (i32, i32) {
    %c0_i32 = arith.constant 0 : i32
    %c0_i32_0 = arith.constant 0 : i32
    %c0_i32_1 = arith.constant 0 : i32
    return %c0_i32, %c0_i32_0 : i32, i32
  }
  func.func @transform_10(%arg0: i32, %arg1: i32) -> (i32, i32, i32) {
    %c0_i32 = arith.constant 0 : i32
    %c0_i32_0 = arith.constant 0 : i32
    return %arg0, %arg1, %c0_i32 : i32, i32, i32
  }
}

</mosaic_0001>

<llo_original>
// kernel: tpu_custom_call.1
$region0: #{tpu_custom_call.1}
  #allocation0 [shape = 'u32[]', space=smem, size = 0x4, offset = 0x4, fixed_abs, tag = 'smem constant byte address 0x4 - core index']
  #allocation1 [shape = 'u32[144,128]{1,0:T(1,128)}', space=vmem, size = 0x12000, scoped, tag = 'internal scratch']
  #allocation2 [shape = 'f32[8,4,16]{2,1,0:T(4,128)}', space=vmem, size = 0x4000, scoped, tag = 'scratch operand']
  #allocation3 [shape = 'f32[8,4,16]{2,1,0:T(4,128)}', space=vmem, size = 0x4000, scoped, tag = 'scratch operand']
  %s0 = inlined_call_operand.vmem [shape: f32[2,16,32], index: 0, kind: input, shape index: {}]
  %s1 = inlined_call_operand.vmem [shape: f32[2,16,32], index: 1, kind: input, shape index: {}]
  %s2 = inlined_call_operand.vmem [shape: f32[8,32,4], index: 2, kind: input, shape index: {}]
  %s3 = inlined_call_operand.vmem [shape: f32[8,1,4], index: 3, kind: input, shape index: {}]
  %s4 = inlined_call_operand.vmem [shape: f32[8,4,32], index: 4, kind: input, shape index: {}]
  %s5 = inlined_call_operand.vmem [shape: f32[8,4,1], index: 5, kind: input, shape index: {}]
  %s6 = inlined_call_operand.vmem [shape: f32[8,4,32], index: 6, kind: input, shape index: {}]
  %s7 = inlined_call_operand.vmem [shape: f32[8,4,1], index: 7, kind: input, shape index: {}]
  %s8 = inlined_call_operand.vmem [shape: f32[8,4,32], index: 8, kind: input, shape index: {}]
  %s9 = inlined_call_operand.vmem [shape: f32[1,32], index: 9, kind: input, shape index: {}]
  %s10 = inlined_call_operand.hbm [shape: f32[2,16,32], index: 10, kind: output, shape index: {}]
  %s11 = sld [smem:[#allocation0]]
  $region77: #{tpu_custom_call.1} parent=0
    _
  %s13 = ssub.s32 1, %s11
  %s14 = scalar_select 0, %s13, %s11
  $region1: #{tpu_custom_call.1} parent=0
    #allocation4 [shape = 'u8[8192]{0}', space=vmem, size = 0x2000, scoped, tag = 'output window, operand 0']
    #allocation5 [shape = 's32[2]{0}', space=sflag, size = 0x8, scoped, tag = 'scoped memory for tpu_custom_call.1']
    %15 = vsyncpa [#allocation5], 0
    %s16 = scalar_lea.sflag [#allocation5], 1
    %17 = vsyncpa %s16, 0
    loop: start=0, step=1, limit=6
    $region2: #{tpu_custom_call.1} parent=1 // loop_pre_header
      _
    $region3: #{tpu_custom_call.1} parent=1 // loop_header
      %s19 = sphi 0, %s23
      %p20 = scmp.ge.s32.totalorder %s19, 6
      %s26 = sphi 0, %s38
      %s27 = sphi 0, %s34
      %s28 = sphi 0, %s26
      %s29 = sphi 0, %s27
      %s30 = sphi 0, %s28
      %s31 = sphi 0, %s29
      %s43 = sphi 0, %s45
      %s46 = sphi 0, %s43
      %s47 = sphi 0, %s46
      %s63 = sphi 0, %s47
      %s69 = sphi 0, %s71
      %s72 = sphi 0, %s69
      %s73 = sphi 0, %s72
      %s89 = sphi 0, %s73
      %s93 = sphi 0, %s93
      %s95 = sphi 0, %s93
      %s96 = sphi 0, %s95
      %s110 = sphi 0, %s96
      %s114 = sphi 0, %s114
      %s116 = sphi 0, %s114
      %s117 = sphi 0, %s116
      %s131 = sphi 0, %s117
      %s135 = sphi 0, %s135
      %s137 = sphi 0, %s135
      %s138 = sphi 0, %s137
      %s152 = sphi 0, %s138
      %s156 = sphi 0, %s156
      %s158 = sphi 0, %s156
      %s159 = sphi 0, %s158
      %s173 = sphi 0, %s159
      %s177 = sphi 0, %s177
      %s179 = sphi 0, %s177
      %s180 = sphi 0, %s179
      %s194 = sphi 0, %s180
      %s198 = sphi 0, %s198
      %s200 = sphi 0, %s198
      %s201 = sphi 0, %s200
      %s215 = sphi 0, %s201
      %s219 = sphi 0, %s219
      %s221 = sphi 0, %s219
      %s222 = sphi 0, %s221
      %s236 = sphi 0, %s222
      %s240 = sphi 0, %s240
      %s242 = sphi 0, %s240
      %s243 = sphi 0, %s242
      %s257 = sphi 0, %s243
      %s265 = sphi 0, %s267
      %s268 = sphi 0, %s265
      %s269 = sphi 0, %s268
      %s285 = sphi 0, %s269
    $region4: #{tpu_custom_call.1} parent=1 // loop_header_branch
      %22 = sbr.rel (%p20) target = $region8
    $region5: #{tpu_custom_call.1} parent=1 // loop_body
      %s24 = ssub.s32 %s19, 1
      %s25 = ssub.s32 %s19, 2
      %s32 = sadd.s32 1, %s27
      %p33 = scmp.ge.s32.totalorder %s32, 2
      %s34 = scalar_select %p33, 0, %s32
      %s35 = sadd.s32 1, %s26
      %s36 = scalar_select %p33, %s35, %s26
      %p37 = scmp.ge.s32.totalorder %s36, 2
      %s38 = scalar_select %p37, 0, %s36
      %s39 = ssub.s32 %s26, %s38
      %s40 = ssub.s32 %s27, %s34
      %s41 = sor.u32 %s39, %s40
      %p42 = scmp.eq.s32.totalorder %s41, 0
      %s44 = sadd.s32 %s43, 1
      %s45 = scalar_select %p42, %s43, %s44
      %p48 = pneg %p42
      %p49 = scmp.eq.s32.totalorder %s19, 3
      %p50 = por %p48, %p49
      %p51 = scmp.ne.s32.totalorder %s43, %s46
      %p52 = scmp.eq.s32.totalorder %s19, 0
      %p53 = por %p51, %p52
      %p54 = scmp.ne.s32.totalorder %s43, %s46
      %p55 = scmp.eq.s32.totalorder %s24, 3
      %p56 = por %p54, %p55
      %p57 = scmp.ne.s32.totalorder %s46, %s47
      %p58 = scmp.eq.s32.totalorder %s24, 0
      %p59 = por %p57, %p58
      %p60 = scmp.ne.s32.totalorder %s46, %s47
      %p61 = scmp.eq.s32.totalorder %s25, 3
      %p62 = por %p60, %p61
      %p64 = scmp.ne.s32.totalorder %s47, %s63
      %p65 = scmp.eq.s32.totalorder %s25, 0
      %p66 = por %p64, %p65
      %s67 = ssub.s32 %s26, %s38
      %p68 = scmp.eq.s32.totalorder %s67, 0
      %s70 = sadd.s32 %s69, 1
      %s71 = scalar_select %p68, %s69, %s70
      %p74 = pneg %p68
      %p75 = scmp.eq.s32.totalorder %s19, 3
      %p76 = por %p74, %p75
      %p77 = scmp.ne.s32.totalorder %s69, %s72
      %p78 = scmp.eq.s32.totalorder %s19, 0
      %p79 = por %p77, %p78
      %p80 = scmp.ne.s32.totalorder %s69, %s72
      %p81 = scmp.eq.s32.totalorder %s24, 3
      %p82 = por %p80, %p81
      %p83 = scmp.ne.s32.totalorder %s72, %s73
      %p84 = scmp.eq.s32.totalorder %s24, 0
      %p85 = por %p83, %p84
      %p86 = scmp.ne.s32.totalorder %s72, %s73
      %p87 = scmp.eq.s32.totalorder %s25, 3
      %p88 = por %p86, %p87
      %p90 = scmp.ne.s32.totalorder %s73, %s89
      %p91 = scmp.eq.s32.totalorder %s25, 0
      %p92 = por %p90, %p91
      %s94 = sadd.s32 %s93, 1
      %p97 = scmp.eq.s32.totalorder %s19, 3
      %p98 = scmp.ne.s32.totalorder %s93, %s95
      %p99 = scmp.eq.s32.totalorder %s19, 0
      %p100 = por %p98, %p99
      %p101 = scmp.ne.s32.totalorder %s93, %s95
      %p102 = scmp.eq.s32.totalorder %s24, 3
      %p103 = por %p101, %p102
      %p104 = scmp.ne.s32.totalorder %s95, %s96
      %p105 = scmp.eq.s32.totalorder %s24, 0
      %p106 = por %p104, %p105
      %p107 = scmp.ne.s32.totalorder %s95, %s96
      %p108 = scmp.eq.s32.totalorder %s25, 3
      %p109 = por %p107, %p108
      %p111 = scmp.ne.s32.totalorder %s96, %s110
      %p112 = scmp.eq.s32.totalorder %s25, 0
      %p113 = por %p111, %p112
      %s115 = sadd.s32 %s114, 1
      %p118 = scmp.eq.s32.totalorder %s19, 3
      %p119 = scmp.ne.s32.totalorder %s114, %s116
      %p120 = scmp.eq.s32.totalorder %s19, 0
      %p121 = por %p119, %p120
      %p122 = scmp.ne.s32.totalorder %s114, %s116
      %p123 = scmp.eq.s32.totalorder %s24, 3
      %p124 = por %p122, %p123
      %p125 = scmp.ne.s32.totalorder %s116, %s117
      %p126 = scmp.eq.s32.totalorder %s24, 0
      %p127 = por %p125, %p126
      %p128 = scmp.ne.s32.totalorder %s116, %s117
      %p129 = scmp.eq.s32.totalorder %s25, 3
      %p130 = por %p128, %p129
      %p132 = scmp.ne.s32.totalorder %s117, %s131
      %p133 = scmp.eq.s32.totalorder %s25, 0
      %p134 = por %p132, %p133
      %s136 = sadd.s32 %s135, 1
      %p139 = scmp.eq.s32.totalorder %s19, 3
      %p140 = scmp.ne.s32.totalorder %s135, %s137
      %p141 = scmp.eq.s32.totalorder %s19, 0
      %p142 = por %p140, %p141
      %p143 = scmp.ne.s32.totalorder %s135, %s137
      %p144 = scmp.eq.s32.totalorder %s24, 3
      %p145 = por %p143, %p144
      %p146 = scmp.ne.s32.totalorder %s137, %s138
      %p147 = scmp.eq.s32.totalorder %s24, 0
      %p148 = por %p146, %p147
      %p149 = scmp.ne.s32.totalorder %s137, %s138
      %p150 = scmp.eq.s32.totalorder %s25, 3
      %p151 = por %p149, %p150
      %p153 = scmp.ne.s32.totalorder %s138, %s152
      %p154 = scmp.eq.s32.totalorder %s25, 0
      %p155 = por %p153, %p154
      %s157 = sadd.s32 %s156, 1
      %p160 = scmp.eq.s32.totalorder %s19, 3
      %p161 = scmp.ne.s32.totalorder %s156, %s158
      %p162 = scmp.eq.s32.totalorder %s19, 0
      %p163 = por %p161, %p162
      %p164 = scmp.ne.s32.totalorder %s156, %s158
      %p165 = scmp.eq.s32.totalorder %s24, 3
      %p166 = por %p164, %p165
      %p167 = scmp.ne.s32.totalorder %s158, %s159
      %p168 = scmp.eq.s32.totalorder %s24, 0
      %p169 = por %p167, %p168
      %p170 = scmp.ne.s32.totalorder %s158, %s159
      %p171 = scmp.eq.s32.totalorder %s25, 3
      %p172 = por %p170, %p171
      %p174 = scmp.ne.s32.totalorder %s159, %s173
      %p175 = scmp.eq.s32.totalorder %s25, 0
      %p176 = por %p174, %p175
      %s178 = sadd.s32 %s177, 1
      %p181 = scmp.eq.s32.totalorder %s19, 3
      %p182 = scmp.ne.s32.totalorder %s177, %s179
      %p183 = scmp.eq.s32.totalorder %s19, 0
      %p184 = por %p182, %p183
      %p185 = scmp.ne.s32.totalorder %s177, %s179
      %p186 = scmp.eq.s32.totalorder %s24, 3
      %p187 = por %p185, %p186
      %p188 = scmp.ne.s32.totalorder %s179, %s180
      %p189 = scmp.eq.s32.totalorder %s24, 0
      %p190 = por %p188, %p189
      %p191 = scmp.ne.s32.totalorder %s179, %s180
      %p192 = scmp.eq.s32.totalorder %s25, 3
      %p193 = por %p191, %p192
      %p195 = scmp.ne.s32.totalorder %s180, %s194
      %p196 = scmp.eq.s32.totalorder %s25, 0
      %p197 = por %p195, %p196
      %s199 = sadd.s32 %s198, 1
      %p202 = scmp.eq.s32.totalorder %s19, 3
      %p203 = scmp.ne.s32.totalorder %s198, %s200
      %p204 = scmp.eq.s32.totalorder %s19, 0
      %p205 = por %p203, %p204
      %p206 = scmp.ne.s32.totalorder %s198, %s200
      %p207 = scmp.eq.s32.totalorder %s24, 3
      %p208 = por %p206, %p207
      %p209 = scmp.ne.s32.totalorder %s200, %s201
      %p210 = scmp.eq.s32.totalorder %s24, 0
      %p211 = por %p209, %p210
      %p212 = scmp.ne.s32.totalorder %s200, %s201
      %p213 = scmp.eq.s32.totalorder %s25, 3
      %p214 = por %p212, %p213
      %p216 = scmp.ne.s32.totalorder %s201, %s215
      %p217 = scmp.eq.s32.totalorder %s25, 0
      %p218 = por %p216, %p217
      %s220 = sadd.s32 %s219, 1
      %p223 = scmp.eq.s32.totalorder %s19, 3
      %p224 = scmp.ne.s32.totalorder %s219, %s221
      %p225 = scmp.eq.s32.totalorder %s19, 0
      %p226 = por %p224, %p225
      %p227 = scmp.ne.s32.totalorder %s219, %s221
      %p228 = scmp.eq.s32.totalorder %s24, 3
      %p229 = por %p227, %p228
      %p230 = scmp.ne.s32.totalorder %s221, %s222
      %p231 = scmp.eq.s32.totalorder %s24, 0
      %p232 = por %p230, %p231
      %p233 = scmp.ne.s32.totalorder %s221, %s222
      %p234 = scmp.eq.s32.totalorder %s25, 3
      %p235 = por %p233, %p234
      %p237 = scmp.ne.s32.totalorder %s222, %s236
      %p238 = scmp.eq.s32.totalorder %s25, 0
      %p239 = por %p237, %p238
      %s241 = sadd.s32 %s240, 1
      %p244 = scmp.eq.s32.totalorder %s19, 3
      %p245 = scmp.ne.s32.totalorder %s240, %s242
      %p246 = scmp.eq.s32.totalorder %s19, 0
      %p247 = por %p245, %p246
      %p248 = scmp.ne.s32.totalorder %s240, %s242
      %p249 = scmp.eq.s32.totalorder %s24, 3
      %p250 = por %p248, %p249
      %p251 = scmp.ne.s32.totalorder %s242, %s243
      %p252 = scmp.eq.s32.totalorder %s24, 0
      %p253 = por %p251, %p252
      %p254 = scmp.ne.s32.totalorder %s242, %s243
      %p255 = scmp.eq.s32.totalorder %s25, 3
      %p256 = por %p254, %p255
      %p258 = scmp.ne.s32.totalorder %s243, %s257
      %p259 = scmp.eq.s32.totalorder %s25, 0
      %p260 = por %p258, %p259
      %s261 = ssub.s32 %s26, %s38
      %s262 = ssub.s32 %s27, %s34
      %s263 = sor.u32 %s261, %s262
      %p264 = scmp.eq.s32.totalorder %s263, 0
      %s266 = sadd.s32 %s265, 1
      %s267 = scalar_select %p264, %s265, %s266
      %p270 = pneg %p264
      %p271 = scmp.eq.s32.totalorder %s19, 3
      %p272 = por %p270, %p271
      %p273 = scmp.ne.s32.totalorder %s265, %s268
      %p274 = scmp.eq.s32.totalorder %s19, 0
      %p275 = por %p273, %p274
      %p276 = scmp.ne.s32.totalorder %s265, %s268
      %p277 = scmp.eq.s32.totalorder %s24, 3
      %p278 = por %p276, %p277
      %p279 = scmp.ne.s32.totalorder %s268, %s269
      %p280 = scmp.eq.s32.totalorder %s24, 0
      %p281 = por %p279, %p280
      %p282 = scmp.ne.s32.totalorder %s268, %s269
      %p283 = scmp.eq.s32.totalorder %s25, 3
      %p284 = por %p282, %p283
      %p286 = scmp.ne.s32.totalorder %s269, %s285
      %p287 = scmp.eq.s32.totalorder %s25, 0
      %p288 = por %p286, %p287
      %p289 = scmp.le.s32.totalorder 1, %s19
      %p290 = scmp.lt.s32.totalorder %s19, 5
      %p291 = pnand %p289, %p290
      %p292 = pneg %p291
      // Predicated region
      $region9: #{tpu_custom_call.1} parent=5 // pred_check
        _
      $region10: #{tpu_custom_call.1} parent=5 // pred_check_branch
        %294 = sbr.rel (%p291) target = $region12
      $region11: #{tpu_custom_call.1} parent=5 // pred_region
        %s295 = ssub.s32 %s19, 1
        // Predicated region
        $region13: #{tpu_custom_call.1} parent=11 // pred_check
          %p296 = pneg %p106
        $region14: #{tpu_custom_call.1} parent=11 // pred_check_branch
          %298 = sbr.rel (%p296) target = $region16
        $region15: #{tpu_custom_call.1} parent=11 // pred_region
          _
        $region16: #{tpu_custom_call.1} parent=11 // pred_fallthru
          _
        // Predicated region
        $region17: #{tpu_custom_call.1} parent=11 // pred_check
          %p299 = pneg %p127
        $region18: #{tpu_custom_call.1} parent=11 // pred_check_branch
          %301 = sbr.rel (%p299) target = $region20
        $region19: #{tpu_custom_call.1} parent=11 // pred_region
          _
        $region20: #{tpu_custom_call.1} parent=11 // pred_fallthru
          _
        // Predicated region
        $region21: #{tpu_custom_call.1} parent=11 // pred_check
          %p302 = pneg %p148
        $region22: #{tpu_custom_call.1} parent=11 // pred_check_branch
          %304 = sbr.rel (%p302) target = $region24
        $region23: #{tpu_custom_call.1} parent=11 // pred_region
          _
        $region24: #{tpu_custom_call.1} parent=11 // pred_fallthru
          _
        // Predicated region
        $region25: #{tpu_custom_call.1} parent=11 // pred_check
          %p305 = pneg %p169
        $region26: #{tpu_custom_call.1} parent=11 // pred_check_branch
          %307 = sbr.rel (%p305) target = $region28
        $region27: #{tpu_custom_call.1} parent=11 // pred_region
          _
        $region28: #{tpu_custom_call.1} parent=11 // pred_fallthru
          _
        // Predicated region
        $region29: #{tpu_custom_call.1} parent=11 // pred_check
          %p308 = pneg %p190
        $region30: #{tpu_custom_call.1} parent=11 // pred_check_branch
          %310 = sbr.rel (%p308) target = $region32
        $region31: #{tpu_custom_call.1} parent=11 // pred_region
          _
        $region32: #{tpu_custom_call.1} parent=11 // pred_fallthru
          _
        // Predicated region
        $region33: #{tpu_custom_call.1} parent=11 // pred_check
          %p311 = pneg %p211
        $region34: #{tpu_custom_call.1} parent=11 // pred_check_branch
          %313 = sbr.rel (%p311) target = $region36
        $region35: #{tpu_custom_call.1} parent=11 // pred_region
          _
        $region36: #{tpu_custom_call.1} parent=11 // pred_fallthru
          _
        // Predicated region
        $region37: #{tpu_custom_call.1} parent=11 // pred_check
          %p314 = pneg %p232
        $region38: #{tpu_custom_call.1} parent=11 // pred_check_branch
          %316 = sbr.rel (%p314) target = $region40
        $region39: #{tpu_custom_call.1} parent=11 // pred_region
          _
        $region40: #{tpu_custom_call.1} parent=11 // pred_fallthru
          _
        // Predicated region
        $region41: #{tpu_custom_call.1} parent=11 // pred_check
          %p317 = pneg %p253
        $region42: #{tpu_custom_call.1} parent=11 // pred_check_branch
          %319 = sbr.rel (%p317) target = $region44
        $region43: #{tpu_custom_call.1} parent=11 // pred_region
          _
        $region44: #{tpu_custom_call.1} parent=11 // pred_fallthru
          _
      $region12: #{tpu_custom_call.1} parent=5 // pred_fallthru
        _
      %p320 = scmp.lt.s32.totalorder %s19, 4
      // Predicated region
      $region45: #{tpu_custom_call.1} parent=5 // pred_check
        %p321 = pneg %p320
      $region46: #{tpu_custom_call.1} parent=5 // pred_check_branch
        %323 = sbr.rel (%p321) target = $region48
      $region47: #{tpu_custom_call.1} parent=5 // pred_region
        // Predicated region
        $region49: #{tpu_custom_call.1} parent=47 // pred_check
          %p324 = pneg %p53
        $region50: #{tpu_custom_call.1} parent=47 // pred_check_branch
          %326 = sbr.rel (%p324) target = $region52
        $region51: #{tpu_custom_call.1} parent=47 // pred_region
          %p327 = scmp.lt.s32.totalorder %s26, 1
          %s328 = scalar_select %p327, %s26, 1
          %p329 = scmp.lt.s32.totalorder %s27, 1
          %s330 = scalar_select %p329, %s27, 1
          %s331 = smul.addr %s328, 2
          %s332 = sadd.s32 %s330, %s331
          %s333 = smul.addr %s332, 8
          %s334 = scalar_lea.vmem %s0, %s333
        $region52: #{tpu_custom_call.1} parent=47 // pred_fallthru
          _
        // Predicated region
        $region53: #{tpu_custom_call.1} parent=47 // pred_check
          %p335 = pneg %p79
        $region54: #{tpu_custom_call.1} parent=47 // pred_check_branch
          %337 = sbr.rel (%p335) target = $region56
        $region55: #{tpu_custom_call.1} parent=47 // pred_region
          %p338 = scmp.lt.s32.totalorder %s26, 1
          %s339 = scalar_select %p338, %s26, 1
          %s340 = smul.addr %s339, 2
          %s341 = smul.addr %s340, 8
          %s342 = scalar_lea.vmem %s1, %s341
        $region56: #{tpu_custom_call.1} parent=47 // pred_fallthru
          _
      $region48: #{tpu_custom_call.1} parent=5 // pred_fallthru
        _
      %p343 = scmp.le.s32.totalorder 1, %s19
      %p344 = scmp.lt.s32.totalorder %s19, 5
      %p345 = pnand %p343, %p344
      %p346 = pneg %p345
      // Predicated region
      $region57: #{tpu_custom_call.1} parent=5 // pred_check
        _
      $region58: #{tpu_custom_call.1} parent=5 // pred_check_branch
        %348 = sbr.rel (%p345) target = $region60
      $region59: #{tpu_custom_call.1} parent=5 // pred_region
        %s349 = ssub.s32 %s19, 1
        %p350 = scmp.lt.s32.totalorder %s28, 1
        %s351 = scalar_select %p350, %s28, 1
        %p352 = scmp.lt.s32.totalorder %s29, 1
        %s353 = scalar_select %p352, %s29, 1
        %s354 = smul.addr %s351, 2
        %s355 = sadd.s32 %s353, %s354
        %s356 = smul.addr %s355, 8
        %s357 = scalar_lea.vmem %s0, %s356
        %p358 = pneg %p59
        %p359 = pneg %p56
        %p360 = scmp.lt.s32.totalorder %s28, 1
        %s361 = scalar_select %p360, %s28, 1
        %s362 = smul.addr %s361, 2
        %s363 = smul.addr %s362, 8
        %s364 = scalar_lea.vmem %s1, %s363
        %p365 = pneg %p85
        %p366 = pneg %p82
        %p367 = pneg %p106
        %p368 = pneg %p103
        %p369 = pneg %p127
        %p370 = pneg %p124
        %p371 = pneg %p148
        %p372 = pneg %p145
        %p373 = pneg %p169
        %p374 = pneg %p166
        %p375 = pneg %p190
        %p376 = pneg %p187
        %p377 = pneg %p211
        %p378 = pneg %p208
        %p379 = pneg %p232
        %p380 = pneg %p229
        %p381 = pneg %p253
        %p382 = pneg %p250
        %p383 = pneg %p281
        %p384 = pneg %p278
        %s385 = sand.u32 %s268, 1
        %s386 = scalar_lea.sflag [#allocation5], %s385
        %s387 = sand.u32 %s268, 1
        %s388 = smul.addr %s387, 8
        %s389 = scalar_lea.vmem [#allocation4], %s388
        %p390 = scmp.lt.s32.totalorder %s28, 1
        %s391 = scalar_select %p390, %s28, 1
        %p392 = scmp.lt.s32.totalorder %s29, 1
        %s393 = scalar_select %p392, %s29, 1
        %s394 = smul.addr %s391, 2
        %s395 = sadd.s32 %s393, %s394
        %s396 = smul.addr %s395, 8
        %s397 = scalar_lea.vmem %s0, %s396
        %p398 = scmp.lt.s32.totalorder %s28, 1
        %s399 = scalar_select %p398, %s28, 1
        %s400 = smul.addr %s399, 2
        %s401 = smul.addr %s400, 8
        %s402 = scalar_lea.vmem %s1, %s401
        %p403 = scmp.eq.s32.totalorder %s29, 0
        // Predicated region
        $region61: #{tpu_custom_call.1} parent=59 // pred_check
          %p404 = pneg %p403
        $region62: #{tpu_custom_call.1} parent=59 // pred_check_branch
          %406 = sbr.rel (%p404) target = $region64
        $region63: #{tpu_custom_call.1} parent=59 // pred_region
          %v407 = vld [vmem:[%s402] sm:$0xff]
          %v408 = vld [vmem:[%s402 + $0x8] sm:$0xff]
          %v409 = vld [vmem:[%s4] sm:$0xf]
          %v410 = vld [vmem:[%s5] sm:$0xf]
          %412 = vset.pattern.permute.xlu0 0
          %413 = vperm.xlu0 %412, %v410
          %v414 = vpop.permute.xlu0 %413
          %vm416 = vcmask 261120
          %v418 = vsel %vm416, %v409, 0
          %v421 = vsel %vm416, %v407, 0
          %v424 = vsel %vm416, %v408, 0
          %426 = vmatprep.subr.mxu0 0.0
          %427 = vmatpush1.xpose.msra.mxu0 %v421
          %428 = vmatprep.subr.mxu0 0.0
          %429 = vmatpush1.xpose.msra.mxu0 %v424
          %430 = vmatprep.subr.mxu0 0.0
          %431 = vmatpush1.xpose.msra.mxu0 0.0
          %432 = vmatprep.subr.mxu0 0.0
          %433 = vmatpush1.xpose.msra.mxu0 0.0
          %434 = vmatprep.subr.mxu0 0.0
          %435 = vmatpush1.xpose.msra.mxu0 0.0
          %436 = vmatprep.subr.mxu0 0.0
          %437 = vmatpush1.xpose.msra.mxu0 0.0
          %438 = vmatprep.subr.mxu0 0.0
          %439 = vmatpush1.xpose.msra.mxu0 0.0
          %440 = vmatprep.subr.mxu0 0.0
          %441 = vmatpush1.xpose.msra.mxu0 0.0
          %442 = vmatprep.subr.mxu0 0.0
          %443 = vmatpush1.xpose.msra.mxu0 0.0
          %444 = vmatprep.subr.mxu0 0.0
          %445 = vmatpush1.xpose.msra.mxu0 0.0
          %446 = vmatprep.subr.mxu0 0.0
          %447 = vmatpush1.xpose.msra.mxu0 0.0
          %448 = vmatprep.subr.mxu0 0.0
          %449 = vmatpush1.xpose.msra.mxu0 0.0
          %450 = vmatprep.subr.mxu0 0.0
          %451 = vmatpush1.xpose.msra.mxu0 0.0
          %452 = vmatprep.subr.mxu0 0.0
          %453 = vmatpush1.xpose.msra.mxu0 0.0
          %454 = vmatprep.subr.mxu0 0.0
          %455 = vmatpush1.xpose.msra.mxu0 0.0
          %456 = vmatprep.subr.mxu0 0.0
          %457 = vmatpush1.xpose.msra.mxu0 0.0
          %458 = vmatprep.subr.mxu0 0.0
          %459 = vmatpush1.xpose.msra.mxu0 0.0
          %460 = vmatprep.subr.mxu0 0.0
          %461 = vmatpush1.xpose.msra.mxu0 0.0
          %462 = vmatprep.subr.mxu0 0.0
          %463 = vmatpush1.xpose.msra.mxu0 0.0
          %464 = vmatprep.subr.mxu0 0.0
          %465 = vmatpush1.xpose.msra.mxu0 0.0
          %466 = vmatprep.subr.mxu0 0.0
          %467 = vmatpush1.xpose.msra.mxu0 0.0
          %468 = vmatprep.subr.mxu0 0.0
          %469 = vmatpush1.xpose.msra.mxu0 0.0
          %470 = vmatprep.subr.mxu0 0.0
          %471 = vmatpush1.xpose.msra.mxu0 0.0
          %472 = vmatprep.subr.mxu0 0.0
          %473 = vmatpush1.xpose.msra.mxu0 0.0
          %474 = vmatprep.subr.mxu0 0.0
          %475 = vmatpush1.xpose.msra.mxu0 0.0
          %476 = vmatprep.subr.mxu0 0.0
          %477 = vmatpush1.xpose.msra.mxu0 0.0
          %478 = vmatprep.subr.mxu0 0.0
          %479 = vmatpush1.xpose.msra.mxu0 0.0
          %480 = vmatprep.subr.mxu0 0.0
          %481 = vmatpush1.xpose.msra.mxu0 0.0
          %482 = vmatprep.subr.mxu0 0.0
          %483 = vmatpush1.xpose.msra.mxu0 0.0
          %484 = vmatprep.subr.mxu0 0.0
          %485 = vmatpush1.xpose.msra.mxu0 0.0
          %486 = vmatprep.subr.mxu0 0.0
          %487 = vmatpush1.xpose.msra.mxu0 0.0
          %488 = vmatprep.subr.mxu0 0.0
          %489 = vmatpush1.xpose.msra.mxu0 0.0
          %490 = vmatprep.mubr.f32.mxu0 0.0
          %491 = vmatmul.mubr.f32.gmra.mrb[0].mxu0 %v418
          %v492 = vpop.f32.mrb[0].mxu0
          %v493 = vadd.f32 %v414, %v492
          %v494 = vpop.f32.mrb[0].mxu0
          %495 = vdwg.mxu0
          %v496 = vld [vmem:[%s6] sm:$0xf]
          %v497 = vld [vmem:[%s7] sm:$0xf]
          %499 = vset.pattern.permute.xlu0 0
          %500 = vperm.xlu0 %499, %v497
          %v501 = vpop.permute.xlu0 %500
          %v504 = vsel %vm416, %v496, 0
          %506 = vmatprep.subr.mxu0 0.0
          %507 = vmatpush1.xpose.msra.mxu0 %v421
          %508 = vmatprep.subr.mxu0 0.0
          %509 = vmatpush1.xpose.msra.mxu0 %v424
          %510 = vmatprep.subr.mxu0 0.0
          %511 = vmatpush1.xpose.msra.mxu0 0.0
          %512 = vmatprep.subr.mxu0 0.0
          %513 = vmatpush1.xpose.msra.mxu0 0.0
          %514 = vmatprep.subr.mxu0 0.0
          %515 = vmatpush1.xpose.msra.mxu0 0.0
          %516 = vmatprep.subr.mxu0 0.0
          %517 = vmatpush1.xpose.msra.mxu0 0.0
          %518 = vmatprep.subr.mxu0 0.0
          %519 = vmatpush1.xpose.msra.mxu0 0.0
          %520 = vmatprep.subr.mxu0 0.0
          %521 = vmatpush1.xpose.msra.mxu0 0.0
          %522 = vmatprep.subr.mxu0 0.0
          %523 = vmatpush1.xpose.msra.mxu0 0.0
          %524 = vmatprep.subr.mxu0 0.0
          %525 = vmatpush1.xpose.msra.mxu0 0.0
          %526 = vmatprep.subr.mxu0 0.0
          %527 = vmatpush1.xpose.msra.mxu0 0.0
          %528 = vmatprep.subr.mxu0 0.0
          %529 = vmatpush1.xpose.msra.mxu0 0.0
          %530 = vmatprep.subr.mxu0 0.0
          %531 = vmatpush1.xpose.msra.mxu0 0.0
          %532 = vmatprep.subr.mxu0 0.0
          %533 = vmatpush1.xpose.msra.mxu0 0.0
          %534 = vmatprep.subr.mxu0 0.0
          %535 = vmatpush1.xpose.msra.mxu0 0.0
          %536 = vmatprep.subr.mxu0 0.0
          %537 = vmatpush1.xpose.msra.mxu0 0.0
          %538 = vmatprep.subr.mxu0 0.0
          %539 = vmatpush1.xpose.msra.mxu0 0.0
          %540 = vmatprep.subr.mxu0 0.0
          %541 = vmatpush1.xpose.msra.mxu0 0.0
          %542 = vmatprep.subr.mxu0 0.0
          %543 = vmatpush1.xpose.msra.mxu0 0.0
          %544 = vmatprep.subr.mxu0 0.0
          %545 = vmatpush1.xpose.msra.mxu0 0.0
          %546 = vmatprep.subr.mxu0 0.0
          %547 = vmatpush1.xpose.msra.mxu0 0.0
          %548 = vmatprep.subr.mxu0 0.0
          %549 = vmatpush1.xpose.msra.mxu0 0.0
          %550 = vmatprep.subr.mxu0 0.0
          %551 = vmatpush1.xpose.msra.mxu0 0.0
          %552 = vmatprep.subr.mxu0 0.0
          %553 = vmatpush1.xpose.msra.mxu0 0.0
          %554 = vmatprep.subr.mxu0 0.0
          %555 = vmatpush1.xpose.msra.mxu0 0.0
          %556 = vmatprep.subr.mxu0 0.0
          %557 = vmatpush1.xpose.msra.mxu0 0.0
          %558 = vmatprep.subr.mxu0 0.0
          %559 = vmatpush1.xpose.msra.mxu0 0.0
          %560 = vmatprep.subr.mxu0 0.0
          %561 = vmatpush1.xpose.msra.mxu0 0.0
          %562 = vmatprep.subr.mxu0 0.0
          %563 = vmatpush1.xpose.msra.mxu0 0.0
          %564 = vmatprep.subr.mxu0 0.0
          %565 = vmatpush1.xpose.msra.mxu0 0.0
          %566 = vmatprep.subr.mxu0 0.0
          %567 = vmatpush1.xpose.msra.mxu0 0.0
          %568 = vmatprep.subr.mxu0 0.0
          %569 = vmatpush1.xpose.msra.mxu0 0.0
          %570 = vmatprep.mubr.f32.mxu0 0.0
          %571 = vmatmul.mubr.f32.gmra.mrb[0].mxu0 %v504
          %v572 = vpop.f32.mrb[0].mxu0
          %v573 = vadd.f32 %v501, %v572
          %v574 = vpop.f32.mrb[0].mxu0
          %575 = vdwg.mxu0
          %vm576 = vcmask 125952
          %577 = vst.msk [vmem:[#allocation2] sm:$0xf] %vm576, %v493
          %578 = vst.msk [vmem:[#allocation3] sm:$0xf] %vm576, %v573
          %s579 = scalar_lea.vmem %s4, 4
          %v580 = vld [vmem:[%s579] sm:$0xf]
          %s581 = scalar_lea.vmem %s5, 4
          %v582 = vld [vmem:[%s581] sm:$0xf]
          %584 = vset.pattern.permute.xlu0 0
          %585 = vperm.xlu0 %584, %v582
          %v586 = vpop.permute.xlu0 %585
          %v589 = vsel %vm416, %v580, 0
          %591 = vmatprep.subr.mxu0 0.0
          %592 = vmatpush1.xpose.msra.mxu0 %v421
          %593 = vmatprep.subr.mxu0 0.0
          %594 = vmatpush1.xpose.msra.mxu0 %v424
          %595 = vmatprep.subr.mxu0 0.0
          %596 = vmatpush1.xpose.msra.mxu0 0.0
          %597 = vmatprep.subr.mxu0 0.0
          %598 = vmatpush1.xpose.msra.mxu0 0.0
          %599 = vmatprep.subr.mxu0 0.0
          %600 = vmatpush1.xpose.msra.mxu0 0.0
          %601 = vmatprep.subr.mxu0 0.0
          %602 = vmatpush1.xpose.msra.mxu0 0.0
          %603 = vmatprep.subr.mxu0 0.0
          %604 = vmatpush1.xpose.msra.mxu0 0.0
          %605 = vmatprep.subr.mxu0 0.0
          %606 = vmatpush1.xpose.msra.mxu0 0.0
          %607 = vmatprep.subr.mxu0 0.0
          %608 = vmatpush1.xpose.msra.mxu0 0.0
          %609 = vmatprep.subr.mxu0 0.0
          %610 = vmatpush1.xpose.msra.mxu0 0.0
          %611 = vmatprep.subr.mxu0 0.0
          %612 = vmatpush1.xpose.msra.mxu0 0.0
          %613 = vmatprep.subr.mxu0 0.0
          %614 = vmatpush1.xpose.msra.mxu0 0.0
          %615 = vmatprep.subr.mxu0 0.0
          %616 = vmatpush1.xpose.msra.mxu0 0.0
          %617 = vmatprep.subr.mxu0 0.0
          %618 = vmatpush1.xpose.msra.mxu0 0.0
          %619 = vmatprep.subr.mxu0 0.0
          %620 = vmatpush1.xpose.msra.mxu0 0.0
          %621 = vmatprep.subr.mxu0 0.0
          %622 = vmatpush1.xpose.msra.mxu0 0.0
          %623 = vmatprep.subr.mxu0 0.0
          %624 = vmatpush1.xpose.msra.mxu0 0.0
          %625 = vmatprep.subr.mxu0 0.0
          %626 = vmatpush1.xpose.msra.mxu0 0.0
          %627 = vmatprep.subr.mxu0 0.0
          %628 = vmatpush1.xpose.msra.mxu0 0.0
          %629 = vmatprep.subr.mxu0 0.0
          %630 = vmatpush1.xpose.msra.mxu0 0.0
          %631 = vmatprep.subr.mxu0 0.0
          %632 = vmatpush1.xpose.msra.mxu0 0.0
          %633 = vmatprep.subr.mxu0 0.0
          %634 = vmatpush1.xpose.msra.mxu0 0.0
          %635 = vmatprep.subr.mxu0 0.0
          %636 = vmatpush1.xpose.msra.mxu0 0.0
          %637 = vmatprep.subr.mxu0 0.0
          %638 = vmatpush1.xpose.msra.mxu0 0.0
          %639 = vmatprep.subr.mxu0 0.0
          %640 = vmatpush1.xpose.msra.mxu0 0.0
          %641 = vmatprep.subr.mxu0 0.0
          %642 = vmatpush1.xpose.msra.mxu0 0.0
          %643 = vmatprep.subr.mxu0 0.0
          %644 = vmatpush1.xpose.msra.mxu0 0.0
          %645 = vmatprep.subr.mxu0 0.0
          %646 = vmatpush1.xpose.msra.mxu0 0.0
          %647 = vmatprep.subr.mxu0 0.0
          %648 = vmatpush1.xpose.msra.mxu0 0.0
          %649 = vmatprep.subr.mxu0 0.0
          %650 = vmatpush1.xpose.msra.mxu0 0.0
          %651 = vmatprep.subr.mxu0 0.0
          %652 = vmatpush1.xpose.msra.mxu0 0.0
          %653 = vmatprep.subr.mxu0 0.0
          %654 = vmatpush1.xpose.msra.mxu0 0.0
          %655 = vmatprep.mubr.f32.mxu0 0.0
          %656 = vmatmul.mubr.f32.gmra.mrb[0].mxu0 %v589
          %v657 = vpop.f32.mrb[0].mxu0
          %v658 = vadd.f32 %v586, %v657
          %v659 = vpop.f32.mrb[0].mxu0
          %660 = vdwg.mxu0
          %s661 = scalar_lea.vmem %s6, 4
          %v662 = vld [vmem:[%s661] sm:$0xf]
          %s663 = scalar_lea.vmem %s7, 4
          %v664 = vld [vmem:[%s663] sm:$0xf]
          %666 = vset.pattern.permute.xlu0 0
          %667 = vperm.xlu0 %666, %v664
          %v668 = vpop.permute.xlu0 %667
          %v671 = vsel %vm416, %v662, 0
          %673 = vmatprep.subr.mxu0 0.0
          %674 = vmatpush1.xpose.msra.mxu0 %v421
          %675 = vmatprep.subr.mxu0 0.0
          %676 = vmatpush1.xpose.msra.mxu0 %v424
          %677 = vmatprep.subr.mxu0 0.0
          %678 = vmatpush1.xpose.msra.mxu0 0.0
          %679 = vmatprep.subr.mxu0 0.0
          %680 = vmatpush1.xpose.msra.mxu0 0.0
          %681 = vmatprep.subr.mxu0 0.0
          %682 = vmatpush1.xpose.msra.mxu0 0.0
          %683 = vmatprep.subr.mxu0 0.0
          %684 = vmatpush1.xpose.msra.mxu0 0.0
          %685 = vmatprep.subr.mxu0 0.0
          %686 = vmatpush1.xpose.msra.mxu0 0.0
          %687 = vmatprep.subr.mxu0 0.0
          %688 = vmatpush1.xpose.msra.mxu0 0.0
          %689 = vmatprep.subr.mxu0 0.0
          %690 = vmatpush1.xpose.msra.mxu0 0.0
          %691 = vmatprep.subr.mxu0 0.0
          %692 = vmatpush1.xpose.msra.mxu0 0.0
          %693 = vmatprep.subr.mxu0 0.0
          %694 = vmatpush1.xpose.msra.mxu0 0.0
          %695 = vmatprep.subr.mxu0 0.0
          %696 = vmatpush1.xpose.msra.mxu0 0.0
          %697 = vmatprep.subr.mxu0 0.0
          %698 = vmatpush1.xpose.msra.mxu0 0.0
          %699 = vmatprep.subr.mxu0 0.0
          %700 = vmatpush1.xpose.msra.mxu0 0.0
          %701 = vmatprep.subr.mxu0 0.0
          %702 = vmatpush1.xpose.msra.mxu0 0.0
          %703 = vmatprep.subr.mxu0 0.0
          %704 = vmatpush1.xpose.msra.mxu0 0.0
          %705 = vmatprep.subr.mxu0 0.0
          %706 = vmatpush1.xpose.msra.mxu0 0.0
          %707 = vmatprep.subr.mxu0 0.0
          %708 = vmatpush1.xpose.msra.mxu0 0.0
          %709 = vmatprep.subr.mxu0 0.0
          %710 = vmatpush1.xpose.msra.mxu0 0.0
          %711 = vmatprep.subr.mxu0 0.0
          %712 = vmatpush1.xpose.msra.mxu0 0.0
          %713 = vmatprep.subr.mxu0 0.0
          %714 = vmatpush1.xpose.msra.mxu0 0.0
          %715 = vmatprep.subr.mxu0 0.0
          %716 = vmatpush1.xpose.msra.mxu0 0.0
          %717 = vmatprep.subr.mxu0 0.0
          %718 = vmatpush1.xpose.msra.mxu0 0.0
          %719 = vmatprep.subr.mxu0 0.0
          %720 = vmatpush1.xpose.msra.mxu0 0.0
          %721 = vmatprep.subr.mxu0 0.0
          %722 = vmatpush1.xpose.msra.mxu0 0.0
          %723 = vmatprep.subr.mxu0 0.0
          %724 = vmatpush1.xpose.msra.mxu0 0.0
          %725 = vmatprep.subr.mxu0 0.0
          %726 = vmatpush1.xpose.msra.mxu0 0.0
          %727 = vmatprep.subr.mxu0 0.0
          %728 = vmatpush1.xpose.msra.mxu0 0.0
          %729 = vmatprep.subr.mxu0 0.0
          %730 = vmatpush1.xpose.msra.mxu0 0.0
          %731 = vmatprep.subr.mxu0 0.0
          %732 = vmatpush1.xpose.msra.mxu0 0.0
          %733 = vmatprep.subr.mxu0 0.0
          %734 = vmatpush1.xpose.msra.mxu0 0.0
          %735 = vmatprep.subr.mxu0 0.0
          %736 = vmatpush1.xpose.msra.mxu0 0.0
          %737 = vmatprep.mubr.f32.mxu0 0.0
          %738 = vmatmul.mubr.f32.gmra.mrb[0].mxu0 %v671
          %v739 = vpop.f32.mrb[0].mxu0
          %v740 = vadd.f32 %v668, %v739
          %v741 = vpop.f32.mrb[0].mxu0
          %742 = vdwg.mxu0
          %s743 = scalar_lea.vmem [#allocation2], 4
          %744 = vst.msk [vmem:[%s743] sm:$0xf] %vm576, %v658
          %s745 = scalar_lea.vmem [#allocation3], 4
          %746 = vst.msk [vmem:[%s745] sm:$0xf] %vm576, %v740
          %s747 = scalar_lea.vmem %s4, 8
          %v748 = vld [vmem:[%s747] sm:$0xf]
          %s749 = scalar_lea.vmem %s5, 8
          %v750 = vld [vmem:[%s749] sm:$0xf]
          %752 = vset.pattern.permute.xlu0 0
          %753 = vperm.xlu0 %752, %v750
          %v754 = vpop.permute.xlu0 %753
          %v757 = vsel %vm416, %v748, 0
          %759 = vmatprep.subr.mxu0 0.0
          %760 = vmatpush1.xpose.msra.mxu0 %v421
          %761 = vmatprep.subr.mxu0 0.0
          %762 = vmatpush1.xpose.msra.mxu0 %v424
          %763 = vmatprep.subr.mxu0 0.0
          %764 = vmatpush1.xpose.msra.mxu0 0.0
          %765 = vmatprep.subr.mxu0 0.0
          %766 = vmatpush1.xpose.msra.mxu0 0.0
          %767 = vmatprep.subr.mxu0 0.0
          %768 = vmatpush1.xpose.msra.mxu0 0.0
          %769 = vmatprep.subr.mxu0 0.0
          %770 = vmatpush1.xpose.msra.mxu0 0.0
          %771 = vmatprep.subr.mxu0 0.0
          %772 = vmatpush1.xpose.msra.mxu0 0.0
          %773 = vmatprep.subr.mxu0 0.0
          %774 = vmatpush1.xpose.msra.mxu0 0.0
          %775 = vmatprep.subr.mxu0 0.0
          %776 = vmatpush1.xpose.msra.mxu0 0.0
          %777 = vmatprep.subr.mxu0 0.0
          %778 = vmatpush1.xpose.msra.mxu0 0.0
          %779 = vmatprep.subr.mxu0 0.0
          %780 = vmatpush1.xpose.msra.mxu0 0.0
          %781 = vmatprep.subr.mxu0 0.0
          %782 = vmatpush1.xpose.msra.mxu0 0.0
          %783 = vmatprep.subr.mxu0 0.0
          %784 = vmatpush1.xpose.msra.mxu0 0.0
          %785 = vmatprep.subr.mxu0 0.0
          %786 = vmatpush1.xpose.msra.mxu0 0.0
          %787 = vmatprep.subr.mxu0 0.0
          %788 = vmatpush1.xpose.msra.mxu0 0.0
          %789 = vmatprep.subr.mxu0 0.0
          %790 = vmatpush1.xpose.msra.mxu0 0.0
          %791 = vmatprep.subr.mxu0 0.0
          %792 = vmatpush1.xpose.msra.mxu0 0.0
          %793 = vmatprep.subr.mxu0 0.0
          %794 = vmatpush1.xpose.msra.mxu0 0.0
          %795 = vmatprep.subr.mxu0 0.0
          %796 = vmatpush1.xpose.msra.mxu0 0.0
          %797 = vmatprep.subr.mxu0 0.0
          %798 = vmatpush1.xpose.msra.mxu0 0.0
          %799 = vmatprep.subr.mxu0 0.0
          %800 = vmatpush1.xpose.msra.mxu0 0.0
          %801 = vmatprep.subr.mxu0 0.0
          %802 = vmatpush1.xpose.msra.mxu0 0.0
          %803 = vmatprep.subr.mxu0 0.0
          %804 = vmatpush1.xpose.msra.mxu0 0.0
          %805 = vmatprep.subr.mxu0 0.0
          %806 = vmatpush1.xpose.msra.mxu0 0.0
          %807 = vmatprep.subr.mxu0 0.0
          %808 = vmatpush1.xpose.msra.mxu0 0.0
          %809 = vmatprep.subr.mxu0 0.0
          %810 = vmatpush1.xpose.msra.mxu0 0.0
          %811 = vmatprep.subr.mxu0 0.0
          %812 = vmatpush1.xpose.msra.mxu0 0.0
          %813 = vmatprep.subr.mxu0 0.0
          %814 = vmatpush1.xpose.msra.mxu0 0.0
          %815 = vmatprep.subr.mxu0 0.0
          %816 = vmatpush1.xpose.msra.mxu0 0.0
          %817 = vmatprep.subr.mxu0 0.0
          %818 = vmatpush1.xpose.msra.mxu0 0.0
          %819 = vmatprep.subr.mxu0 0.0
          %820 = vmatpush1.xpose.msra.mxu0 0.0
          %821 = vmatprep.subr.mxu0 0.0
          %822 = vmatpush1.xpose.msra.mxu0 0.0
          %823 = vmatprep.mubr.f32.mxu0 0.0
          %824 = vmatmul.mubr.f32.gmra.mrb[0].mxu0 %v757
          %v825 = vpop.f32.mrb[0].mxu0
          %v826 = vadd.f32 %v754, %v825
          %v827 = vpop.f32.mrb[0].mxu0
          %828 = vdwg.mxu0
          %s829 = scalar_lea.vmem %s6, 8
          %v830 = vld [vmem:[%s829] sm:$0xf]
          %s831 = scalar_lea.vmem %s7, 8
          %v832 = vld [vmem:[%s831] sm:$0xf]
          %834 = vset.pattern.permute.xlu0 0
          %835 = vperm.xlu0 %834, %v832
          %v836 = vpop.permute.xlu0 %835
          %v839 = vsel %vm416, %v830, 0
          %841 = vmatprep.subr.mxu0 0.0
          %842 = vmatpush1.xpose.msra.mxu0 %v421
          %843 = vmatprep.subr.mxu0 0.0
          %844 = vmatpush1.xpose.msra.mxu0 %v424
          %845 = vmatprep.subr.mxu0 0.0
          %846 = vmatpush1.xpose.msra.mxu0 0.0
          %847 = vmatprep.subr.mxu0 0.0
          %848 = vmatpush1.xpose.msra.mxu0 0.0
          %849 = vmatprep.subr.mxu0 0.0
          %850 = vmatpush1.xpose.msra.mxu0 0.0
          %851 = vmatprep.subr.mxu0 0.0
          %852 = vmatpush1.xpose.msra.mxu0 0.0
          %853 = vmatprep.subr.mxu0 0.0
          %854 = vmatpush1.xpose.msra.mxu0 0.0
          %855 = vmatprep.subr.mxu0 0.0
          %856 = vmatpush1.xpose.msra.mxu0 0.0
          %857 = vmatprep.subr.mxu0 0.0
          %858 = vmatpush1.xpose.msra.mxu0 0.0
          %859 = vmatprep.subr.mxu0 0.0
          %860 = vmatpush1.xpose.msra.mxu0 0.0
          %861 = vmatprep.subr.mxu0 0.0
          %862 = vmatpush1.xpose.msra.mxu0 0.0
          %863 = vmatprep.subr.mxu0 0.0
          %864 = vmatpush1.xpose.msra.mxu0 0.0
          %865 = vmatprep.subr.mxu0 0.0
          %866 = vmatpush1.xpose.msra.mxu0 0.0
          %867 = vmatprep.subr.mxu0 0.0
          %868 = vmatpush1.xpose.msra.mxu0 0.0
          %869 = vmatprep.subr.mxu0 0.0
          %870 = vmatpush1.xpose.msra.mxu0 0.0
          %871 = vmatprep.subr.mxu0 0.0
          %872 = vmatpush1.xpose.msra.mxu0 0.0
          %873 = vmatprep.subr.mxu0 0.0
          %874 = vmatpush1.xpose.msra.mxu0 0.0
          %875 = vmatprep.subr.mxu0 0.0
          %876 = vmatpush1.xpose.msra.mxu0 0.0
          %877 = vmatprep.subr.mxu0 0.0
          %878 = vmatpush1.xpose.msra.mxu0 0.0
          %879 = vmatprep.subr.mxu0 0.0
          %880 = vmatpush1.xpose.msra.mxu0 0.0
          %881 = vmatprep.subr.mxu0 0.0
          %882 = vmatpush1.xpose.msra.mxu0 0.0
          %883 = vmatprep.subr.mxu0 0.0
          %884 = vmatpush1.xpose.msra.mxu0 0.0
          %885 = vmatprep.subr.mxu0 0.0
          %886 = vmatpush1.xpose.msra.mxu0 0.0
          %887 = vmatprep.subr.mxu0 0.0
          %888 = vmatpush1.xpose.msra.mxu0 0.0
          %889 = vmatprep.subr.mxu0 0.0
          %890 = vmatpush1.xpose.msra.mxu0 0.0
          %891 = vmatprep.subr.mxu0 0.0
          %892 = vmatpush1.xpose.msra.mxu0 0.0
          %893 = vmatprep.subr.mxu0 0.0
          %894 = vmatpush1.xpose.msra.mxu0 0.0
          %895 = vmatprep.subr.mxu0 0.0
          %896 = vmatpush1.xpose.msra.mxu0 0.0
          %897 = vmatprep.subr.mxu0 0.0
          %898 = vmatpush1.xpose.msra.mxu0 0.0
          %899 = vmatprep.subr.mxu0 0.0
          %900 = vmatpush1.xpose.msra.mxu0 0.0
          %901 = vmatprep.subr.mxu0 0.0
          %902 = vmatpush1.xpose.msra.mxu0 0.0
          %903 = vmatprep.subr.mxu0 0.0
          %904 = vmatpush1.xpose.msra.mxu0 0.0
          %905 = vmatprep.mubr.f32.mxu0 0.0
          %906 = vmatmul.mubr.f32.gmra.mrb[0].mxu0 %v839
          %v907 = vpop.f32.mrb[0].mxu0
          %v908 = vadd.f32 %v836, %v907
          %v909 = vpop.f32.mrb[0].mxu0
          %910 = vdwg.mxu0
          %s911 = scalar_lea.vmem [#allocation2], 8
          %912 = vst.msk [vmem:[%s911] sm:$0xf] %vm576, %v826
          %s913 = scalar_lea.vmem [#allocation3], 8
          %914 = vst.msk [vmem:[%s913] sm:$0xf] %vm576, %v908
          %s915 = scalar_lea.vmem %s4, 12
          %v916 = vld [vmem:[%s915] sm:$0xf]
          %s917 = scalar_lea.vmem %s5, 12
          %v918 = vld [vmem:[%s917] sm:$0xf]
          %920 = vset.pattern.permute.xlu0 0
          %921 = vperm.xlu0 %920, %v918
          %v922 = vpop.permute.xlu0 %921
          %v925 = vsel %vm416, %v916, 0
          %927 = vmatprep.subr.mxu0 0.0
          %928 = vmatpush1.xpose.msra.mxu0 %v421
          %929 = vmatprep.subr.mxu0 0.0
          %930 = vmatpush1.xpose.msra.mxu0 %v424
          %931 = vmatprep.subr.mxu0 0.0
          %932 = vmatpush1.xpose.msra.mxu0 0.0
          %933 = vmatprep.subr.mxu0 0.0
          %934 = vmatpush1.xpose.msra.mxu0 0.0
          %935 = vmatprep.subr.mxu0 0.0
          %936 = vmatpush1.xpose.msra.mxu0 0.0
          %937 = vmatprep.subr.mxu0 0.0
          %938 = vmatpush1.xpose.msra.mxu0 0.0
          %939 = vmatprep.subr.mxu0 0.0
          %940 = vmatpush1.xpose.msra.mxu0 0.0
          %941 = vmatprep.subr.mxu0 0.0
          %942 = vmatpush1.xpose.msra.mxu0 0.0
          %943 = vmatprep.subr.mxu0 0.0
          %944 = vmatpush1.xpose.msra.mxu0 0.0
          %945 = vmatprep.subr.mxu0 0.0
          %946 = vmatpush1.xpose.msra.mxu0 0.0
          %947 = vmatprep.subr.mxu0 0.0
          %948 = vmatpush1.xpose.msra.mxu0 0.0
          %949 = vmatprep.subr.mxu0 0.0
          %950 = vmatpush1.xpose.msra.mxu0 0.0
          %951 = vmatprep.subr.mxu0 0.0
          %952 = vmatpush1.xpose.msra.mxu0 0.0
          %953 = vmatprep.subr.mxu0 0.0
          %954 = vmatpush1.xpose.msra.mxu0 0.0
          %955 = vmatprep.subr.mxu0 0.0
          %956 = vmatpush1.xpose.msra.mxu0 0.0
          %957 = vmatprep.subr.mxu0 0.0
          %958 = vmatpush1.xpose.msra.mxu0 0.0
          %959 = vmatprep.subr.mxu0 0.0
          %960 = vmatpush1.xpose.msra.mxu0 0.0
          %961 = vmatprep.subr.mxu0 0.0
          %962 = vmatpush1.xpose.msra.mxu0 0.0
          %963 = vmatprep.subr.mxu0 0.0
          %964 = vmatpush1.xpose.msra.mxu0 0.0
          %965 = vmatprep.subr.mxu0 0.0
          %966 = vmatpush1.xpose.msra.mxu0 0.0
          %967 = vmatprep.subr.mxu0 0.0
          %968 = vmatpush1.xpose.msra.mxu0 0.0
          %969 = vmatprep.subr.mxu0 0.0
          %970 = vmatpush1.xpose.msra.mxu0 0.0
          %971 = vmatprep.subr.mxu0 0.0
          %972 = vmatpush1.xpose.msra.mxu0 0.0
          %973 = vmatprep.subr.mxu0 0.0
          %974 = vmatpush1.xpose.msra.mxu0 0.0
          %975 = vmatprep.subr.mxu0 0.0
          %976 = vmatpush1.xpose.msra.mxu0 0.0
          %977 = vmatprep.subr.mxu0 0.0
          %978 = vmatpush1.xpose.msra.mxu0 0.0
          %979 = vmatprep.subr.mxu0 0.0
          %980 = vmatpush1.xpose.msra.mxu0 0.0
          %981 = vmatprep.subr.mxu0 0.0
          %982 = vmatpush1.xpose.msra.mxu0 0.0
          %983 = vmatprep.subr.mxu0 0.0
          %984 = vmatpush1.xpose.msra.mxu0 0.0
          %985 = vmatprep.subr.mxu0 0.0
          %986 = vmatpush1.xpose.msra.mxu0 0.0
          %987 = vmatprep.subr.mxu0 0.0
          %988 = vmatpush1.xpose.msra.mxu0 0.0
          %989 = vmatprep.subr.mxu0 0.0
          %990 = vmatpush1.xpose.msra.mxu0 0.0
          %991 = vmatprep.mubr.f32.mxu0 0.0
          %992 = vmatmul.mubr.f32.gmra.mrb[0].mxu0 %v925
          %v993 = vpop.f32.mrb[0].mxu0
          %v994 = vadd.f32 %v922, %v993
          %v995 = vpop.f32.mrb[0].mxu0
          %996 = vdwg.mxu0
          %s997 = scalar_lea.vmem %s6, 12
          %v998 = vld [vmem:[%s997] sm:$0xf]
          %s999 = scalar_lea.vmem %s7, 12
          %v1000 = vld [vmem:[%s999] sm:$0xf]
          %1002 = vset.pattern.permute.xlu0 0
          %1003 = vperm.xlu0 %1002, %v1000
          %v1004 = vpop.permute.xlu0 %1003
          %v1007 = vsel %vm416, %v998, 0
          %1009 = vmatprep.subr.mxu0 0.0
          %1010 = vmatpush1.xpose.msra.mxu0 %v421
          %1011 = vmatprep.subr.mxu0 0.0
          %1012 = vmatpush1.xpose.msra.mxu0 %v424
          %1013 = vmatprep.subr.mxu0 0.0
          %1014 = vmatpush1.xpose.msra.mxu0 0.0
          %1015 = vmatprep.subr.mxu0 0.0
          %1016 = vmatpush1.xpose.msra.mxu0 0.0
          %1017 = vmatprep.subr.mxu0 0.0
          %1018 = vmatpush1.xpose.msra.mxu0 0.0
          %1019 = vmatprep.subr.mxu0 0.0
          %1020 = vmatpush1.xpose.msra.mxu0 0.0
          %1021 = vmatprep.subr.mxu0 0.0
          %1022 = vmatpush1.xpose.msra.mxu0 0.0
          %1023 = vmatprep.subr.mxu0 0.0
          %1024 = vmatpush1.xpose.msra.mxu0 0.0
          %1025 = vmatprep.subr.mxu0 0.0
          %1026 = vmatpush1.xpose.msra.mxu0 0.0
          %1027 = vmatprep.subr.mxu0 0.0
          %1028 = vmatpush1.xpose.msra.mxu0 0.0
          %1029 = vmatprep.subr.mxu0 0.0
          %1030 = vmatpush1.xpose.msra.mxu0 0.0
          %1031 = vmatprep.subr.mxu0 0.0
          %1032 = vmatpush1.xpose.msra.mxu0 0.0
          %1033 = vmatprep.subr.mxu0 0.0
          %1034 = vmatpush1.xpose.msra.mxu0 0.0
          %1035 = vmatprep.subr.mxu0 0.0
          %1036 = vmatpush1.xpose.msra.mxu0 0.0
          %1037 = vmatprep.subr.mxu0 0.0
          %1038 = vmatpush1.xpose.msra.mxu0 0.0
          %1039 = vmatprep.subr.mxu0 0.0
          %1040 = vmatpush1.xpose.msra.mxu0 0.0
          %1041 = vmatprep.subr.mxu0 0.0
          %1042 = vmatpush1.xpose.msra.mxu0 0.0
          %1043 = vmatprep.subr.mxu0 0.0
          %1044 = vmatpush1.xpose.msra.mxu0 0.0
          %1045 = vmatprep.subr.mxu0 0.0
          %1046 = vmatpush1.xpose.msra.mxu0 0.0
          %1047 = vmatprep.subr.mxu0 0.0
          %1048 = vmatpush1.xpose.msra.mxu0 0.0
          %1049 = vmatprep.subr.mxu0 0.0
          %1050 = vmatpush1.xpose.msra.mxu0 0.0
          %1051 = vmatprep.subr.mxu0 0.0
          %1052 = vmatpush1.xpose.msra.mxu0 0.0
          %1053 = vmatprep.subr.mxu0 0.0
          %1054 = vmatpush1.xpose.msra.mxu0 0.0
          %1055 = vmatprep.subr.mxu0 0.0
          %1056 = vmatpush1.xpose.msra.mxu0 0.0
          %1057 = vmatprep.subr.mxu0 0.0
          %1058 = vmatpush1.xpose.msra.mxu0 0.0
          %1059 = vmatprep.subr.mxu0 0.0
          %1060 = vmatpush1.xpose.msra.mxu0 0.0
          %1061 = vmatprep.subr.mxu0 0.0
          %1062 = vmatpush1.xpose.msra.mxu0 0.0
          %1063 = vmatprep.subr.mxu0 0.0
          %1064 = vmatpush1.xpose.msra.mxu0 0.0
          %1065 = vmatprep.subr.mxu0 0.0
          %1066 = vmatpush1.xpose.msra.mxu0 0.0
          %1067 = vmatprep.subr.mxu0 0.0
          %1068 = vmatpush1.xpose.msra.mxu0 0.0
          %1069 = vmatprep.subr.mxu0 0.0
          %1070 = vmatpush1.xpose.msra.mxu0 0.0
          %1071 = vmatprep.subr.mxu0 0.0
          %1072 = vmatpush1.xpose.msra.mxu0 0.0
          %1073 = vmatprep.mubr.f32.mxu0 0.0
          %1074 = vmatmul.mubr.f32.gmra.mrb[0].mxu0 %v1007
          %v1075 = vpop.f32.mrb[0].mxu0
          %v1076 = vadd.f32 %v1004, %v1075
          %v1077 = vpop.f32.mrb[0].mxu0
          %1078 = vdwg.mxu0
          %s1079 = scalar_lea.vmem [#allocation2], 12
          %1080 = vst.msk [vmem:[%s1079] sm:$0xf] %vm576, %v994
          %s1081 = scalar_lea.vmem [#allocation3], 12
          %1082 = vst.msk [vmem:[%s1081] sm:$0xf] %vm576, %v1076
          %s1083 = scalar_lea.vmem %s4, 16
          %v1084 = vld [vmem:[%s1083] sm:$0xf]
          %s1085 = scalar_lea.vmem %s5, 16
          %v1086 = vld [vmem:[%s1085] sm:$0xf]
          %1088 = vset.pattern.permute.xlu0 0
          %1089 = vperm.xlu0 %1088, %v1086
          %v1090 = vpop.permute.xlu0 %1089
          %v1093 = vsel %vm416, %v1084, 0
          %1095 = vmatprep.subr.mxu0 0.0
          %1096 = vmatpush1.xpose.msra.mxu0 %v421
          %1097 = vmatprep.subr.mxu0 0.0
          %1098 = vmatpush1.xpose.msra.mxu0 %v424
          %1099 = vmatprep.subr.mxu0 0.0
          %1100 = vmatpush1.xpose.msra.mxu0 0.0
          %1101 = vmatprep.subr.mxu0 0.0
          %1102 = vmatpush1.xpose.msra.mxu0 0.0
          %1103 = vmatprep.subr.mxu0 0.0
          %1104 = vmatpush1.xpose.msra.mxu0 0.0
          %1105 = vmatprep.subr.mxu0 0.0
          %1106 = vmatpush1.xpose.msra.mxu0 0.0
          %1107 = vmatprep.subr.mxu0 0.0
          %1108 = vmatpush1.xpose.msra.mxu0 0.0
          %1109 = vmatprep.subr.mxu0 0.0
          %1110 = vmatpush1.xpose.msra.mxu0 0.0
          %1111 = vmatprep.subr.mxu0 0.0
          %1112 = vmatpush1.xpose.msra.mxu0 0.0
          %1113 = vmatprep.subr.mxu0 0.0
          %1114 = vmatpush1.xpose.msra.mxu0 0.0
          %1115 = vmatprep.subr.mxu0 0.0
          %1116 = vmatpush1.xpose.msra.mxu0 0.0
          %1117 = vmatprep.subr.mxu0 0.0
          %1118 = vmatpush1.xpose.msra.mxu0 0.0
          %1119 = vmatprep.subr.mxu0 0.0
          %1120 = vmatpush1.xpose.msra.mxu0 0.0
          %1121 = vmatprep.subr.mxu0 0.0
          %1122 = vmatpush1.xpose.msra.mxu0 0.0
          %1123 = vmatprep.subr.mxu0 0.0
          %1124 = vmatpush1.xpose.msra.mxu0 0.0
          %1125 = vmatprep.subr.mxu0 0.0
          %1126 = vmatpush1.xpose.msra.mxu0 0.0
          %1127 = vmatprep.subr.mxu0 0.0
          %1128 = vmatpush1.xpose.msra.mxu0 0.0
          %1129 = vmatprep.subr.mxu0 0.0
          %1130 = vmatpush1.xpose.msra.mxu0 0.0
          %1131 = vmatprep.subr.mxu0 0.0
          %1132 = vmatpush1.xpose.msra.mxu0 0.0
          %1133 = vmatprep.subr.mxu0 0.0
          %1134 = vmatpush1.xpose.msra.mxu0 0.0
          %1135 = vmatprep.subr.mxu0 0.0
          %1136 = vmatpush1.xpose.msra.mxu0 0.0
          %1137 = vmatprep.subr.mxu0 0.0
          %1138 = vmatpush1.xpose.msra.mxu0 0.0
          %1139 = vmatprep.subr.mxu0 0.0
          %1140 = vmatpush1.xpose.msra.mxu0 0.0
          %1141 = vmatprep.subr.mxu0 0.0
          %1142 = vmatpush1.xpose.msra.mxu0 0.0
          %1143 = vmatprep.subr.mxu0 0.0
          %1144 = vmatpush1.xpose.msra.mxu0 0.0
          %1145 = vmatprep.subr.mxu0 0.0
          %1146 = vmatpush1.xpose.msra.mxu0 0.0
          %1147 = vmatprep.subr.mxu0 0.0
          %1148 = vmatpush1.xpose.msra.mxu0 0.0
          %1149 = vmatprep.subr.mxu0 0.0
          %1150 = vmatpush1.xpose.msra.mxu0 0.0
          %1151 = vmatprep.subr.mxu0 0.0
          %1152 = vmatpush1.xpose.msra.mxu0 0.0
          %1153 = vmatprep.subr.mxu0 0.0
          %1154 = vmatpush1.xpose.msra.mxu0 0.0
          %1155 = vmatprep.subr.mxu0 0.0
          %1156 = vmatpush1.xpose.msra.mxu0 0.0
          %1157 = vmatprep.subr.mxu0 0.0
          %1158 = vmatpush1.xpose.msra.mxu0 0.0
          %1159 = vmatprep.mubr.f32.mxu0 0.0
          %1160 = vmatmul.mubr.f32.gmra.mrb[0].mxu0 %v1093
          %v1161 = vpop.f32.mrb[0].mxu0
          %v1162 = vadd.f32 %v1090, %v1161
          %v1163 = vpop.f32.mrb[0].mxu0
          %1164 = vdwg.mxu0
          %s1165 = scalar_lea.vmem %s6, 16
          %v1166 = vld [vmem:[%s1165] sm:$0xf]
          %s1167 = scalar_lea.vmem %s7, 16
          %v1168 = vld [vmem:[%s1167] sm:$0xf]
          %1170 = vset.pattern.permute.xlu0 0
          %1171 = vperm.xlu0 %1170, %v1168
          %v1172 = vpop.permute.xlu0 %1171
          %v1175 = vsel %vm416, %v1166, 0
          %1177 = vmatprep.subr.mxu0 0.0
          %1178 = vmatpush1.xpose.msra.mxu0 %v421
          %1179 = vmatprep.subr.mxu0 0.0
          %1180 = vmatpush1.xpose.msra.mxu0 %v424
          %1181 = vmatprep.subr.mxu0 0.0
          %1182 = vmatpush1.xpose.msra.mxu0 0.0
          %1183 = vmatprep.subr.mxu0 0.0
          %1184 = vmatpush1.xpose.msra.mxu0 0.0
          %1185 = vmatprep.subr.mxu0 0.0
          %1186 = vmatpush1.xpose.msra.mxu0 0.0
          %1187 = vmatprep.subr.mxu0 0.0
          %1188 = vmatpush1.xpose.msra.mxu0 0.0
          %1189 = vmatprep.subr.mxu0 0.0
          %1190 = vmatpush1.xpose.msra.mxu0 0.0
          %1191 = vmatprep.subr.mxu0 0.0
          %1192 = vmatpush1.xpose.msra.mxu0 0.0
          %1193 = vmatprep.subr.mxu0 0.0
          %1194 = vmatpush1.xpose.msra.mxu0 0.0
          %1195 = vmatprep.subr.mxu0 0.0
          %1196 = vmatpush1.xpose.msra.mxu0 0.0
          %1197 = vmatprep.subr.mxu0 0.0
          %1198 = vmatpush1.xpose.msra.mxu0 0.0
          %1199 = vmatprep.subr.mxu0 0.0
          %1200 = vmatpush1.xpose.msra.mxu0 0.0
          %1201 = vmatprep.subr.mxu0 0.0
          %1202 = vmatpush1.xpose.msra.mxu0 0.0
          %1203 = vmatprep.subr.mxu0 0.0
          %1204 = vmatpush1.xpose.msra.mxu0 0.0
          %1205 = vmatprep.subr.mxu0 0.0
          %1206 = vmatpush1.xpose.msra.mxu0 0.0
          %1207 = vmatprep.subr.mxu0 0.0
          %1208 = vmatpush1.xpose.msra.mxu0 0.0
          %1209 = vmatprep.subr.mxu0 0.0
          %1210 = vmatpush1.xpose.msra.mxu0 0.0
          %1211 = vmatprep.subr.mxu0 0.0
          %1212 = vmatpush1.xpose.msra.mxu0 0.0
          %1213 = vmatprep.subr.mxu0 0.0
          %1214 = vmatpush1.xpose.msra.mxu0 0.0
          %1215 = vmatprep.subr.mxu0 0.0
          %1216 = vmatpush1.xpose.msra.mxu0 0.0
          %1217 = vmatprep.subr.mxu0 0.0
          %1218 = vmatpush1.xpose.msra.mxu0 0.0
          %1219 = vmatprep.subr.mxu0 0.0
          %1220 = vmatpush1.xpose.msra.mxu0 0.0
          %1221 = vmatprep.subr.mxu0 0.0
          %1222 = vmatpush1.xpose.msra.mxu0 0.0
          %1223 = vmatprep.subr.mxu0 0.0
          %1224 = vmatpush1.xpose.msra.mxu0 0.0
          %1225 = vmatprep.subr.mxu0 0.0
          %1226 = vmatpush1.xpose.msra.mxu0 0.0
          %1227 = vmatprep.subr.mxu0 0.0
          %1228 = vmatpush1.xpose.msra.mxu0 0.0
          %1229 = vmatprep.subr.mxu0 0.0
          %1230 = vmatpush1.xpose.msra.mxu0 0.0
          %1231 = vmatprep.subr.mxu0 0.0
          %1232 = vmatpush1.xpose.msra.mxu0 0.0
          %1233 = vmatprep.subr.mxu0 0.0
          %1234 = vmatpush1.xpose.msra.mxu0 0.0
          %1235 = vmatprep.subr.mxu0 0.0
          %1236 = vmatpush1.xpose.msra.mxu0 0.0
          %1237 = vmatprep.subr.mxu0 0.0
          %1238 = vmatpush1.xpose.msra.mxu0 0.0
          %1239 = vmatprep.subr.mxu0 0.0
          %1240 = vmatpush1.xpose.msra.mxu0 0.0
          %1241 = vmatprep.mubr.f32.mxu0 0.0
          %1242 = vmatmul.mubr.f32.gmra.mrb[0].mxu0 %v1175
          %v1243 = vpop.f32.mrb[0].mxu0
          %v1244 = vadd.f32 %v1172, %v1243
          %v1245 = vpop.f32.mrb[0].mxu0
          %1246 = vdwg.mxu0
          %s1247 = scalar_lea.vmem [#allocation2], 16
          %1248 = vst.msk [vmem:[%s1247] sm:$0xf] %vm576, %v1162
          %s1249 = scalar_lea.vmem [#allocation3], 16
          %1250 = vst.msk [vmem:[%s1249] sm:$0xf] %vm576, %v1244
          %s1251 = scalar_lea.vmem %s4, 20
          %v1252 = vld [vmem:[%s1251] sm:$0xf]
          %s1253 = scalar_lea.vmem %s5, 20
          %v1254 = vld [vmem:[%s1253] sm:$0xf]
          %1256 = vset.pattern.permute.xlu0 0
          %1257 = vperm.xlu0 %1256, %v1254
          %v1258 = vpop.permute.xlu0 %1257
          %v1261 = vsel %vm416, %v1252, 0
          %1263 = vmatprep.subr.mxu0 0.0
          %1264 = vmatpush1.xpose.msra.mxu0 %v421
          %1265 = vmatprep.subr.mxu0 0.0
          %1266 = vmatpush1.xpose.msra.mxu0 %v424
          %1267 = vmatprep.subr.mxu0 0.0
          %1268 = vmatpush1.xpose.msra.mxu0 0.0
          %1269 = vmatprep.subr.mxu0 0.0
          %1270 = vmatpush1.xpose.msra.mxu0 0.0
          %1271 = vmatprep.subr.mxu0 0.0
          %1272 = vmatpush1.xpose.msra.mxu0 0.0
          %1273 = vmatprep.subr.mxu0 0.0
          %1274 = vmatpush1.xpose.msra.mxu0 0.0
          %1275 = vmatprep.subr.mxu0 0.0
          %1276 = vmatpush1.xpose.msra.mxu0 0.0
          %1277 = vmatprep.subr.mxu0 0.0
          %1278 = vmatpush1.xpose.msra.mxu0 0.0
          %1279 = vmatprep.subr.mxu0 0.0
          %1280 = vmatpush1.xpose.msra.mxu0 0.0
          %1281 = vmatprep.subr.mxu0 0.0
          %1282 = vmatpush1.xpose.msra.mxu0 0.0
          %1283 = vmatprep.subr.mxu0 0.0
          %1284 = vmatpush1.xpose.msra.mxu0 0.0
          %1285 = vmatprep.subr.mxu0 0.0
          %1286 = vmatpush1.xpose.msra.mxu0 0.0
          %1287 = vmatprep.subr.mxu0 0.0
          %1288 = vmatpush1.xpose.msra.mxu0 0.0
          %1289 = vmatprep.subr.mxu0 0.0
          %1290 = vmatpush1.xpose.msra.mxu0 0.0
          %1291 = vmatprep.subr.mxu0 0.0
          %1292 = vmatpush1.xpose.msra.mxu0 0.0
          %1293 = vmatprep.subr.mxu0 0.0
          %1294 = vmatpush1.xpose.msra.mxu0 0.0
          %1295 = vmatprep.subr.mxu0 0.0
          %1296 = vmatpush1.xpose.msra.mxu0 0.0
          %1297 = vmatprep.subr.mxu0 0.0
          %1298 = vmatpush1.xpose.msra.mxu0 0.0
          %1299 = vmatprep.subr.mxu0 0.0
          %1300 = vmatpush1.xpose.msra.mxu0 0.0
          %1301 = vmatprep.subr.mxu0 0.0
          %1302 = vmatpush1.xpose.msra.mxu0 0.0
          %1303 = vmatprep.subr.mxu0 0.0
          %1304 = vmatpush1.xpose.msra.mxu0 0.0
          %1305 = vmatprep.subr.mxu0 0.0
          %1306 = vmatpush1.xpose.msra.mxu0 0.0
          %1307 = vmatprep.subr.mxu0 0.0
          %1308 = vmatpush1.xpose.msra.mxu0 0.0
          %1309 = vmatprep.subr.mxu0 0.0
          %1310 = vmatpush1.xpose.msra.mxu0 0.0
          %1311 = vmatprep.subr.mxu0 0.0
          %1312 = vmatpush1.xpose.msra.mxu0 0.0
          %1313 = vmatprep.subr.mxu0 0.0
          %1314 = vmatpush1.xpose.msra.mxu0 0.0
          %1315 = vmatprep.subr.mxu0 0.0
          %1316 = vmatpush1.xpose.msra.mxu0 0.0
          %1317 = vmatprep.subr.mxu0 0.0
          %1318 = vmatpush1.xpose.msra.mxu0 0.0
          %1319 = vmatprep.subr.mxu0 0.0
          %1320 = vmatpush1.xpose.msra.mxu0 0.0
          %1321 = vmatprep.subr.mxu0 0.0
          %1322 = vmatpush1.xpose.msra.mxu0 0.0
          %1323 = vmatprep.subr.mxu0 0.0
          %1324 = vmatpush1.xpose.msra.mxu0 0.0
          %1325 = vmatprep.subr.mxu0 0.0
          %1326 = vmatpush1.xpose.msra.mxu0 0.0
          %1327 = vmatprep.mubr.f32.mxu0 0.0
          %1328 = vmatmul.mubr.f32.gmra.mrb[0].mxu0 %v1261
          %v1329 = vpop.f32.mrb[0].mxu0
          %v1330 = vadd.f32 %v1258, %v1329
          %v1331 = vpop.f32.mrb[0].mxu0
          %1332 = vdwg.mxu0
          %s1333 = scalar_lea.vmem %s6, 20
          %v1334 = vld [vmem:[%s1333] sm:$0xf]
          %s1335 = scalar_lea.vmem %s7, 20
          %v1336 = vld [vmem:[%s1335] sm:$0xf]
          %1338 = vset.pattern.permute.xlu0 0
          %1339 = vperm.xlu0 %1338, %v1336
          %v1340 = vpop.permute.xlu0 %1339
          %v1343 = vsel %vm416, %v1334, 0
          %1345 = vmatprep.subr.mxu0 0.0
          %1346 = vmatpush1.xpose.msra.mxu0 %v421
          %1347 = vmatprep.subr.mxu0 0.0
          %1348 = vmatpush1.xpose.msra.mxu0 %v424
          %1349 = vmatprep.subr.mxu0 0.0
          %1350 = vmatpush1.xpose.msra.mxu0 0.0
          %1351 = vmatprep.subr.mxu0 0.0
          %1352 = vmatpush1.xpose.msra.mxu0 0.0
          %1353 = vmatprep.subr.mxu0 0.0
          %1354 = vmatpush1.xpose.msra.mxu0 0.0
          %1355 = vmatprep.subr.mxu0 0.0
          %1356 = vmatpush1.xpose.msra.mxu0 0.0
          %1357 = vmatprep.subr.mxu0 0.0
          %1358 = vmatpush1.xpose.msra.mxu0 0.0
          %1359 = vmatprep.subr.mxu0 0.0
          %1360 = vmatpush1.xpose.msra.mxu0 0.0
          %1361 = vmatprep.subr.mxu0 0.0
          %1362 = vmatpush1.xpose.msra.mxu0 0.0
          %1363 = vmatprep.subr.mxu0 0.0
          %1364 = vmatpush1.xpose.msra.mxu0 0.0
          %1365 = vmatprep.subr.mxu0 0.0
          %1366 = vmatpush1.xpose.msra.mxu0 0.0
          %1367 = vmatprep.subr.mxu0 0.0
          %1368 = vmatpush1.xpose.msra.mxu0 0.0
          %1369 = vmatprep.subr.mxu0 0.0
          %1370 = vmatpush1.xpose.msra.mxu0 0.0
          %1371 = vmatprep.subr.mxu0 0.0
          %1372 = vmatpush1.xpose.msra.mxu0 0.0
          %1373 = vmatprep.subr.mxu0 0.0
          %1374 = vmatpush1.xpose.msra.mxu0 0.0
          %1375 = vmatprep.subr.mxu0 0.0
          %1376 = vmatpush1.xpose.msra.mxu0 0.0
          %1377 = vmatprep.subr.mxu0 0.0
          %1378 = vmatpush1.xpose.msra.mxu0 0.0
          %1379 = vmatprep.subr.mxu0 0.0
          %1380 = vmatpush1.xpose.msra.mxu0 0.0
          %1381 = vmatprep.subr.mxu0 0.0
          %1382 = vmatpush1.xpose.msra.mxu0 0.0
          %1383 = vmatprep.subr.mxu0 0.0
          %1384 = vmatpush1.xpose.msra.mxu0 0.0
          %1385 = vmatprep.subr.mxu0 0.0
          %1386 = vmatpush1.xpose.msra.mxu0 0.0
          %1387 = vmatprep.subr.mxu0 0.0
          %1388 = vmatpush1.xpose.msra.mxu0 0.0
          %1389 = vmatprep.subr.mxu0 0.0
          %1390 = vmatpush1.xpose.msra.mxu0 0.0
          %1391 = vmatprep.subr.mxu0 0.0
          %1392 = vmatpush1.xpose.msra.mxu0 0.0
          %1393 = vmatprep.subr.mxu0 0.0
          %1394 = vmatpush1.xpose.msra.mxu0 0.0
          %1395 = vmatprep.subr.mxu0 0.0
          %1396 = vmatpush1.xpose.msra.mxu0 0.0
          %1397 = vmatprep.subr.mxu0 0.0
          %1398 = vmatpush1.xpose.msra.mxu0 0.0
          %1399 = vmatprep.subr.mxu0 0.0
          %1400 = vmatpush1.xpose.msra.mxu0 0.0
          %1401 = vmatprep.subr.mxu0 0.0
          %1402 = vmatpush1.xpose.msra.mxu0 0.0
          %1403 = vmatprep.subr.mxu0 0.0
          %1404 = vmatpush1.xpose.msra.mxu0 0.0
          %1405 = vmatprep.subr.mxu0 0.0
          %1406 = vmatpush1.xpose.msra.mxu0 0.0
          %1407 = vmatprep.subr.mxu0 0.0
          %1408 = vmatpush1.xpose.msra.mxu0 0.0
          %1409 = vmatprep.mubr.f32.mxu0 0.0
          %1410 = vmatmul.mubr.f32.gmra.mrb[0].mxu0 %v1343
          %v1411 = vpop.f32.mrb[0].mxu0
          %v1412 = vadd.f32 %v1340, %v1411
          %v1413 = vpop.f32.mrb[0].mxu0
          %1414 = vdwg.mxu0
          %s1415 = scalar_lea.vmem [#allocation2], 20
          %1416 = vst.msk [vmem:[%s1415] sm:$0xf] %vm576, %v1330
          %s1417 = scalar_lea.vmem [#allocation3], 20
          %1418 = vst.msk [vmem:[%s1417] sm:$0xf] %vm576, %v1412
          %s1419 = scalar_lea.vmem %s4, 24
          %v1420 = vld [vmem:[%s1419] sm:$0xf]
          %s1421 = scalar_lea.vmem %s5, 24
          %v1422 = vld [vmem:[%s1421] sm:$0xf]
          %1424 = vset.pattern.permute.xlu0 0
          %1425 = vperm.xlu0 %1424, %v1422
          %v1426 = vpop.permute.xlu0 %1425
          %v1429 = vsel %vm416, %v1420, 0
          %1431 = vmatprep.subr.mxu0 0.0
          %1432 = vmatpush1.xpose.msra.mxu0 %v421
          %1433 = vmatprep.subr.mxu0 0.0
          %1434 = vmatpush1.xpose.msra.mxu0 %v424
          %1435 = vmatprep.subr.mxu0 0.0
          %1436 = vmatpush1.xpose.msra.mxu0 0.0
          %1437 = vmatprep.subr.mxu0 0.0
          %1438 = vmatpush1.xpose.msra.mxu0 0.0
          %1439 = vmatprep.subr.mxu0 0.0
          %1440 = vmatpush1.xpose.msra.mxu0 0.0
          %1441 = vmatprep.subr.mxu0 0.0
          %1442 = vmatpush1.xpose.msra.mxu0 0.0
          %1443 = vmatprep.subr.mxu0 0.0
          %1444 = vmatpush1.xpose.msra.mxu0 0.0
          %1445 = vmatprep.subr.mxu0 0.0
          %1446 = vmatpush1.xpose.msra.mxu0 0.0
          %1447 = vmatprep.subr.mxu0 0.0
          %1448 = vmatpush1.xpose.msra.mxu0 0.0
          %1449 = vmatprep.subr.mxu0 0.0
          %1450 = vmatpush1.xpose.msra.mxu0 0.0
          %1451 = vmatprep.subr.mxu0 0.0
          %1452 = vmatpush1.xpose.msra.mxu0 0.0
          %1453 = vmatprep.subr.mxu0 0.0
          %1454 = vmatpush1.xpose.msra.mxu0 0.0
          %1455 = vmatprep.subr.mxu0 0.0
          %1456 = vmatpush1.xpose.msra.mxu0 0.0
          %1457 = vmatprep.subr.mxu0 0.0
          %1458 = vmatpush1.xpose.msra.mxu0 0.0
          %1459 = vmatprep.subr.mxu0 0.0
          %1460 = vmatpush1.xpose.msra.mxu0 0.0
          %1461 = vmatprep.subr.mxu0 0.0
          %1462 = vmatpush1.xpose.msra.mxu0 0.0
          %1463 = vmatprep.subr.mxu0 0.0
          %1464 = vmatpush1.xpose.msra.mxu0 0.0
          %1465 = vmatprep.subr.mxu0 0.0
          %1466 = vmatpush1.xpose.msra.mxu0 0.0
          %1467 = vmatprep.subr.mxu0 0.0
          %1468 = vmatpush1.xpose.msra.mxu0 0.0
          %1469 = vmatprep.subr.mxu0 0.0
          %1470 = vmatpush1.xpose.msra.mxu0 0.0
          %1471 = vmatprep.subr.mxu0 0.0
          %1472 = vmatpush1.xpose.msra.mxu0 0.0
          %1473 = vmatprep.subr.mxu0 0.0
          %1474 = vmatpush1.xpose.msra.mxu0 0.0
          %1475 = vmatprep.subr.mxu0 0.0
          %1476 = vmatpush1.xpose.msra.mxu0 0.0
          %1477 = vmatprep.subr.mxu0 0.0
          %1478 = vmatpush1.xpose.msra.mxu0 0.0
          %1479 = vmatprep.subr.mxu0 0.0
          %1480 = vmatpush1.xpose.msra.mxu0 0.0
          %1481 = vmatprep.subr.mxu0 0.0
          %1482 = vmatpush1.xpose.msra.mxu0 0.0
          %1483 = vmatprep.subr.mxu0 0.0
          %1484 = vmatpush1.xpose.msra.mxu0 0.0
          %1485 = vmatprep.subr.mxu0 0.0
          %1486 = vmatpush1.xpose.msra.mxu0 0.0
          %1487 = vmatprep.subr.mxu0 0.0
          %1488 = vmatpush1.xpose.msra.mxu0 0.0
          %1489 = vmatprep.subr.mxu0 0.0
          %1490 = vmatpush1.xpose.msra.mxu0 0.0
          %1491 = vmatprep.subr.mxu0 0.0
          %1492 = vmatpush1.xpose.msra.mxu0 0.0
          %1493 = vmatprep.subr.mxu0 0.0
          %1494 = vmatpush1.xpose.msra.mxu0 0.0
          %1495 = vmatprep.mubr.f32.mxu0 0.0
          %1496 = vmatmul.mubr.f32.gmra.mrb[0].mxu0 %v1429
          %v1497 = vpop.f32.mrb[0].mxu0
          %v1498 = vadd.f32 %v1426, %v1497
          %v1499 = vpop.f32.mrb[0].mxu0
          %1500 = vdwg.mxu0
          %s1501 = scalar_lea.vmem %s6, 24
          %v1502 = vld [vmem:[%s1501] sm:$0xf]
          %s1503 = scalar_lea.vmem %s7, 24
          %v1504 = vld [vmem:[%s1503] sm:$0xf]
          %1506 = vset.pattern.permute.xlu0 0
          %1507 = vperm.xlu0 %1506, %v1504
          %v1508 = vpop.permute.xlu0 %1507
          %v1511 = vsel %vm416, %v1502, 0
          %1513 = vmatprep.subr.mxu0 0.0
          %1514 = vmatpush1.xpose.msra.mxu0 %v421
          %1515 = vmatprep.subr.mxu0 0.0
          %1516 = vmatpush1.xpose.msra.mxu0 %v424
          %1517 = vmatprep.subr.mxu0 0.0
          %1518 = vmatpush1.xpose.msra.mxu0 0.0
          %1519 = vmatprep.subr.mxu0 0.0
          %1520 = vmatpush1.xpose.msra.mxu0 0.0
          %1521 = vmatprep.subr.mxu0 0.0
          %1522 = vmatpush1.xpose.msra.mxu0 0.0
          %1523 = vmatprep.subr.mxu0 0.0
          %1524 = vmatpush1.xpose.msra.mxu0 0.0
          %1525 = vmatprep.subr.mxu0 0.0
          %1526 = vmatpush1.xpose.msra.mxu0 0.0
          %1527 = vmatprep.subr.mxu0 0.0
          %1528 = vmatpush1.xpose.msra.mxu0 0.0
          %1529 = vmatprep.subr.mxu0 0.0
          %1530 = vmatpush1.xpose.msra.mxu0 0.0
          %1531 = vmatprep.subr.mxu0 0.0
          %1532 = vmatpush1.xpose.msra.mxu0 0.0
          %1533 = vmatprep.subr.mxu0 0.0
          %1534 = vmatpush1.xpose.msra.mxu0 0.0
          %1535 = vmatprep.subr.mxu0 0.0
          %1536 = vmatpush1.xpose.msra.mxu0 0.0
          %1537 = vmatprep.subr.mxu0 0.0
          %1538 = vmatpush1.xpose.msra.mxu0 0.0
          %1539 = vmatprep.subr.mxu0 0.0
          %1540 = vmatpush1.xpose.msra.mxu0 0.0
          %1541 = vmatprep.subr.mxu0 0.0
          %1542 = vmatpush1.xpose.msra.mxu0 0.0
          %1543 = vmatprep.subr.mxu0 0.0
          %1544 = vmatpush1.xpose.msra.mxu0 0.0
          %1545 = vmatprep.subr.mxu0 0.0
          %1546 = vmatpush1.xpose.msra.mxu0 0.0
          %1547 = vmatprep.subr.mxu0 0.0
          %1548 = vmatpush1.xpose.msra.mxu0 0.0
          %1549 = vmatprep.subr.mxu0 0.0
          %1550 = vmatpush1.xpose.msra.mxu0 0.0
          %1551 = vmatprep.subr.mxu0 0.0
          %1552 = vmatpush1.xpose.msra.mxu0 0.0
          %1553 = vmatprep.subr.mxu0 0.0
          %1554 = vmatpush1.xpose.msra.mxu0 0.0
          %1555 = vmatprep.subr.mxu0 0.0
          %1556 = vmatpush1.xpose.msra.mxu0 0.0
          %1557 = vmatprep.subr.mxu0 0.0
          %1558 = vmatpush1.xpose.msra.mxu0 0.0
          %1559 = vmatprep.subr.mxu0 0.0
          %1560 = vmatpush1.xpose.msra.mxu0 0.0
          %1561 = vmatprep.subr.mxu0 0.0
          %1562 = vmatpush1.xpose.msra.mxu0 0.0
          %1563 = vmatprep.subr.mxu0 0.0
          %1564 = vmatpush1.xpose.msra.mxu0 0.0
          %1565 = vmatprep.subr.mxu0 0.0
          %1566 = vmatpush1.xpose.msra.mxu0 0.0
          %1567 = vmatprep.subr.mxu0 0.0
          %1568 = vmatpush1.xpose.msra.mxu0 0.0
          %1569 = vmatprep.subr.mxu0 0.0
          %1570 = vmatpush1.xpose.msra.mxu0 0.0
          %1571 = vmatprep.subr.mxu0 0.0
          %1572 = vmatpush1.xpose.msra.mxu0 0.0
          %1573 = vmatprep.subr.mxu0 0.0
          %1574 = vmatpush1.xpose.msra.mxu0 0.0
          %1575 = vmatprep.subr.mxu0 0.0
          %1576 = vmatpush1.xpose.msra.mxu0 0.0
          %1577 = vmatprep.mubr.f32.mxu0 0.0
          %1578 = vmatmul.mubr.f32.gmra.mrb[0].mxu0 %v1511
          %v1579 = vpop.f32.mrb[0].mxu0
          %v1580 = vadd.f32 %v1508, %v1579
          %v1581 = vpop.f32.mrb[0].mxu0
          %1582 = vdwg.mxu0
          %s1583 = scalar_lea.vmem [#allocation2], 24
          %1584 = vst.msk [vmem:[%s1583] sm:$0xf] %vm576, %v1498
          %s1585 = scalar_lea.vmem [#allocation3], 24
          %1586 = vst.msk [vmem:[%s1585] sm:$0xf] %vm576, %v1580
          %s1587 = scalar_lea.vmem %s4, 28
          %v1588 = vld [vmem:[%s1587] sm:$0xf]
          %s1589 = scalar_lea.vmem %s5, 28
          %v1590 = vld [vmem:[%s1589] sm:$0xf]
          %1592 = vset.pattern.permute.xlu0 0
          %1593 = vperm.xlu0 %1592, %v1590
          %v1594 = vpop.permute.xlu0 %1593
          %v1597 = vsel %vm416, %v1588, 0
          %1599 = vmatprep.subr.mxu0 0.0
          %1600 = vmatpush1.xpose.msra.mxu0 %v421
          %1601 = vmatprep.subr.mxu0 0.0
          %1602 = vmatpush1.xpose.msra.mxu0 %v424
          %1603 = vmatprep.subr.mxu0 0.0
          %1604 = vmatpush1.xpose.msra.mxu0 0.0
          %1605 = vmatprep.subr.mxu0 0.0
          %1606 = vmatpush1.xpose.msra.mxu0 0.0
          %1607 = vmatprep.subr.mxu0 0.0
          %1608 = vmatpush1.xpose.msra.mxu0 0.0
          %1609 = vmatprep.subr.mxu0 0.0
          %1610 = vmatpush1.xpose.msra.mxu0 0.0
          %1611 = vmatprep.subr.mxu0 0.0
          %1612 = vmatpush1.xpose.msra.mxu0 0.0
          %1613 = vmatprep.subr.mxu0 0.0
          %1614 = vmatpush1.xpose.msra.mxu0 0.0
          %1615 = vmatprep.subr.mxu0 0.0
          %1616 = vmatpush1.xpose.msra.mxu0 0.0
          %1617 = vmatprep.subr.mxu0 0.0
          %1618 = vmatpush1.xpose.msra.mxu0 0.0
          %1619 = vmatprep.subr.mxu0 0.0
          %1620 = vmatpush1.xpose.msra.mxu0 0.0
          %1621 = vmatprep.subr.mxu0 0.0
          %1622 = vmatpush1.xpose.msra.mxu0 0.0
          %1623 = vmatprep.subr.mxu0 0.0
          %1624 = vmatpush1.xpose.msra.mxu0 0.0
          %1625 = vmatprep.subr.mxu0 0.0
          %1626 = vmatpush1.xpose.msra.mxu0 0.0
          %1627 = vmatprep.subr.mxu0 0.0
          %1628 = vmatpush1.xpose.msra.mxu0 0.0
          %1629 = vmatprep.subr.mxu0 0.0
          %1630 = vmatpush1.xpose.msra.mxu0 0.0
          %1631 = vmatprep.subr.mxu0 0.0
          %1632 = vmatpush1.xpose.msra.mxu0 0.0
          %1633 = vmatprep.subr.mxu0 0.0
          %1634 = vmatpush1.xpose.msra.mxu0 0.0
          %1635 = vmatprep.subr.mxu0 0.0
          %1636 = vmatpush1.xpose.msra.mxu0 0.0
          %1637 = vmatprep.subr.mxu0 0.0
          %1638 = vmatpush1.xpose.msra.mxu0 0.0
          %1639 = vmatprep.subr.mxu0 0.0
          %1640 = vmatpush1.xpose.msra.mxu0 0.0
          %1641 = vmatprep.subr.mxu0 0.0
          %1642 = vmatpush1.xpose.msra.mxu0 0.0
          %1643 = vmatprep.subr.mxu0 0.0
          %1644 = vmatpush1.xpose.msra.mxu0 0.0
          %1645 = vmatprep.subr.mxu0 0.0
          %1646 = vmatpush1.xpose.msra.mxu0 0.0
          %1647 = vmatprep.subr.mxu0 0.0
          %1648 = vmatpush1.xpose.msra.mxu0 0.0
          %1649 = vmatprep.subr.mxu0 0.0
          %1650 = vmatpush1.xpose.msra.mxu0 0.0
          %1651 = vmatprep.subr.mxu0 0.0
          %1652 = vmatpush1.xpose.msra.mxu0 0.0
          %1653 = vmatprep.subr.mxu0 0.0
          %1654 = vmatpush1.xpose.msra.mxu0 0.0
          %1655 = vmatprep.subr.mxu0 0.0
          %1656 = vmatpush1.xpose.msra.mxu0 0.0
          %1657 = vmatprep.subr.mxu0 0.0
          %1658 = vmatpush1.xpose.msra.mxu0 0.0
          %1659 = vmatprep.subr.mxu0 0.0
          %1660 = vmatpush1.xpose.msra.mxu0 0.0
          %1661 = vmatprep.subr.mxu0 0.0
          %1662 = vmatpush1.xpose.msra.mxu0 0.0
          %1663 = vmatprep.mubr.f32.mxu0 0.0
          %1664 = vmatmul.mubr.f32.gmra.mrb[0].mxu0 %v1597
          %v1665 = vpop.f32.mrb[0].mxu0
          %v1666 = vadd.f32 %v1594, %v1665
          %v1667 = vpop.f32.mrb[0].mxu0
          %1668 = vdwg.mxu0
          %s1669 = scalar_lea.vmem %s6, 28
          %v1670 = vld [vmem:[%s1669] sm:$0xf]
          %s1671 = scalar_lea.vmem %s7, 28
          %v1672 = vld [vmem:[%s1671] sm:$0xf]
          %1674 = vset.pattern.permute.xlu0 0
          %1675 = vperm.xlu0 %1674, %v1672
          %v1676 = vpop.permute.xlu0 %1675
          %v1679 = vsel %vm416, %v1670, 0
          %1681 = vmatprep.subr.mxu0 0.0
          %1682 = vmatpush1.xpose.msra.mxu0 %v421
          %1683 = vmatprep.subr.mxu0 0.0
          %1684 = vmatpush1.xpose.msra.mxu0 %v424
          %1685 = vmatprep.subr.mxu0 0.0
          %1686 = vmatpush1.xpose.msra.mxu0 0.0
          %1687 = vmatprep.subr.mxu0 0.0
          %1688 = vmatpush1.xpose.msra.mxu0 0.0
          %1689 = vmatprep.subr.mxu0 0.0
          %1690 = vmatpush1.xpose.msra.mxu0 0.0
          %1691 = vmatprep.subr.mxu0 0.0
          %1692 = vmatpush1.xpose.msra.mxu0 0.0
          %1693 = vmatprep.subr.mxu0 0.0
          %1694 = vmatpush1.xpose.msra.mxu0 0.0
          %1695 = vmatprep.subr.mxu0 0.0
          %1696 = vmatpush1.xpose.msra.mxu0 0.0
          %1697 = vmatprep.subr.mxu0 0.0
          %1698 = vmatpush1.xpose.msra.mxu0 0.0
          %1699 = vmatprep.subr.mxu0 0.0
          %1700 = vmatpush1.xpose.msra.mxu0 0.0
          %1701 = vmatprep.subr.mxu0 0.0
          %1702 = vmatpush1.xpose.msra.mxu0 0.0
          %1703 = vmatprep.subr.mxu0 0.0
          %1704 = vmatpush1.xpose.msra.mxu0 0.0
          %1705 = vmatprep.subr.mxu0 0.0
          %1706 = vmatpush1.xpose.msra.mxu0 0.0
          %1707 = vmatprep.subr.mxu0 0.0
          %1708 = vmatpush1.xpose.msra.mxu0 0.0
          %1709 = vmatprep.subr.mxu0 0.0
          %1710 = vmatpush1.xpose.msra.mxu0 0.0
          %1711 = vmatprep.subr.mxu0 0.0
          %1712 = vmatpush1.xpose.msra.mxu0 0.0
          %1713 = vmatprep.subr.mxu0 0.0
          %1714 = vmatpush1.xpose.msra.mxu0 0.0
          %1715 = vmatprep.subr.mxu0 0.0
          %1716 = vmatpush1.xpose.msra.mxu0 0.0
          %1717 = vmatprep.subr.mxu0 0.0
          %1718 = vmatpush1.xpose.msra.mxu0 0.0
          %1719 = vmatprep.subr.mxu0 0.0
          %1720 = vmatpush1.xpose.msra.mxu0 0.0
          %1721 = vmatprep.subr.mxu0 0.0
          %1722 = vmatpush1.xpose.msra.mxu0 0.0
          %1723 = vmatprep.subr.mxu0 0.0
          %1724 = vmatpush1.xpose.msra.mxu0 0.0
          %1725 = vmatprep.subr.mxu0 0.0
          %1726 = vmatpush1.xpose.msra.mxu0 0.0
          %1727 = vmatprep.subr.mxu0 0.0
          %1728 = vmatpush1.xpose.msra.mxu0 0.0
          %1729 = vmatprep.subr.mxu0 0.0
          %1730 = vmatpush1.xpose.msra.mxu0 0.0
          %1731 = vmatprep.subr.mxu0 0.0
          %1732 = vmatpush1.xpose.msra.mxu0 0.0
          %1733 = vmatprep.subr.mxu0 0.0
          %1734 = vmatpush1.xpose.msra.mxu0 0.0
          %1735 = vmatprep.subr.mxu0 0.0
          %1736 = vmatpush1.xpose.msra.mxu0 0.0
          %1737 = vmatprep.subr.mxu0 0.0
          %1738 = vmatpush1.xpose.msra.mxu0 0.0
          %1739 = vmatprep.subr.mxu0 0.0
          %1740 = vmatpush1.xpose.msra.mxu0 0.0
          %1741 = vmatprep.subr.mxu0 0.0
          %1742 = vmatpush1.xpose.msra.mxu0 0.0
          %1743 = vmatprep.subr.mxu0 0.0
          %1744 = vmatpush1.xpose.msra.mxu0 0.0
          %1745 = vmatprep.mubr.f32.mxu0 0.0
          %1746 = vmatmul.mubr.f32.gmra.mrb[0].mxu0 %v1679
          %v1747 = vpop.f32.mrb[0].mxu0
          %v1748 = vadd.f32 %v1676, %v1747
          %v1749 = vpop.f32.mrb[0].mxu0
          %1750 = vdwg.mxu0
          %s1751 = scalar_lea.vmem [#allocation2], 28
          %1752 = vst.msk [vmem:[%s1751] sm:$0xf] %vm576, %v1666
          %s1753 = scalar_lea.vmem [#allocation3], 28
          %1754 = vst.msk [vmem:[%s1753] sm:$0xf] %vm576, %v1748
        $region64: #{tpu_custom_call.1} parent=59 // pred_fallthru
          _
        %v1755 = vld [vmem:[%s397] sm:$0xff]
        %v1756 = vld [vmem:[%s2] sm:$0xff]
        %v1757 = vld [vmem:[%s2 + $0x8] sm:$0xff]
        %v1758 = vld [vmem:[%s2 + $0x10] sm:$0xff]
        %v1759 = vld [vmem:[%s2 + $0x18] sm:$0xff]
        %v1760 = vld [vmem:[%s3] sm:$0x1]
        %v1762 = vlaneseq
        %v1763 = vshrl.u32 %v1762, 7
        %v1764 = vsub.s32 0, %v1763
        %v1765 = vrot.slane %v1760, %v1764
        %vm1767 = vcmask 261120
        %v1769 = vsel %vm1767, %v1755, 0
        %1771 = vmatprep.subr.mxu0 0.0
        %1772 = vmatpush1.msra.mxu0 %v1756
        %1773 = vmatprep.subr.mxu0 0.0
        %1774 = vmatpush1.msra.mxu0 %v1757
        %1775 = vmatprep.subr.mxu0 0.0
        %1776 = vmatpush1.msra.mxu0 %v1758
        %1777 = vmatprep.subr.mxu0 0.0
        %1778 = vmatpush1.msra.mxu0 %v1759
        %1779 = vmatprep.subr.mxu0 0.0
        %1780 = vmatpush1.msra.mxu0 0.0
        %1781 = vmatprep.subr.mxu0 0.0
        %1782 = vmatpush1.msra.mxu0 0.0
        %1783 = vmatprep.subr.mxu0 0.0
        %1784 = vmatpush1.msra.mxu0 0.0
        %1785 = vmatprep.subr.mxu0 0.0
        %1786 = vmatpush1.msra.mxu0 0.0
        %1787 = vmatprep.subr.mxu0 0.0
        %1788 = vmatpush1.msra.mxu0 0.0
        %1789 = vmatprep.subr.mxu0 0.0
        %1790 = vmatpush1.msra.mxu0 0.0
        %1791 = vmatprep.subr.mxu0 0.0
        %1792 = vmatpush1.msra.mxu0 0.0
        %1793 = vmatprep.subr.mxu0 0.0
        %1794 = vmatpush1.msra.mxu0 0.0
        %1795 = vmatprep.subr.mxu0 0.0
        %1796 = vmatpush1.msra.mxu0 0.0
        %1797 = vmatprep.subr.mxu0 0.0
        %1798 = vmatpush1.msra.mxu0 0.0
        %1799 = vmatprep.subr.mxu0 0.0
        %1800 = vmatpush1.msra.mxu0 0.0
        %1801 = vmatprep.subr.mxu0 0.0
        %1802 = vmatpush1.msra.mxu0 0.0
        %1803 = vmatprep.subr.mxu0 0.0
        %1804 = vmatpush1.msra.mxu0 0.0
        %1805 = vmatprep.subr.mxu0 0.0
        %1806 = vmatpush1.msra.mxu0 0.0
        %1807 = vmatprep.subr.mxu0 0.0
        %1808 = vmatpush1.msra.mxu0 0.0
        %1809 = vmatprep.subr.mxu0 0.0
        %1810 = vmatpush1.msra.mxu0 0.0
        %1811 = vmatprep.subr.mxu0 0.0
        %1812 = vmatpush1.msra.mxu0 0.0
        %1813 = vmatprep.subr.mxu0 0.0
        %1814 = vmatpush1.msra.mxu0 0.0
        %1815 = vmatprep.subr.mxu0 0.0
        %1816 = vmatpush1.msra.mxu0 0.0
        %1817 = vmatprep.subr.mxu0 0.0
        %1818 = vmatpush1.msra.mxu0 0.0
        %1819 = vmatprep.subr.mxu0 0.0
        %1820 = vmatpush1.msra.mxu0 0.0
        %1821 = vmatprep.subr.mxu0 0.0
        %1822 = vmatpush1.msra.mxu0 0.0
        %1823 = vmatprep.subr.mxu0 0.0
        %1824 = vmatpush1.msra.mxu0 0.0
        %1825 = vmatprep.subr.mxu0 0.0
        %1826 = vmatpush1.msra.mxu0 0.0
        %1827 = vmatprep.subr.mxu0 0.0
        %1828 = vmatpush1.msra.mxu0 0.0
        %1829 = vmatprep.subr.mxu0 0.0
        %1830 = vmatpush1.msra.mxu0 0.0
        %1831 = vmatprep.subr.mxu0 0.0
        %1832 = vmatpush1.msra.mxu0 0.0
        %1833 = vmatprep.subr.mxu0 0.0
        %1834 = vmatpush1.msra.mxu0 0.0
        %1835 = vmatprep.mubr.f32.mxu0 0.0
        %1836 = vmatmul.mubr.f32.gmra.mrb[0].mxu0 %v1769
        %v1837 = vpop.f32.mrb[0].mxu0
        %v1838 = vadd.f32 %v1765, %v1837
        %v1839 = vpop.f32.mrb[0].mxu0
        %1840 = vdwg.mxu0
        %v1841 = vld [vmem:[#allocation2] sm:$0xf]
        %v1842 = vld [vmem:[#allocation3] sm:$0xf]
        %vm1843 = vcmask 31744
        %v1845 = vsel %vm1843, %v1838, 0
        %vm1847 = vcmask 1043456
        %v1849 = vsel %vm1847, %v1841, 0
        %1851 = vmatprep.subr.mxu0 0.0
        %1852 = vmatpush1.msra.mxu0 %v1849
        %1853 = vmatprep.subr.mxu0 0.0
        %1854 = vmatpush1.msra.mxu0 0.0
        %1855 = vmatprep.subr.mxu0 0.0
        %1856 = vmatpush1.msra.mxu0 0.0
        %1857 = vmatprep.subr.mxu0 0.0
        %1858 = vmatpush1.msra.mxu0 0.0
        %1859 = vmatprep.subr.mxu0 0.0
        %1860 = vmatpush1.msra.mxu0 0.0
        %1861 = vmatprep.subr.mxu0 0.0
        %1862 = vmatpush1.msra.mxu0 0.0
        %1863 = vmatprep.subr.mxu0 0.0
        %1864 = vmatpush1.msra.mxu0 0.0
        %1865 = vmatprep.subr.mxu0 0.0
        %1866 = vmatpush1.msra.mxu0 0.0
        %1867 = vmatprep.subr.mxu0 0.0
        %1868 = vmatpush1.msra.mxu0 0.0
        %1869 = vmatprep.subr.mxu0 0.0
        %1870 = vmatpush1.msra.mxu0 0.0
        %1871 = vmatprep.subr.mxu0 0.0
        %1872 = vmatpush1.msra.mxu0 0.0
        %1873 = vmatprep.subr.mxu0 0.0
        %1874 = vmatpush1.msra.mxu0 0.0
        %1875 = vmatprep.subr.mxu0 0.0
        %1876 = vmatpush1.msra.mxu0 0.0
        %1877 = vmatprep.subr.mxu0 0.0
        %1878 = vmatpush1.msra.mxu0 0.0
        %1879 = vmatprep.subr.mxu0 0.0
        %1880 = vmatpush1.msra.mxu0 0.0
        %1881 = vmatprep.subr.mxu0 0.0
        %1882 = vmatpush1.msra.mxu0 0.0
        %1883 = vmatprep.subr.mxu0 0.0
        %1884 = vmatpush1.msra.mxu0 0.0
        %1885 = vmatprep.subr.mxu0 0.0
        %1886 = vmatpush1.msra.mxu0 0.0
        %1887 = vmatprep.subr.mxu0 0.0
        %1888 = vmatpush1.msra.mxu0 0.0
        %1889 = vmatprep.subr.mxu0 0.0
        %1890 = vmatpush1.msra.mxu0 0.0
        %1891 = vmatprep.subr.mxu0 0.0
        %1892 = vmatpush1.msra.mxu0 0.0
        %1893 = vmatprep.subr.mxu0 0.0
        %1894 = vmatpush1.msra.mxu0 0.0
        %1895 = vmatprep.subr.mxu0 0.0
        %1896 = vmatpush1.msra.mxu0 0.0
        %1897 = vmatprep.subr.mxu0 0.0
        %1898 = vmatpush1.msra.mxu0 0.0
        %1899 = vmatprep.subr.mxu0 0.0
        %1900 = vmatpush1.msra.mxu0 0.0
        %1901 = vmatprep.subr.mxu0 0.0
        %1902 = vmatpush1.msra.mxu0 0.0
        %1903 = vmatprep.subr.mxu0 0.0
        %1904 = vmatpush1.msra.mxu0 0.0
        %1905 = vmatprep.subr.mxu0 0.0
        %1906 = vmatpush1.msra.mxu0 0.0
        %1907 = vmatprep.subr.mxu0 0.0
        %1908 = vmatpush1.msra.mxu0 0.0
        %1909 = vmatprep.subr.mxu0 0.0
        %1910 = vmatpush1.msra.mxu0 0.0
        %1911 = vmatprep.subr.mxu0 0.0
        %1912 = vmatpush1.msra.mxu0 0.0
        %1913 = vmatprep.subr.mxu0 0.0
        %1914 = vmatpush1.msra.mxu0 0.0
        %1915 = vmatprep.mubr.f32.mxu0 0.0
        %1916 = vmatmul.mubr.f32.gmra.mrb[0].mxu0 %v1845
        %v1917 = vpop.f32.mrb[0].mxu0
        %v1918 = vadd.f32 0.0, %v1917
        %v1919 = vpop.f32.mrb[0].mxu0
        %1920 = vdwg.mxu0
        %vm1921 = vcmask 130048
        %v1922 = vsel %vm1921, %v1918, -inf
        %1923 = vmax.xlane.f32.xlu0 %v1922
        %v1924 = vpop.xlane.xlu0 %1923
        %v1925 = vsub.f32 %v1918, %v1924
        %v1926 = vmul.f32 %v1925, 1.442695
        %v1927 = vpow.pop %v1926
        %v1928 = vsel %vm1921, %v1927, 0.0
        %1929 = vadd.xlane.f32.xlu0 %v1928
        %v1930 = vpop.xlane.xlu0 %1929
        %v1931 = vrcp.pop %v1930
        %v1932 = vmul.f32 %v1927, %v1931
        %v1934 = vsel %vm1921, %v1932, 0
        %v1937 = vsel %vm1921, %v1842, 0
        %1939 = vmatprep.subr.mxu0 0.0
        %1940 = vmatpush1.xpose.msra.mxu0 %v1937
        %1941 = vmatprep.subr.mxu0 0.0
        %1942 = vmatpush1.xpose.msra.mxu0 0.0
        %1943 = vmatprep.subr.mxu0 0.0
        %1944 = vmatpush1.xpose.msra.mxu0 0.0
        %1945 = vmatprep.subr.mxu0 0.0
        %1946 = vmatpush1.xpose.msra.mxu0 0.0
        %1947 = vmatprep.subr.mxu0 0.0
        %1948 = vmatpush1.xpose.msra.mxu0 0.0
        %1949 = vmatprep.subr.mxu0 0.0
        %1950 = vmatpush1.xpose.msra.mxu0 0.0
        %1951 = vmatprep.subr.mxu0 0.0
        %1952 = vmatpush1.xpose.msra.mxu0 0.0
        %1953 = vmatprep.subr.mxu0 0.0
        %1954 = vmatpush1.xpose.msra.mxu0 0.0
        %1955 = vmatprep.subr.mxu0 0.0
        %1956 = vmatpush1.xpose.msra.mxu0 0.0
        %1957 = vmatprep.subr.mxu0 0.0
        %1958 = vmatpush1.xpose.msra.mxu0 0.0
        %1959 = vmatprep.subr.mxu0 0.0
        %1960 = vmatpush1.xpose.msra.mxu0 0.0
        %1961 = vmatprep.subr.mxu0 0.0
        %1962 = vmatpush1.xpose.msra.mxu0 0.0
        %1963 = vmatprep.subr.mxu0 0.0
        %1964 = vmatpush1.xpose.msra.mxu0 0.0
        %1965 = vmatprep.subr.mxu0 0.0
        %1966 = vmatpush1.xpose.msra.mxu0 0.0
        %1967 = vmatprep.subr.mxu0 0.0
        %1968 = vmatpush1.xpose.msra.mxu0 0.0
        %1969 = vmatprep.subr.mxu0 0.0
        %1970 = vmatpush1.xpose.msra.mxu0 0.0
        %1971 = vmatprep.subr.mxu0 0.0
        %1972 = vmatpush1.xpose.msra.mxu0 0.0
        %1973 = vmatprep.subr.mxu0 0.0
        %1974 = vmatpush1.xpose.msra.mxu0 0.0
        %1975 = vmatprep.subr.mxu0 0.0
        %1976 = vmatpush1.xpose.msra.mxu0 0.0
        %1977 = vmatprep.subr.mxu0 0.0
        %1978 = vmatpush1.xpose.msra.mxu0 0.0
        %1979 = vmatprep.subr.mxu0 0.0
        %1980 = vmatpush1.xpose.msra.mxu0 0.0
        %1981 = vmatprep.subr.mxu0 0.0
        %1982 = vmatpush1.xpose.msra.mxu0 0.0
        %1983 = vmatprep.subr.mxu0 0.0
        %1984 = vmatpush1.xpose.msra.mxu0 0.0
        %1985 = vmatprep.subr.mxu0 0.0
        %1986 = vmatpush1.xpose.msra.mxu0 0.0
        %1987 = vmatprep.subr.mxu0 0.0
        %1988 = vmatpush1.xpose.msra.mxu0 0.0
        %1989 = vmatprep.subr.mxu0 0.0
        %1990 = vmatpush1.xpose.msra.mxu0 0.0
        %1991 = vmatprep.subr.mxu0 0.0
        %1992 = vmatpush1.xpose.msra.mxu0 0.0
        %1993 = vmatprep.subr.mxu0 0.0
        %1994 = vmatpush1.xpose.msra.mxu0 0.0
        %1995 = vmatprep.subr.mxu0 0.0
        %1996 = vmatpush1.xpose.msra.mxu0 0.0
        %1997 = vmatprep.subr.mxu0 0.0
        %1998 = vmatpush1.xpose.msra.mxu0 0.0
        %1999 = vmatprep.subr.mxu0 0.0
        %2000 = vmatpush1.xpose.msra.mxu0 0.0
        %2001 = vmatprep.subr.mxu0 0.0
        %2002 = vmatpush1.xpose.msra.mxu0 0.0
        %2003 = vmatprep.mubr.f32.mxu0 0.0
        %2004 = vmatmul.mubr.f32.gmra.mrb[0].mxu0 %v1934
        %v2005 = vpop.f32.mrb[0].mxu0
        %v2006 = vadd.f32 0.0, %v2005
        %v2007 = vpop.f32.mrb[0].mxu0
        %2008 = vdwg.mxu0
        %v2009 = vld [vmem:[%s8] sm:$0xf]
        %s2010 = scalar_lea.vmem %s2, 32
        %v2011 = vld [vmem:[%s2010] sm:$0xff]
        %v2012 = vld [vmem:[%s2010 + $0x8] sm:$0xff]
        %v2013 = vld [vmem:[%s2010 + $0x10] sm:$0xff]
        %v2014 = vld [vmem:[%s2010 + $0x18] sm:$0xff]
        %s2015 = scalar_lea.vmem %s3, 1
        %v2016 = vld [vmem:[%s2015] sm:$0x1]
        %v2018 = vlaneseq
        %v2019 = vshrl.u32 %v2018, 7
        %v2020 = vsub.s32 0, %v2019
        %v2021 = vrot.slane %v2016, %v2020
        %2023 = vmatprep.subr.mxu0 0.0
        %2024 = vmatpush1.msra.mxu0 %v2011
        %2025 = vmatprep.subr.mxu0 0.0
        %2026 = vmatpush1.msra.mxu0 %v2012
        %2027 = vmatprep.subr.mxu0 0.0
        %2028 = vmatpush1.msra.mxu0 %v2013
        %2029 = vmatprep.subr.mxu0 0.0
        %2030 = vmatpush1.msra.mxu0 %v2014
        %2031 = vmatprep.subr.mxu0 0.0
        %2032 = vmatpush1.msra.mxu0 0.0
        %2033 = vmatprep.subr.mxu0 0.0
        %2034 = vmatpush1.msra.mxu0 0.0
        %2035 = vmatprep.subr.mxu0 0.0
        %2036 = vmatpush1.msra.mxu0 0.0
        %2037 = vmatprep.subr.mxu0 0.0
        %2038 = vmatpush1.msra.mxu0 0.0
        %2039 = vmatprep.subr.mxu0 0.0
        %2040 = vmatpush1.msra.mxu0 0.0
        %2041 = vmatprep.subr.mxu0 0.0
        %2042 = vmatpush1.msra.mxu0 0.0
        %2043 = vmatprep.subr.mxu0 0.0
        %2044 = vmatpush1.msra.mxu0 0.0
        %2045 = vmatprep.subr.mxu0 0.0
        %2046 = vmatpush1.msra.mxu0 0.0
        %2047 = vmatprep.subr.mxu0 0.0
        %2048 = vmatpush1.msra.mxu0 0.0
        %2049 = vmatprep.subr.mxu0 0.0
        %2050 = vmatpush1.msra.mxu0 0.0
        %2051 = vmatprep.subr.mxu0 0.0
        %2052 = vmatpush1.msra.mxu0 0.0
        %2053 = vmatprep.subr.mxu0 0.0
        %2054 = vmatpush1.msra.mxu0 0.0
        %2055 = vmatprep.subr.mxu0 0.0
        %2056 = vmatpush1.msra.mxu0 0.0
        %2057 = vmatprep.subr.mxu0 0.0
        %2058 = vmatpush1.msra.mxu0 0.0
        %2059 = vmatprep.subr.mxu0 0.0
        %2060 = vmatpush1.msra.mxu0 0.0
        %2061 = vmatprep.subr.mxu0 0.0
        %2062 = vmatpush1.msra.mxu0 0.0
        %2063 = vmatprep.subr.mxu0 0.0
        %2064 = vmatpush1.msra.mxu0 0.0
        %2065 = vmatprep.subr.mxu0 0.0
        %2066 = vmatpush1.msra.mxu0 0.0
        %2067 = vmatprep.subr.mxu0 0.0
        %2068 = vmatpush1.msra.mxu0 0.0
        %2069 = vmatprep.subr.mxu0 0.0
        %2070 = vmatpush1.msra.mxu0 0.0
        %2071 = vmatprep.subr.mxu0 0.0
        %2072 = vmatpush1.msra.mxu0 0.0
        %2073 = vmatprep.subr.mxu0 0.0
        %2074 = vmatpush1.msra.mxu0 0.0
        %2075 = vmatprep.subr.mxu0 0.0
        %2076 = vmatpush1.msra.mxu0 0.0
        %2077 = vmatprep.subr.mxu0 0.0
        %2078 = vmatpush1.msra.mxu0 0.0
        %2079 = vmatprep.subr.mxu0 0.0
        %2080 = vmatpush1.msra.mxu0 0.0
        %2081 = vmatprep.subr.mxu0 0.0
        %2082 = vmatpush1.msra.mxu0 0.0
        %2083 = vmatprep.subr.mxu0 0.0
        %2084 = vmatpush1.msra.mxu0 0.0
        %2085 = vmatprep.subr.mxu0 0.0
        %2086 = vmatpush1.msra.mxu0 0.0
        %2087 = vmatprep.mubr.f32.mxu0 0.0
        %2088 = vmatmul.mubr.f32.gmra.mrb[0].mxu0 %v1769
        %v2089 = vpop.f32.mrb[0].mxu0
        %v2090 = vadd.f32 %v2021, %v2089
        %v2091 = vpop.f32.mrb[0].mxu0
        %2092 = vdwg.mxu0
        %s2093 = scalar_lea.vmem [#allocation2], 4
        %v2094 = vld [vmem:[%s2093] sm:$0xf]
        %s2095 = scalar_lea.vmem [#allocation3], 4
        %v2096 = vld [vmem:[%s2095] sm:$0xf]
        %v2098 = vsel %vm1843, %v2090, 0
        %v2101 = vsel %vm1847, %v2094, 0
        %2103 = vmatprep.subr.mxu0 0.0
        %2104 = vmatpush1.msra.mxu0 %v2101
        %2105 = vmatprep.subr.mxu0 0.0
        %2106 = vmatpush1.msra.mxu0 0.0
        %2107 = vmatprep.subr.mxu0 0.0
        %2108 = vmatpush1.msra.mxu0 0.0
        %2109 = vmatprep.subr.mxu0 0.0
        %2110 = vmatpush1.msra.mxu0 0.0
        %2111 = vmatprep.subr.mxu0 0.0
        %2112 = vmatpush1.msra.mxu0 0.0
        %2113 = vmatprep.subr.mxu0 0.0
        %2114 = vmatpush1.msra.mxu0 0.0
        %2115 = vmatprep.subr.mxu0 0.0
        %2116 = vmatpush1.msra.mxu0 0.0
        %2117 = vmatprep.subr.mxu0 0.0
        %2118 = vmatpush1.msra.mxu0 0.0
        %2119 = vmatprep.subr.mxu0 0.0
        %2120 = vmatpush1.msra.mxu0 0.0
        %2121 = vmatprep.subr.mxu0 0.0
        %2122 = vmatpush1.msra.mxu0 0.0
        %2123 = vmatprep.subr.mxu0 0.0
        %2124 = vmatpush1.msra.mxu0 0.0
        %2125 = vmatprep.subr.mxu0 0.0
        %2126 = vmatpush1.msra.mxu0 0.0
        %2127 = vmatprep.subr.mxu0 0.0
        %2128 = vmatpush1.msra.mxu0 0.0
        %2129 = vmatprep.subr.mxu0 0.0
        %2130 = vmatpush1.msra.mxu0 0.0
        %2131 = vmatprep.subr.mxu0 0.0
        %2132 = vmatpush1.msra.mxu0 0.0
        %2133 = vmatprep.subr.mxu0 0.0
        %2134 = vmatpush1.msra.mxu0 0.0
        %2135 = vmatprep.subr.mxu0 0.0
        %2136 = vmatpush1.msra.mxu0 0.0
        %2137 = vmatprep.subr.mxu0 0.0
        %2138 = vmatpush1.msra.mxu0 0.0
        %2139 = vmatprep.subr.mxu0 0.0
        %2140 = vmatpush1.msra.mxu0 0.0
        %2141 = vmatprep.subr.mxu0 0.0
        %2142 = vmatpush1.msra.mxu0 0.0
        %2143 = vmatprep.subr.mxu0 0.0
        %2144 = vmatpush1.msra.mxu0 0.0
        %2145 = vmatprep.subr.mxu0 0.0
        %2146 = vmatpush1.msra.mxu0 0.0
        %2147 = vmatprep.subr.mxu0 0.0
        %2148 = vmatpush1.msra.mxu0 0.0
        %2149 = vmatprep.subr.mxu0 0.0
        %2150 = vmatpush1.msra.mxu0 0.0
        %2151 = vmatprep.subr.mxu0 0.0
        %2152 = vmatpush1.msra.mxu0 0.0
        %2153 = vmatprep.subr.mxu0 0.0
        %2154 = vmatpush1.msra.mxu0 0.0
        %2155 = vmatprep.subr.mxu0 0.0
        %2156 = vmatpush1.msra.mxu0 0.0
        %2157 = vmatprep.subr.mxu0 0.0
        %2158 = vmatpush1.msra.mxu0 0.0
        %2159 = vmatprep.subr.mxu0 0.0
        %2160 = vmatpush1.msra.mxu0 0.0
        %2161 = vmatprep.subr.mxu0 0.0
        %2162 = vmatpush1.msra.mxu0 0.0
        %2163 = vmatprep.subr.mxu0 0.0
        %2164 = vmatpush1.msra.mxu0 0.0
        %2165 = vmatprep.subr.mxu0 0.0
        %2166 = vmatpush1.msra.mxu0 0.0
        %2167 = vmatprep.mubr.f32.mxu0 0.0
        %2168 = vmatmul.mubr.f32.gmra.mrb[0].mxu0 %v2098
        %v2169 = vpop.f32.mrb[0].mxu0
        %v2170 = vadd.f32 0.0, %v2169
        %v2171 = vpop.f32.mrb[0].mxu0
        %2172 = vdwg.mxu0
        %v2173 = vsel %vm1921, %v2170, -inf
        %2174 = vmax.xlane.f32.xlu0 %v2173
        %v2175 = vpop.xlane.xlu0 %2174
        %v2176 = vsub.f32 %v2170, %v2175
        %v2177 = vmul.f32 %v2176, 1.442695
        %v2178 = vpow.pop %v2177
        %v2179 = vsel %vm1921, %v2178, 0.0
        %2180 = vadd.xlane.f32.xlu0 %v2179
        %v2181 = vpop.xlane.xlu0 %2180
        %v2182 = vrcp.pop %v2181
        %v2183 = vmul.f32 %v2178, %v2182
        %v2185 = vsel %vm1921, %v2183, 0
        %v2188 = vsel %vm1921, %v2096, 0
        %2190 = vmatprep.subr.mxu0 0.0
        %2191 = vmatpush1.xpose.msra.mxu0 %v2188
        %2192 = vmatprep.subr.mxu0 0.0
        %2193 = vmatpush1.xpose.msra.mxu0 0.0
        %2194 = vmatprep.subr.mxu0 0.0
        %2195 = vmatpush1.xpose.msra.mxu0 0.0
        %2196 = vmatprep.subr.mxu0 0.0
        %2197 = vmatpush1.xpose.msra.mxu0 0.0
        %2198 = vmatprep.subr.mxu0 0.0
        %2199 = vmatpush1.xpose.msra.mxu0 0.0
        %2200 = vmatprep.subr.mxu0 0.0
        %2201 = vmatpush1.xpose.msra.mxu0 0.0
        %2202 = vmatprep.subr.mxu0 0.0
        %2203 = vmatpush1.xpose.msra.mxu0 0.0
        %2204 = vmatprep.subr.mxu0 0.0
        %2205 = vmatpush1.xpose.msra.mxu0 0.0
        %2206 = vmatprep.subr.mxu0 0.0
        %2207 = vmatpush1.xpose.msra.mxu0 0.0
        %2208 = vmatprep.subr.mxu0 0.0
        %2209 = vmatpush1.xpose.msra.mxu0 0.0
        %2210 = vmatprep.subr.mxu0 0.0
        %2211 = vmatpush1.xpose.msra.mxu0 0.0
        %2212 = vmatprep.subr.mxu0 0.0
        %2213 = vmatpush1.xpose.msra.mxu0 0.0
        %2214 = vmatprep.subr.mxu0 0.0
        %2215 = vmatpush1.xpose.msra.mxu0 0.0
        %2216 = vmatprep.subr.mxu0 0.0
        %2217 = vmatpush1.xpose.msra.mxu0 0.0
        %2218 = vmatprep.subr.mxu0 0.0
        %2219 = vmatpush1.xpose.msra.mxu0 0.0
        %2220 = vmatprep.subr.mxu0 0.0
        %2221 = vmatpush1.xpose.msra.mxu0 0.0
        %2222 = vmatprep.subr.mxu0 0.0
        %2223 = vmatpush1.xpose.msra.mxu0 0.0
        %2224 = vmatprep.subr.mxu0 0.0
        %2225 = vmatpush1.xpose.msra.mxu0 0.0
        %2226 = vmatprep.subr.mxu0 0.0
        %2227 = vmatpush1.xpose.msra.mxu0 0.0
        %2228 = vmatprep.subr.mxu0 0.0
        %2229 = vmatpush1.xpose.msra.mxu0 0.0
        %2230 = vmatprep.subr.mxu0 0.0
        %2231 = vmatpush1.xpose.msra.mxu0 0.0
        %2232 = vmatprep.subr.mxu0 0.0
        %2233 = vmatpush1.xpose.msra.mxu0 0.0
        %2234 = vmatprep.subr.mxu0 0.0
        %2235 = vmatpush1.xpose.msra.mxu0 0.0
        %2236 = vmatprep.subr.mxu0 0.0
        %2237 = vmatpush1.xpose.msra.mxu0 0.0
        %2238 = vmatprep.subr.mxu0 0.0
        %2239 = vmatpush1.xpose.msra.mxu0 0.0
        %2240 = vmatprep.subr.mxu0 0.0
        %2241 = vmatpush1.xpose.msra.mxu0 0.0
        %2242 = vmatprep.subr.mxu0 0.0
        %2243 = vmatpush1.xpose.msra.mxu0 0.0
        %2244 = vmatprep.subr.mxu0 0.0
        %2245 = vmatpush1.xpose.msra.mxu0 0.0
        %2246 = vmatprep.subr.mxu0 0.0
        %2247 = vmatpush1.xpose.msra.mxu0 0.0
        %2248 = vmatprep.subr.mxu0 0.0
        %2249 = vmatpush1.xpose.msra.mxu0 0.0
        %2250 = vmatprep.subr.mxu0 0.0
        %2251 = vmatpush1.xpose.msra.mxu0 0.0
        %2252 = vmatprep.subr.mxu0 0.0
        %2253 = vmatpush1.xpose.msra.mxu0 0.0
        %2254 = vmatprep.mubr.f32.mxu0 0.0
        %2255 = vmatmul.mubr.f32.gmra.mrb[0].mxu0 %v2185
        %v2256 = vpop.f32.mrb[0].mxu0
        %v2257 = vadd.f32 0.0, %v2256
        %v2258 = vpop.f32.mrb[0].mxu0
        %2259 = vdwg.mxu0
        %s2260 = scalar_lea.vmem %s8, 4
        %v2261 = vld [vmem:[%s2260] sm:$0xf]
        %v2263 = vsel %vm1843, %v2257, 0
        %v2266 = vsel %vm1847, %v2261, 0
        %2268 = vmatprep.subr.mxu0 0.0
        %2269 = vmatpush1.msra.mxu0 %v2266
        %2270 = vmatprep.subr.mxu0 0.0
        %2271 = vmatpush1.msra.mxu0 0.0
        %2272 = vmatprep.subr.mxu0 0.0
        %2273 = vmatpush1.msra.mxu0 0.0
        %2274 = vmatprep.subr.mxu0 0.0
        %2275 = vmatpush1.msra.mxu0 0.0
        %2276 = vmatprep.subr.mxu0 0.0
        %2277 = vmatpush1.msra.mxu0 0.0
        %2278 = vmatprep.subr.mxu0 0.0
        %2279 = vmatpush1.msra.mxu0 0.0
        %2280 = vmatprep.subr.mxu0 0.0
        %2281 = vmatpush1.msra.mxu0 0.0
        %2282 = vmatprep.subr.mxu0 0.0
        %2283 = vmatpush1.msra.mxu0 0.0
        %2284 = vmatprep.subr.mxu0 0.0
        %2285 = vmatpush1.msra.mxu0 0.0
        %2286 = vmatprep.subr.mxu0 0.0
        %2287 = vmatpush1.msra.mxu0 0.0
        %2288 = vmatprep.subr.mxu0 0.0
        %2289 = vmatpush1.msra.mxu0 0.0
        %2290 = vmatprep.subr.mxu0 0.0
        %2291 = vmatpush1.msra.mxu0 0.0
        %2292 = vmatprep.subr.mxu0 0.0
        %2293 = vmatpush1.msra.mxu0 0.0
        %2294 = vmatprep.subr.mxu0 0.0
        %2295 = vmatpush1.msra.mxu0 0.0
        %2296 = vmatprep.subr.mxu0 0.0
        %2297 = vmatpush1.msra.mxu0 0.0
        %2298 = vmatprep.subr.mxu0 0.0
        %2299 = vmatpush1.msra.mxu0 0.0
        %2300 = vmatprep.subr.mxu0 0.0
        %2301 = vmatpush1.msra.mxu0 0.0
        %2302 = vmatprep.subr.mxu0 0.0
        %2303 = vmatpush1.msra.mxu0 0.0
        %2304 = vmatprep.subr.mxu0 0.0
        %2305 = vmatpush1.msra.mxu0 0.0
        %2306 = vmatprep.subr.mxu0 0.0
        %2307 = vmatpush1.msra.mxu0 0.0
        %2308 = vmatprep.subr.mxu0 0.0
        %2309 = vmatpush1.msra.mxu0 0.0
        %2310 = vmatprep.subr.mxu0 0.0
        %2311 = vmatpush1.msra.mxu0 0.0
        %2312 = vmatprep.subr.mxu0 0.0
        %2313 = vmatpush1.msra.mxu0 0.0
        %2314 = vmatprep.subr.mxu0 0.0
        %2315 = vmatpush1.msra.mxu0 0.0
        %2316 = vmatprep.subr.mxu0 0.0
        %2317 = vmatpush1.msra.mxu0 0.0
        %2318 = vmatprep.subr.mxu0 0.0
        %2319 = vmatpush1.msra.mxu0 0.0
        %2320 = vmatprep.subr.mxu0 0.0
        %2321 = vmatpush1.msra.mxu0 0.0
        %2322 = vmatprep.subr.mxu0 0.0
        %2323 = vmatpush1.msra.mxu0 0.0
        %2324 = vmatprep.subr.mxu0 0.0
        %2325 = vmatpush1.msra.mxu0 0.0
        %2326 = vmatprep.subr.mxu0 0.0
        %2327 = vmatpush1.msra.mxu0 0.0
        %2328 = vmatprep.subr.mxu0 0.0
        %2329 = vmatpush1.msra.mxu0 0.0
        %2330 = vmatprep.subr.mxu0 0.0
        %2331 = vmatpush1.msra.mxu0 0.0
        %2332 = vmatprep.mubr.f32.mxu0 0.0
        %2333 = vmatmul.mubr.f32.gmra.mrb[0].mxu0 %v2263
        %v2334 = vpop.f32.mrb[0].mxu0
        %v2335 = vadd.f32 0.0, %v2334
        %v2336 = vpop.f32.mrb[0].mxu0
        %2337 = vdwg.mxu0
        %v2339 = vsel %vm1843, %v2006, 0
        %v2342 = vsel %vm1847, %v2009, 0
        %2344 = vmatprep.subr.mxu0 0.0
        %2345 = vmatpush1.msra.mxu0 %v2342
        %2346 = vmatprep.subr.mxu0 0.0
        %2347 = vmatpush1.msra.mxu0 0.0
        %2348 = vmatprep.subr.mxu0 0.0
        %2349 = vmatpush1.msra.mxu0 0.0
        %2350 = vmatprep.subr.mxu0 0.0
        %2351 = vmatpush1.msra.mxu0 0.0
        %2352 = vmatprep.subr.mxu0 0.0
        %2353 = vmatpush1.msra.mxu0 0.0
        %2354 = vmatprep.subr.mxu0 0.0
        %2355 = vmatpush1.msra.mxu0 0.0
        %2356 = vmatprep.subr.mxu0 0.0
        %2357 = vmatpush1.msra.mxu0 0.0
        %2358 = vmatprep.subr.mxu0 0.0
        %2359 = vmatpush1.msra.mxu0 0.0
        %2360 = vmatprep.subr.mxu0 0.0
        %2361 = vmatpush1.msra.mxu0 0.0
        %2362 = vmatprep.subr.mxu0 0.0
        %2363 = vmatpush1.msra.mxu0 0.0
        %2364 = vmatprep.subr.mxu0 0.0
        %2365 = vmatpush1.msra.mxu0 0.0
        %2366 = vmatprep.subr.mxu0 0.0
        %2367 = vmatpush1.msra.mxu0 0.0
        %2368 = vmatprep.subr.mxu0 0.0
        %2369 = vmatpush1.msra.mxu0 0.0
        %2370 = vmatprep.subr.mxu0 0.0
        %2371 = vmatpush1.msra.mxu0 0.0
        %2372 = vmatprep.subr.mxu0 0.0
        %2373 = vmatpush1.msra.mxu0 0.0
        %2374 = vmatprep.subr.mxu0 0.0
        %2375 = vmatpush1.msra.mxu0 0.0
        %2376 = vmatprep.subr.mxu0 0.0
        %2377 = vmatpush1.msra.mxu0 0.0
        %2378 = vmatprep.subr.mxu0 0.0
        %2379 = vmatpush1.msra.mxu0 0.0
        %2380 = vmatprep.subr.mxu0 0.0
        %2381 = vmatpush1.msra.mxu0 0.0
        %2382 = vmatprep.subr.mxu0 0.0
        %2383 = vmatpush1.msra.mxu0 0.0
        %2384 = vmatprep.subr.mxu0 0.0
        %2385 = vmatpush1.msra.mxu0 0.0
        %2386 = vmatprep.subr.mxu0 0.0
        %2387 = vmatpush1.msra.mxu0 0.0
        %2388 = vmatprep.subr.mxu0 0.0
        %2389 = vmatpush1.msra.mxu0 0.0
        %2390 = vmatprep.subr.mxu0 0.0
        %2391 = vmatpush1.msra.mxu0 0.0
        %2392 = vmatprep.subr.mxu0 0.0
        %2393 = vmatpush1.msra.mxu0 0.0
        %2394 = vmatprep.subr.mxu0 0.0
        %2395 = vmatpush1.msra.mxu0 0.0
        %2396 = vmatprep.subr.mxu0 0.0
        %2397 = vmatpush1.msra.mxu0 0.0
        %2398 = vmatprep.subr.mxu0 0.0
        %2399 = vmatpush1.msra.mxu0 0.0
        %2400 = vmatprep.subr.mxu0 0.0
        %2401 = vmatpush1.msra.mxu0 0.0
        %2402 = vmatprep.subr.mxu0 0.0
        %2403 = vmatpush1.msra.mxu0 0.0
        %2404 = vmatprep.subr.mxu0 0.0
        %2405 = vmatpush1.msra.mxu0 0.0
        %2406 = vmatprep.subr.mxu0 0.0
        %2407 = vmatpush1.msra.mxu0 0.0
        %2408 = vmatprep.mubr.f32.mxu0 0.0
        %2409 = vmatmul.mubr.f32.gmra.mrb[0].mxu0 %v2339
        %v2410 = vpop.f32.mrb[0].mxu0
        %v2411 = vadd.f32 %v2335, %v2410
        %v2412 = vpop.f32.mrb[0].mxu0
        %2413 = vdwg.mxu0
        %s2414 = scalar_lea.vmem %s2, 64
        %v2415 = vld [vmem:[%s2414] sm:$0xff]
        %v2416 = vld [vmem:[%s2414 + $0x8] sm:$0xff]
        %v2417 = vld [vmem:[%s2414 + $0x10] sm:$0xff]
        %v2418 = vld [vmem:[%s2414 + $0x18] sm:$0xff]
        %s2419 = scalar_lea.vmem %s3, 2
        %v2420 = vld [vmem:[%s2419] sm:$0x1]
        %v2422 = vlaneseq
        %v2423 = vshrl.u32 %v2422, 7
        %v2424 = vsub.s32 0, %v2423
        %v2425 = vrot.slane %v2420, %v2424
        %2427 = vmatprep.subr.mxu0 0.0
        %2428 = vmatpush1.msra.mxu0 %v2415
        %2429 = vmatprep.subr.mxu0 0.0
        %2430 = vmatpush1.msra.mxu0 %v2416
        %2431 = vmatprep.subr.mxu0 0.0
        %2432 = vmatpush1.msra.mxu0 %v2417
        %2433 = vmatprep.subr.mxu0 0.0
        %2434 = vmatpush1.msra.mxu0 %v2418
        %2435 = vmatprep.subr.mxu0 0.0
        %2436 = vmatpush1.msra.mxu0 0.0
        %2437 = vmatprep.subr.mxu0 0.0
        %2438 = vmatpush1.msra.mxu0 0.0
        %2439 = vmatprep.subr.mxu0 0.0
        %2440 = vmatpush1.msra.mxu0 0.0
        %2441 = vmatprep.subr.mxu0 0.0
        %2442 = vmatpush1.msra.mxu0 0.0
        %2443 = vmatprep.subr.mxu0 0.0
        %2444 = vmatpush1.msra.mxu0 0.0
        %2445 = vmatprep.subr.mxu0 0.0
        %2446 = vmatpush1.msra.mxu0 0.0
        %2447 = vmatprep.subr.mxu0 0.0
        %2448 = vmatpush1.msra.mxu0 0.0
        %2449 = vmatprep.subr.mxu0 0.0
        %2450 = vmatpush1.msra.mxu0 0.0
        %2451 = vmatprep.subr.mxu0 0.0
        %2452 = vmatpush1.msra.mxu0 0.0
        %2453 = vmatprep.subr.mxu0 0.0
        %2454 = vmatpush1.msra.mxu0 0.0
        %2455 = vmatprep.subr.mxu0 0.0
        %2456 = vmatpush1.msra.mxu0 0.0
        %2457 = vmatprep.subr.mxu0 0.0
        %2458 = vmatpush1.msra.mxu0 0.0
        %2459 = vmatprep.subr.mxu0 0.0
        %2460 = vmatpush1.msra.mxu0 0.0
        %2461 = vmatprep.subr.mxu0 0.0
        %2462 = vmatpush1.msra.mxu0 0.0
        %2463 = vmatprep.subr.mxu0 0.0
        %2464 = vmatpush1.msra.mxu0 0.0
        %2465 = vmatprep.subr.mxu0 0.0
        %2466 = vmatpush1.msra.mxu0 0.0
        %2467 = vmatprep.subr.mxu0 0.0
        %2468 = vmatpush1.msra.mxu0 0.0
        %2469 = vmatprep.subr.mxu0 0.0
        %2470 = vmatpush1.msra.mxu0 0.0
        %2471 = vmatprep.subr.mxu0 0.0
        %2472 = vmatpush1.msra.mxu0 0.0
        %2473 = vmatprep.subr.mxu0 0.0
        %2474 = vmatpush1.msra.mxu0 0.0
        %2475 = vmatprep.subr.mxu0 0.0
        %2476 = vmatpush1.msra.mxu0 0.0
        %2477 = vmatprep.subr.mxu0 0.0
        %2478 = vmatpush1.msra.mxu0 0.0
        %2479 = vmatprep.subr.mxu0 0.0
        %2480 = vmatpush1.msra.mxu0 0.0
        %2481 = vmatprep.subr.mxu0 0.0
        %2482 = vmatpush1.msra.mxu0 0.0
        %2483 = vmatprep.subr.mxu0 0.0
        %2484 = vmatpush1.msra.mxu0 0.0
        %2485 = vmatprep.subr.mxu0 0.0
        %2486 = vmatpush1.msra.mxu0 0.0
        %2487 = vmatprep.subr.mxu0 0.0
        %2488 = vmatpush1.msra.mxu0 0.0
        %2489 = vmatprep.subr.mxu0 0.0
        %2490 = vmatpush1.msra.mxu0 0.0
        %2491 = vmatprep.mubr.f32.mxu0 0.0
        %2492 = vmatmul.mubr.f32.gmra.mrb[0].mxu0 %v1769
        %v2493 = vpop.f32.mrb[0].mxu0
        %v2494 = vadd.f32 %v2425, %v2493
        %v2495 = vpop.f32.mrb[0].mxu0
        %2496 = vdwg.mxu0
        %s2497 = scalar_lea.vmem [#allocation2], 8
        %v2498 = vld [vmem:[%s2497] sm:$0xf]
        %s2499 = scalar_lea.vmem [#allocation3], 8
        %v2500 = vld [vmem:[%s2499] sm:$0xf]
        %v2502 = vsel %vm1843, %v2494, 0
        %v2505 = vsel %vm1847, %v2498, 0
        %2507 = vmatprep.subr.mxu0 0.0
        %2508 = vmatpush1.msra.mxu0 %v2505
        %2509 = vmatprep.subr.mxu0 0.0
        %2510 = vmatpush1.msra.mxu0 0.0
        %2511 = vmatprep.subr.mxu0 0.0
        %2512 = vmatpush1.msra.mxu0 0.0
        %2513 = vmatprep.subr.mxu0 0.0
        %2514 = vmatpush1.msra.mxu0 0.0
        %2515 = vmatprep.subr.mxu0 0.0
        %2516 = vmatpush1.msra.mxu0 0.0
        %2517 = vmatprep.subr.mxu0 0.0
        %2518 = vmatpush1.msra.mxu0 0.0
        %2519 = vmatprep.subr.mxu0 0.0
        %2520 = vmatpush1.msra.mxu0 0.0
        %2521 = vmatprep.subr.mxu0 0.0
        %2522 = vmatpush1.msra.mxu0 0.0
        %2523 = vmatprep.subr.mxu0 0.0
        %2524 = vmatpush1.msra.mxu0 0.0
        %2525 = vmatprep.subr.mxu0 0.0
        %2526 = vmatpush1.msra.mxu0 0.0
        %2527 = vmatprep.subr.mxu0 0.0
        %2528 = vmatpush1.msra.mxu0 0.0
        %2529 = vmatprep.subr.mxu0 0.0
        %2530 = vmatpush1.msra.mxu0 0.0
        %2531 = vmatprep.subr.mxu0 0.0
        %2532 = vmatpush1.msra.mxu0 0.0
        %2533 = vmatprep.subr.mxu0 0.0
        %2534 = vmatpush1.msra.mxu0 0.0
        %2535 = vmatprep.subr.mxu0 0.0
        %2536 = vmatpush1.msra.mxu0 0.0
        %2537 = vmatprep.subr.mxu0 0.0
        %2538 = vmatpush1.msra.mxu0 0.0
        %2539 = vmatprep.subr.mxu0 0.0
        %2540 = vmatpush1.msra.mxu0 0.0
        %2541 = vmatprep.subr.mxu0 0.0
        %2542 = vmatpush1.msra.mxu0 0.0
        %2543 = vmatprep.subr.mxu0 0.0
        %2544 = vmatpush1.msra.mxu0 0.0
        %2545 = vmatprep.subr.mxu0 0.0
        %2546 = vmatpush1.msra.mxu0 0.0
        %2547 = vmatprep.subr.mxu0 0.0
        %2548 = vmatpush1.msra.mxu0 0.0
        %2549 = vmatprep.subr.mxu0 0.0
        %2550 = vmatpush1.msra.mxu0 0.0
        %2551 = vmatprep.subr.mxu0 0.0
        %2552 = vmatpush1.msra.mxu0 0.0
        %2553 = vmatprep.subr.mxu0 0.0
        %2554 = vmatpush1.msra.mxu0 0.0
        %2555 = vmatprep.subr.mxu0 0.0
        %2556 = vmatpush1.msra.mxu0 0.0
        %2557 = vmatprep.subr.mxu0 0.0
        %2558 = vmatpush1.msra.mxu0 0.0
        %2559 = vmatprep.subr.mxu0 0.0
        %2560 = vmatpush1.msra.mxu0 0.0
        %2561 = vmatprep.subr.mxu0 0.0
        %2562 = vmatpush1.msra.mxu0 0.0
        %2563 = vmatprep.subr.mxu0 0.0
        %2564 = vmatpush1.msra.mxu0 0.0
        %2565 = vmatprep.subr.mxu0 0.0
        %2566 = vmatpush1.msra.mxu0 0.0
        %2567 = vmatprep.subr.mxu0 0.0
        %2568 = vmatpush1.msra.mxu0 0.0
        %2569 = vmatprep.subr.mxu0 0.0
        %2570 = vmatpush1.msra.mxu0 0.0
        %2571 = vmatprep.mubr.f32.mxu0 0.0
        %2572 = vmatmul.mubr.f32.gmra.mrb[0].mxu0 %v2502
        %v2573 = vpop.f32.mrb[0].mxu0
        %v2574 = vadd.f32 0.0, %v2573
        %v2575 = vpop.f32.mrb[0].mxu0
        %2576 = vdwg.mxu0
        %v2577 = vsel %vm1921, %v2574, -inf
        %2578 = vmax.xlane.f32.xlu0 %v2577
        %v2579 = vpop.xlane.xlu0 %2578
        %v2580 = vsub.f32 %v2574, %v2579
        %v2581 = vmul.f32 %v2580, 1.442695
        %v2582 = vpow.pop %v2581
        %v2583 = vsel %vm1921, %v2582, 0.0
        %2584 = vadd.xlane.f32.xlu0 %v2583
        %v2585 = vpop.xlane.xlu0 %2584
        %v2586 = vrcp.pop %v2585
        %v2587 = vmul.f32 %v2582, %v2586
        %v2589 = vsel %vm1921, %v2587, 0
        %v2592 = vsel %vm1921, %v2500, 0
        %2594 = vmatprep.subr.mxu0 0.0
        %2595 = vmatpush1.xpose.msra.mxu0 %v2592
        %2596 = vmatprep.subr.mxu0 0.0
        %2597 = vmatpush1.xpose.msra.mxu0 0.0
        %2598 = vmatprep.subr.mxu0 0.0
        %2599 = vmatpush1.xpose.msra.mxu0 0.0
        %2600 = vmatprep.subr.mxu0 0.0
        %2601 = vmatpush1.xpose.msra.mxu0 0.0
        %2602 = vmatprep.subr.mxu0 0.0
        %2603 = vmatpush1.xpose.msra.mxu0 0.0
        %2604 = vmatprep.subr.mxu0 0.0
        %2605 = vmatpush1.xpose.msra.mxu0 0.0
        %2606 = vmatprep.subr.mxu0 0.0
        %2607 = vmatpush1.xpose.msra.mxu0 0.0
        %2608 = vmatprep.subr.mxu0 0.0
        %2609 = vmatpush1.xpose.msra.mxu0 0.0
        %2610 = vmatprep.subr.mxu0 0.0
        %2611 = vmatpush1.xpose.msra.mxu0 0.0
        %2612 = vmatprep.subr.mxu0 0.0
        %2613 = vmatpush1.xpose.msra.mxu0 0.0
        %2614 = vmatprep.subr.mxu0 0.0
        %2615 = vmatpush1.xpose.msra.mxu0 0.0
        %2616 = vmatprep.subr.mxu0 0.0
        %2617 = vmatpush1.xpose.msra.mxu0 0.0
        %2618 = vmatprep.subr.mxu0 0.0
        %2619 = vmatpush1.xpose.msra.mxu0 0.0
        %2620 = vmatprep.subr.mxu0 0.0
        %2621 = vmatpush1.xpose.msra.mxu0 0.0
        %2622 = vmatprep.subr.mxu0 0.0
        %2623 = vmatpush1.xpose.msra.mxu0 0.0
        %2624 = vmatprep.subr.mxu0 0.0
        %2625 = vmatpush1.xpose.msra.mxu0 0.0
        %2626 = vmatprep.subr.mxu0 0.0
        %2627 = vmatpush1.xpose.msra.mxu0 0.0
        %2628 = vmatprep.subr.mxu0 0.0
        %2629 = vmatpush1.xpose.msra.mxu0 0.0
        %2630 = vmatprep.subr.mxu0 0.0
        %2631 = vmatpush1.xpose.msra.mxu0 0.0
        %2632 = vmatprep.subr.mxu0 0.0
        %2633 = vmatpush1.xpose.msra.mxu0 0.0
        %2634 = vmatprep.subr.mxu0 0.0
        %2635 = vmatpush1.xpose.msra.mxu0 0.0
        %2636 = vmatprep.subr.mxu0 0.0
        %2637 = vmatpush1.xpose.msra.mxu0 0.0
        %2638 = vmatprep.subr.mxu0 0.0
        %2639 = vmatpush1.xpose.msra.mxu0 0.0
        %2640 = vmatprep.subr.mxu0 0.0
        %2641 = vmatpush1.xpose.msra.mxu0 0.0
        %2642 = vmatprep.subr.mxu0 0.0
        %2643 = vmatpush1.xpose.msra.mxu0 0.0
        %2644 = vmatprep.subr.mxu0 0.0
        %2645 = vmatpush1.xpose.msra.mxu0 0.0
        %2646 = vmatprep.subr.mxu0 0.0
        %2647 = vmatpush1.xpose.msra.mxu0 0.0
        %2648 = vmatprep.subr.mxu0 0.0
        %2649 = vmatpush1.xpose.msra.mxu0 0.0
        %2650 = vmatprep.subr.mxu0 0.0
        %2651 = vmatpush1.xpose.msra.mxu0 0.0
        %2652 = vmatprep.subr.mxu0 0.0
        %2653 = vmatpush1.xpose.msra.mxu0 0.0
        %2654 = vmatprep.subr.mxu0 0.0
        %2655 = vmatpush1.xpose.msra.mxu0 0.0
        %2656 = vmatprep.subr.mxu0 0.0
        %2657 = vmatpush1.xpose.msra.mxu0 0.0
        %2658 = vmatprep.mubr.f32.mxu0 0.0
        %2659 = vmatmul.mubr.f32.gmra.mrb[0].mxu0 %v2589
        %v2660 = vpop.f32.mrb[0].mxu0
        %v2661 = vadd.f32 0.0, %v2660
        %v2662 = vpop.f32.mrb[0].mxu0
        %2663 = vdwg.mxu0
        %s2664 = scalar_lea.vmem %s8, 8
        %v2665 = vld [vmem:[%s2664] sm:$0xf]
        %v2667 = vsel %vm1843, %v2661, 0
        %v2670 = vsel %vm1847, %v2665, 0
        %2672 = vmatprep.subr.mxu0 0.0
        %2673 = vmatpush1.msra.mxu0 %v2670
        %2674 = vmatprep.subr.mxu0 0.0
        %2675 = vmatpush1.msra.mxu0 0.0
        %2676 = vmatprep.subr.mxu0 0.0
        %2677 = vmatpush1.msra.mxu0 0.0
        %2678 = vmatprep.subr.mxu0 0.0
        %2679 = vmatpush1.msra.mxu0 0.0
        %2680 = vmatprep.subr.mxu0 0.0
        %2681 = vmatpush1.msra.mxu0 0.0
        %2682 = vmatprep.subr.mxu0 0.0
        %2683 = vmatpush1.msra.mxu0 0.0
        %2684 = vmatprep.subr.mxu0 0.0
        %2685 = vmatpush1.msra.mxu0 0.0
        %2686 = vmatprep.subr.mxu0 0.0
        %2687 = vmatpush1.msra.mxu0 0.0
        %2688 = vmatprep.subr.mxu0 0.0
        %2689 = vmatpush1.msra.mxu0 0.0
        %2690 = vmatprep.subr.mxu0 0.0
        %2691 = vmatpush1.msra.mxu0 0.0
        %2692 = vmatprep.subr.mxu0 0.0
        %2693 = vmatpush1.msra.mxu0 0.0
        %2694 = vmatprep.subr.mxu0 0.0
        %2695 = vmatpush1.msra.mxu0 0.0
        %2696 = vmatprep.subr.mxu0 0.0
        %2697 = vmatpush1.msra.mxu0 0.0
        %2698 = vmatprep.subr.mxu0 0.0
        %2699 = vmatpush1.msra.mxu0 0.0
        %2700 = vmatprep.subr.mxu0 0.0
        %2701 = vmatpush1.msra.mxu0 0.0
        %2702 = vmatprep.subr.mxu0 0.0
        %2703 = vmatpush1.msra.mxu0 0.0
        %2704 = vmatprep.subr.mxu0 0.0
        %2705 = vmatpush1.msra.mxu0 0.0
        %2706 = vmatprep.subr.mxu0 0.0
        %2707 = vmatpush1.msra.mxu0 0.0
        %2708 = vmatprep.subr.mxu0 0.0
        %2709 = vmatpush1.msra.mxu0 0.0
        %2710 = vmatprep.subr.mxu0 0.0
        %2711 = vmatpush1.msra.mxu0 0.0
        %2712 = vmatprep.subr.mxu0 0.0
        %2713 = vmatpush1.msra.mxu0 0.0
        %2714 = vmatprep.subr.mxu0 0.0
        %2715 = vmatpush1.msra.mxu0 0.0
        %2716 = vmatprep.subr.mxu0 0.0
        %2717 = vmatpush1.msra.mxu0 0.0
        %2718 = vmatprep.subr.mxu0 0.0
        %2719 = vmatpush1.msra.mxu0 0.0
        %2720 = vmatprep.subr.mxu0 0.0
        %2721 = vmatpush1.msra.mxu0 0.0
        %2722 = vmatprep.subr.mxu0 0.0
        %2723 = vmatpush1.msra.mxu0 0.0
        %2724 = vmatprep.subr.mxu0 0.0
        %2725 = vmatpush1.msra.mxu0 0.0
        %2726 = vmatprep.subr.mxu0 0.0
        %2727 = vmatpush1.msra.mxu0 0.0
        %2728 = vmatprep.subr.mxu0 0.0
        %2729 = vmatpush1.msra.mxu0 0.0
        %2730 = vmatprep.subr.mxu0 0.0
        %2731 = vmatpush1.msra.mxu0 0.0
        %2732 = vmatprep.subr.mxu0 0.0
        %2733 = vmatpush1.msra.mxu0 0.0
        %2734 = vmatprep.subr.mxu0 0.0
        %2735 = vmatpush1.msra.mxu0 0.0
        %2736 = vmatprep.mubr.f32.mxu0 0.0
        %2737 = vmatmul.mubr.f32.gmra.mrb[0].mxu0 %v2667
        %v2738 = vpop.f32.mrb[0].mxu0
        %v2739 = vadd.f32 0.0, %v2738
        %v2740 = vpop.f32.mrb[0].mxu0
        %2741 = vdwg.mxu0
        %v2742 = vadd.f32 %v2411, %v2739
        %s2743 = scalar_lea.vmem %s2, 96
        %v2744 = vld [vmem:[%s2743] sm:$0xff]
        %v2745 = vld [vmem:[%s2743 + $0x8] sm:$0xff]
        %v2746 = vld [vmem:[%s2743 + $0x10] sm:$0xff]
        %v2747 = vld [vmem:[%s2743 + $0x18] sm:$0xff]
        %s2748 = scalar_lea.vmem %s3, 3
        %v2749 = vld [vmem:[%s2748] sm:$0x1]
        %v2751 = vlaneseq
        %v2752 = vshrl.u32 %v2751, 7
        %v2753 = vsub.s32 0, %v2752
        %v2754 = vrot.slane %v2749, %v2753
        %2756 = vmatprep.subr.mxu0 0.0
        %2757 = vmatpush1.msra.mxu0 %v2744
        %2758 = vmatprep.subr.mxu0 0.0
        %2759 = vmatpush1.msra.mxu0 %v2745
        %2760 = vmatprep.subr.mxu0 0.0
        %2761 = vmatpush1.msra.mxu0 %v2746
        %2762 = vmatprep.subr.mxu0 0.0
        %2763 = vmatpush1.msra.mxu0 %v2747
        %2764 = vmatprep.subr.mxu0 0.0
        %2765 = vmatpush1.msra.mxu0 0.0
        %2766 = vmatprep.subr.mxu0 0.0
        %2767 = vmatpush1.msra.mxu0 0.0
        %2768 = vmatprep.subr.mxu0 0.0
        %2769 = vmatpush1.msra.mxu0 0.0
        %2770 = vmatprep.subr.mxu0 0.0
        %2771 = vmatpush1.msra.mxu0 0.0
        %2772 = vmatprep.subr.mxu0 0.0
        %2773 = vmatpush1.msra.mxu0 0.0
        %2774 = vmatprep.subr.mxu0 0.0
        %2775 = vmatpush1.msra.mxu0 0.0
        %2776 = vmatprep.subr.mxu0 0.0
        %2777 = vmatpush1.msra.mxu0 0.0
        %2778 = vmatprep.subr.mxu0 0.0
        %2779 = vmatpush1.msra.mxu0 0.0
        %2780 = vmatprep.subr.mxu0 0.0
        %2781 = vmatpush1.msra.mxu0 0.0
        %2782 = vmatprep.subr.mxu0 0.0
        %2783 = vmatpush1.msra.mxu0 0.0
        %2784 = vmatprep.subr.mxu0 0.0
        %2785 = vmatpush1.msra.mxu0 0.0
        %2786 = vmatprep.subr.mxu0 0.0
        %2787 = vmatpush1.msra.mxu0 0.0
        %2788 = vmatprep.subr.mxu0 0.0
        %2789 = vmatpush1.msra.mxu0 0.0
        %2790 = vmatprep.subr.mxu0 0.0
        %2791 = vmatpush1.msra.mxu0 0.0
        %2792 = vmatprep.subr.mxu0 0.0
        %2793 = vmatpush1.msra.mxu0 0.0
        %2794 = vmatprep.subr.mxu0 0.0
        %2795 = vmatpush1.msra.mxu0 0.0
        %2796 = vmatprep.subr.mxu0 0.0
        %2797 = vmatpush1.msra.mxu0 0.0
        %2798 = vmatprep.subr.mxu0 0.0
        %2799 = vmatpush1.msra.mxu0 0.0
        %2800 = vmatprep.subr.mxu0 0.0
        %2801 = vmatpush1.msra.mxu0 0.0
        %2802 = vmatprep.subr.mxu0 0.0
        %2803 = vmatpush1.msra.mxu0 0.0
        %2804 = vmatprep.subr.mxu0 0.0
        %2805 = vmatpush1.msra.mxu0 0.0
        %2806 = vmatprep.subr.mxu0 0.0
        %2807 = vmatpush1.msra.mxu0 0.0
        %2808 = vmatprep.subr.mxu0 0.0
        %2809 = vmatpush1.msra.mxu0 0.0
        %2810 = vmatprep.subr.mxu0 0.0
        %2811 = vmatpush1.msra.mxu0 0.0
        %2812 = vmatprep.subr.mxu0 0.0
        %2813 = vmatpush1.msra.mxu0 0.0
        %2814 = vmatprep.subr.mxu0 0.0
        %2815 = vmatpush1.msra.mxu0 0.0
        %2816 = vmatprep.subr.mxu0 0.0
        %2817 = vmatpush1.msra.mxu0 0.0
        %2818 = vmatprep.subr.mxu0 0.0
        %2819 = vmatpush1.msra.mxu0 0.0
        %2820 = vmatprep.mubr.f32.mxu0 0.0
        %2821 = vmatmul.mubr.f32.gmra.mrb[0].mxu0 %v1769
        %v2822 = vpop.f32.mrb[0].mxu0
        %v2823 = vadd.f32 %v2754, %v2822
        %v2824 = vpop.f32.mrb[0].mxu0
        %2825 = vdwg.mxu0
        %s2826 = scalar_lea.vmem [#allocation2], 12
        %v2827 = vld [vmem:[%s2826] sm:$0xf]
        %s2828 = scalar_lea.vmem [#allocation3], 12
        %v2829 = vld [vmem:[%s2828] sm:$0xf]
        %v2831 = vsel %vm1843, %v2823, 0
        %v2834 = vsel %vm1847, %v2827, 0
        %2836 = vmatprep.subr.mxu0 0.0
        %2837 = vmatpush1.msra.mxu0 %v2834
        %2838 = vmatprep.subr.mxu0 0.0
        %2839 = vmatpush1.msra.mxu0 0.0
        %2840 = vmatprep.subr.mxu0 0.0
        %2841 = vmatpush1.msra.mxu0 0.0
        %2842 = vmatprep.subr.mxu0 0.0
        %2843 = vmatpush1.msra.mxu0 0.0
        %2844 = vmatprep.subr.mxu0 0.0
        %2845 = vmatpush1.msra.mxu0 0.0
        %2846 = vmatprep.subr.mxu0 0.0
        %2847 = vmatpush1.msra.mxu0 0.0
        %2848 = vmatprep.subr.mxu0 0.0
        %2849 = vmatpush1.msra.mxu0 0.0
        %2850 = vmatprep.subr.mxu0 0.0
        %2851 = vmatpush1.msra.mxu0 0.0
        %2852 = vmatprep.subr.mxu0 0.0
        %2853 = vmatpush1.msra.mxu0 0.0
        %2854 = vmatprep.subr.mxu0 0.0
        %2855 = vmatpush1.msra.mxu0 0.0
        %2856 = vmatprep.subr.mxu0 0.0
        %2857 = vmatpush1.msra.mxu0 0.0
        %2858 = vmatprep.subr.mxu0 0.0
        %2859 = vmatpush1.msra.mxu0 0.0
        %2860 = vmatprep.subr.mxu0 0.0
        %2861 = vmatpush1.msra.mxu0 0.0
        %2862 = vmatprep.subr.mxu0 0.0
        %2863 = vmatpush1.msra.mxu0 0.0
        %2864 = vmatprep.subr.mxu0 0.0
        %2865 = vmatpush1.msra.mxu0 0.0
        %2866 = vmatprep.subr.mxu0 0.0
        %2867 = vmatpush1.msra.mxu0 0.0
        %2868 = vmatprep.subr.mxu0 0.0
        %2869 = vmatpush1.msra.mxu0 0.0
        %2870 = vmatprep.subr.mxu0 0.0
        %2871 = vmatpush1.msra.mxu0 0.0
        %2872 = vmatprep.subr.mxu0 0.0
        %2873 = vmatpush1.msra.mxu0 0.0
        %2874 = vmatprep.subr.mxu0 0.0
        %2875 = vmatpush1.msra.mxu0 0.0
        %2876 = vmatprep.subr.mxu0 0.0
        %2877 = vmatpush1.msra.mxu0 0.0
        %2878 = vmatprep.subr.mxu0 0.0
        %2879 = vmatpush1.msra.mxu0 0.0
        %2880 = vmatprep.subr.mxu0 0.0
        %2881 = vmatpush1.msra.mxu0 0.0
        %2882 = vmatprep.subr.mxu0 0.0
        %2883 = vmatpush1.msra.mxu0 0.0
        %2884 = vmatprep.subr.mxu0 0.0
        %2885 = vmatpush1.msra.mxu0 0.0
        %2886 = vmatprep.subr.mxu0 0.0
        %2887 = vmatpush1.msra.mxu0 0.0
        %2888 = vmatprep.subr.mxu0 0.0
        %2889 = vmatpush1.msra.mxu0 0.0
        %2890 = vmatprep.subr.mxu0 0.0
        %2891 = vmatpush1.msra.mxu0 0.0
        %2892 = vmatprep.subr.mxu0 0.0
        %2893 = vmatpush1.msra.mxu0 0.0
        %2894 = vmatprep.subr.mxu0 0.0
        %2895 = vmatpush1.msra.mxu0 0.0
        %2896 = vmatprep.subr.mxu0 0.0
        %2897 = vmatpush1.msra.mxu0 0.0
        %2898 = vmatprep.subr.mxu0 0.0
        %2899 = vmatpush1.msra.mxu0 0.0
        %2900 = vmatprep.mubr.f32.mxu0 0.0
        %2901 = vmatmul.mubr.f32.gmra.mrb[0].mxu0 %v2831
        %v2902 = vpop.f32.mrb[0].mxu0
        %v2903 = vadd.f32 0.0, %v2902
        %v2904 = vpop.f32.mrb[0].mxu0
        %2905 = vdwg.mxu0
        %v2906 = vsel %vm1921, %v2903, -inf
        %2907 = vmax.xlane.f32.xlu0 %v2906
        %v2908 = vpop.xlane.xlu0 %2907
        %v2909 = vsub.f32 %v2903, %v2908
        %v2910 = vmul.f32 %v2909, 1.442695
        %v2911 = vpow.pop %v2910
        %v2912 = vsel %vm1921, %v2911, 0.0
        %2913 = vadd.xlane.f32.xlu0 %v2912
        %v2914 = vpop.xlane.xlu0 %2913
        %v2915 = vrcp.pop %v2914
        %v2916 = vmul.f32 %v2911, %v2915
        %v2918 = vsel %vm1921, %v2916, 0
        %v2921 = vsel %vm1921, %v2829, 0
        %2923 = vmatprep.subr.mxu0 0.0
        %2924 = vmatpush1.xpose.msra.mxu0 %v2921
        %2925 = vmatprep.subr.mxu0 0.0
        %2926 = vmatpush1.xpose.msra.mxu0 0.0
        %2927 = vmatprep.subr.mxu0 0.0
        %2928 = vmatpush1.xpose.msra.mxu0 0.0
        %2929 = vmatprep.subr.mxu0 0.0
        %2930 = vmatpush1.xpose.msra.mxu0 0.0
        %2931 = vmatprep.subr.mxu0 0.0
        %2932 = vmatpush1.xpose.msra.mxu0 0.0
        %2933 = vmatprep.subr.mxu0 0.0
        %2934 = vmatpush1.xpose.msra.mxu0 0.0
        %2935 = vmatprep.subr.mxu0 0.0
        %2936 = vmatpush1.xpose.msra.mxu0 0.0
        %2937 = vmatprep.subr.mxu0 0.0
        %2938 = vmatpush1.xpose.msra.mxu0 0.0
        %2939 = vmatprep.subr.mxu0 0.0
        %2940 = vmatpush1.xpose.msra.mxu0 0.0
        %2941 = vmatprep.subr.mxu0 0.0
        %2942 = vmatpush1.xpose.msra.mxu0 0.0
        %2943 = vmatprep.subr.mxu0 0.0
        %2944 = vmatpush1.xpose.msra.mxu0 0.0
        %2945 = vmatprep.subr.mxu0 0.0
        %2946 = vmatpush1.xpose.msra.mxu0 0.0
        %2947 = vmatprep.subr.mxu0 0.0
        %2948 = vmatpush1.xpose.msra.mxu0 0.0
        %2949 = vmatprep.subr.mxu0 0.0
        %2950 = vmatpush1.xpose.msra.mxu0 0.0
        %2951 = vmatprep.subr.mxu0 0.0
        %2952 = vmatpush1.xpose.msra.mxu0 0.0
        %2953 = vmatprep.subr.mxu0 0.0
        %2954 = vmatpush1.xpose.msra.mxu0 0.0
        %2955 = vmatprep.subr.mxu0 0.0
        %2956 = vmatpush1.xpose.msra.mxu0 0.0
        %2957 = vmatprep.subr.mxu0 0.0
        %2958 = vmatpush1.xpose.msra.mxu0 0.0
        %2959 = vmatprep.subr.mxu0 0.0
        %2960 = vmatpush1.xpose.msra.mxu0 0.0
        %2961 = vmatprep.subr.mxu0 0.0
        %2962 = vmatpush1.xpose.msra.mxu0 0.0
        %2963 = vmatprep.subr.mxu0 0.0
        %2964 = vmatpush1.xpose.msra.mxu0 0.0
        %2965 = vmatprep.subr.mxu0 0.0
        %2966 = vmatpush1.xpose.msra.mxu0 0.0
        %2967 = vmatprep.subr.mxu0 0.0
        %2968 = vmatpush1.xpose.msra.mxu0 0.0
        %2969 = vmatprep.subr.mxu0 0.0
        %2970 = vmatpush1.xpose.msra.mxu0 0.0
        %2971 = vmatprep.subr.mxu0 0.0
        %2972 = vmatpush1.xpose.msra.mxu0 0.0
        %2973 = vmatprep.subr.mxu0 0.0
        %2974 = vmatpush1.xpose.msra.mxu0 0.0
        %2975 = vmatprep.subr.mxu0 0.0
        %2976 = vmatpush1.xpose.msra.mxu0 0.0
        %2977 = vmatprep.subr.mxu0 0.0
        %2978 = vmatpush1.xpose.msra.mxu0 0.0
        %2979 = vmatprep.subr.mxu0 0.0
        %2980 = vmatpush1.xpose.msra.mxu0 0.0
        %2981 = vmatprep.subr.mxu0 0.0
        %2982 = vmatpush1.xpose.msra.mxu0 0.0
        %2983 = vmatprep.subr.mxu0 0.0
        %2984 = vmatpush1.xpose.msra.mxu0 0.0
        %2985 = vmatprep.subr.mxu0 0.0
        %2986 = vmatpush1.xpose.msra.mxu0 0.0
        %2987 = vmatprep.mubr.f32.mxu0 0.0
        %2988 = vmatmul.mubr.f32.gmra.mrb[0].mxu0 %v2918
        %v2989 = vpop.f32.mrb[0].mxu0
        %v2990 = vadd.f32 0.0, %v2989
        %v2991 = vpop.f32.mrb[0].mxu0
        %2992 = vdwg.mxu0
        %s2993 = scalar_lea.vmem %s8, 12
        %v2994 = vld [vmem:[%s2993] sm:$0xf]
        %v2996 = vsel %vm1843, %v2990, 0
        %v2999 = vsel %vm1847, %v2994, 0
        %3001 = vmatprep.subr.mxu0 0.0
        %3002 = vmatpush1.msra.mxu0 %v2999
        %3003 = vmatprep.subr.mxu0 0.0
        %3004 = vmatpush1.msra.mxu0 0.0
        %3005 = vmatprep.subr.mxu0 0.0
        %3006 = vmatpush1.msra.mxu0 0.0
        %3007 = vmatprep.subr.mxu0 0.0
        %3008 = vmatpush1.msra.mxu0 0.0
        %3009 = vmatprep.subr.mxu0 0.0
        %3010 = vmatpush1.msra.mxu0 0.0
        %3011 = vmatprep.subr.mxu0 0.0
        %3012 = vmatpush1.msra.mxu0 0.0
        %3013 = vmatprep.subr.mxu0 0.0
        %3014 = vmatpush1.msra.mxu0 0.0
        %3015 = vmatprep.subr.mxu0 0.0
        %3016 = vmatpush1.msra.mxu0 0.0
        %3017 = vmatprep.subr.mxu0 0.0
        %3018 = vmatpush1.msra.mxu0 0.0
        %3019 = vmatprep.subr.mxu0 0.0
        %3020 = vmatpush1.msra.mxu0 0.0
        %3021 = vmatprep.subr.mxu0 0.0
        %3022 = vmatpush1.msra.mxu0 0.0
        %3023 = vmatprep.subr.mxu0 0.0
        %3024 = vmatpush1.msra.mxu0 0.0
        %3025 = vmatprep.subr.mxu0 0.0
        %3026 = vmatpush1.msra.mxu0 0.0
        %3027 = vmatprep.subr.mxu0 0.0
        %3028 = vmatpush1.msra.mxu0 0.0
        %3029 = vmatprep.subr.mxu0 0.0
        %3030 = vmatpush1.msra.mxu0 0.0
        %3031 = vmatprep.subr.mxu0 0.0
        %3032 = vmatpush1.msra.mxu0 0.0
        %3033 = vmatprep.subr.mxu0 0.0
        %3034 = vmatpush1.msra.mxu0 0.0
        %3035 = vmatprep.subr.mxu0 0.0
        %3036 = vmatpush1.msra.mxu0 0.0
        %3037 = vmatprep.subr.mxu0 0.0
        %3038 = vmatpush1.msra.mxu0 0.0
        %3039 = vmatprep.subr.mxu0 0.0
        %3040 = vmatpush1.msra.mxu0 0.0
        %3041 = vmatprep.subr.mxu0 0.0
        %3042 = vmatpush1.msra.mxu0 0.0
        %3043 = vmatprep.subr.mxu0 0.0
        %3044 = vmatpush1.msra.mxu0 0.0
        %3045 = vmatprep.subr.mxu0 0.0
        %3046 = vmatpush1.msra.mxu0 0.0
        %3047 = vmatprep.subr.mxu0 0.0
        %3048 = vmatpush1.msra.mxu0 0.0
        %3049 = vmatprep.subr.mxu0 0.0
        %3050 = vmatpush1.msra.mxu0 0.0
        %3051 = vmatprep.subr.mxu0 0.0
        %3052 = vmatpush1.msra.mxu0 0.0
        %3053 = vmatprep.subr.mxu0 0.0
        %3054 = vmatpush1.msra.mxu0 0.0
        %3055 = vmatprep.subr.mxu0 0.0
        %3056 = vmatpush1.msra.mxu0 0.0
        %3057 = vmatprep.subr.mxu0 0.0
        %3058 = vmatpush1.msra.mxu0 0.0
        %3059 = vmatprep.subr.mxu0 0.0
        %3060 = vmatpush1.msra.mxu0 0.0
        %3061 = vmatprep.subr.mxu0 0.0
        %3062 = vmatpush1.msra.mxu0 0.0
        %3063 = vmatprep.subr.mxu0 0.0
        %3064 = vmatpush1.msra.mxu0 0.0
        %3065 = vmatprep.mubr.f32.mxu0 0.0
        %3066 = vmatmul.mubr.f32.gmra.mrb[0].mxu0 %v2996
        %v3067 = vpop.f32.mrb[0].mxu0
        %v3068 = vadd.f32 0.0, %v3067
        %v3069 = vpop.f32.mrb[0].mxu0
        %3070 = vdwg.mxu0
        %v3071 = vadd.f32 %v2742, %v3068
        %s3072 = scalar_lea.vmem %s2, 128
        %v3073 = vld [vmem:[%s3072] sm:$0xff]
        %v3074 = vld [vmem:[%s3072 + $0x8] sm:$0xff]
        %v3075 = vld [vmem:[%s3072 + $0x10] sm:$0xff]
        %v3076 = vld [vmem:[%s3072 + $0x18] sm:$0xff]
        %s3077 = scalar_lea.vmem %s3, 4
        %v3078 = vld [vmem:[%s3077] sm:$0x1]
        %v3080 = vlaneseq
        %v3081 = vshrl.u32 %v3080, 7
        %v3082 = vsub.s32 0, %v3081
        %v3083 = vrot.slane %v3078, %v3082
        %3085 = vmatprep.subr.mxu0 0.0
        %3086 = vmatpush1.msra.mxu0 %v3073
        %3087 = vmatprep.subr.mxu0 0.0
        %3088 = vmatpush1.msra.mxu0 %v3074
        %3089 = vmatprep.subr.mxu0 0.0
        %3090 = vmatpush1.msra.mxu0 %v3075
        %3091 = vmatprep.subr.mxu0 0.0
        %3092 = vmatpush1.msra.mxu0 %v3076
        %3093 = vmatprep.subr.mxu0 0.0
        %3094 = vmatpush1.msra.mxu0 0.0
        %3095 = vmatprep.subr.mxu0 0.0
        %3096 = vmatpush1.msra.mxu0 0.0
        %3097 = vmatprep.subr.mxu0 0.0
        %3098 = vmatpush1.msra.mxu0 0.0
        %3099 = vmatprep.subr.mxu0 0.0
        %3100 = vmatpush1.msra.mxu0 0.0
        %3101 = vmatprep.subr.mxu0 0.0
        %3102 = vmatpush1.msra.mxu0 0.0
        %3103 = vmatprep.subr.mxu0 0.0
        %3104 = vmatpush1.msra.mxu0 0.0
        %3105 = vmatprep.subr.mxu0 0.0
        %3106 = vmatpush1.msra.mxu0 0.0
        %3107 = vmatprep.subr.mxu0 0.0
        %3108 = vmatpush1.msra.mxu0 0.0
        %3109 = vmatprep.subr.mxu0 0.0
        %3110 = vmatpush1.msra.mxu0 0.0
        %3111 = vmatprep.subr.mxu0 0.0
        %3112 = vmatpush1.msra.mxu0 0.0
        %3113 = vmatprep.subr.mxu0 0.0
        %3114 = vmatpush1.msra.mxu0 0.0
        %3115 = vmatprep.subr.mxu0 0.0
        %3116 = vmatpush1.msra.mxu0 0.0
        %3117 = vmatprep.subr.mxu0 0.0
        %3118 = vmatpush1.msra.mxu0 0.0
        %3119 = vmatprep.subr.mxu0 0.0
        %3120 = vmatpush1.msra.mxu0 0.0
        %3121 = vmatprep.subr.mxu0 0.0
        %3122 = vmatpush1.msra.mxu0 0.0
        %3123 = vmatprep.subr.mxu0 0.0
        %3124 = vmatpush1.msra.mxu0 0.0
        %3125 = vmatprep.subr.mxu0 0.0
        %3126 = vmatpush1.msra.mxu0 0.0
        %3127 = vmatprep.subr.mxu0 0.0
        %3128 = vmatpush1.msra.mxu0 0.0
        %3129 = vmatprep.subr.mxu0 0.0
        %3130 = vmatpush1.msra.mxu0 0.0
        %3131 = vmatprep.subr.mxu0 0.0
        %3132 = vmatpush1.msra.mxu0 0.0
        %3133 = vmatprep.subr.mxu0 0.0
        %3134 = vmatpush1.msra.mxu0 0.0
        %3135 = vmatprep.subr.mxu0 0.0
        %3136 = vmatpush1.msra.mxu0 0.0
        %3137 = vmatprep.subr.mxu0 0.0
        %3138 = vmatpush1.msra.mxu0 0.0
        %3139 = vmatprep.subr.mxu0 0.0
        %3140 = vmatpush1.msra.mxu0 0.0
        %3141 = vmatprep.subr.mxu0 0.0
        %3142 = vmatpush1.msra.mxu0 0.0
        %3143 = vmatprep.subr.mxu0 0.0
        %3144 = vmatpush1.msra.mxu0 0.0
        %3145 = vmatprep.subr.mxu0 0.0
        %3146 = vmatpush1.msra.mxu0 0.0
        %3147 = vmatprep.subr.mxu0 0.0
        %3148 = vmatpush1.msra.mxu0 0.0
        %3149 = vmatprep.mubr.f32.mxu0 0.0
        %3150 = vmatmul.mubr.f32.gmra.mrb[0].mxu0 %v1769
        %v3151 = vpop.f32.mrb[0].mxu0
        %v3152 = vadd.f32 %v3083, %v3151
        %v3153 = vpop.f32.mrb[0].mxu0
        %3154 = vdwg.mxu0
        %s3155 = scalar_lea.vmem [#allocation2], 16
        %v3156 = vld [vmem:[%s3155] sm:$0xf]
        %s3157 = scalar_lea.vmem [#allocation3], 16
        %v3158 = vld [vmem:[%s3157] sm:$0xf]
        %v3160 = vsel %vm1843, %v3152, 0
        %v3163 = vsel %vm1847, %v3156, 0
        %3165 = vmatprep.subr.mxu0 0.0
        %3166 = vmatpush1.msra.mxu0 %v3163
        %3167 = vmatprep.subr.mxu0 0.0
        %3168 = vmatpush1.msra.mxu0 0.0
        %3169 = vmatprep.subr.mxu0 0.0
        %3170 = vmatpush1.msra.mxu0 0.0
        %3171 = vmatprep.subr.mxu0 0.0
        %3172 = vmatpush1.msra.mxu0 0.0
        %3173 = vmatprep.subr.mxu0 0.0
        %3174 = vmatpush1.msra.mxu0 0.0
        %3175 = vmatprep.subr.mxu0 0.0
        %3176 = vmatpush1.msra.mxu0 0.0
        %3177 = vmatprep.subr.mxu0 0.0
        %3178 = vmatpush1.msra.mxu0 0.0
        %3179 = vmatprep.subr.mxu0 0.0
        %3180 = vmatpush1.msra.mxu0 0.0
        %3181 = vmatprep.subr.mxu0 0.0
        %3182 = vmatpush1.msra.mxu0 0.0
        %3183 = vmatprep.subr.mxu0 0.0
        %3184 = vmatpush1.msra.mxu0 0.0
        %3185 = vmatprep.subr.mxu0 0.0
        %3186 = vmatpush1.msra.mxu0 0.0
        %3187 = vmatprep.subr.mxu0 0.0
        %3188 = vmatpush1.msra.mxu0 0.0
        %3189 = vmatprep.subr.mxu0 0.0
        %3190 = vmatpush1.msra.mxu0 0.0
        %3191 = vmatprep.subr.mxu0 0.0
        %3192 = vmatpush1.msra.mxu0 0.0
        %3193 = vmatprep.subr.mxu0 0.0
        %3194 = vmatpush1.msra.mxu0 0.0
        %3195 = vmatprep.subr.mxu0 0.0
        %3196 = vmatpush1.msra.mxu0 0.0
        %3197 = vmatprep.subr.mxu0 0.0
        %3198 = vmatpush1.msra.mxu0 0.0
        %3199 = vmatprep.subr.mxu0 0.0
        %3200 = vmatpush1.msra.mxu0 0.0
        %3201 = vmatprep.subr.mxu0 0.0
        %3202 = vmatpush1.msra.mxu0 0.0
        %3203 = vmatprep.subr.mxu0 0.0
        %3204 = vmatpush1.msra.mxu0 0.0
        %3205 = vmatprep.subr.mxu0 0.0
        %3206 = vmatpush1.msra.mxu0 0.0
        %3207 = vmatprep.subr.mxu0 0.0
        %3208 = vmatpush1.msra.mxu0 0.0
        %3209 = vmatprep.subr.mxu0 0.0
        %3210 = vmatpush1.msra.mxu0 0.0
        %3211 = vmatprep.subr.mxu0 0.0
        %3212 = vmatpush1.msra.mxu0 0.0
        %3213 = vmatprep.subr.mxu0 0.0
        %3214 = vmatpush1.msra.mxu0 0.0
        %3215 = vmatprep.subr.mxu0 0.0
        %3216 = vmatpush1.msra.mxu0 0.0
        %3217 = vmatprep.subr.mxu0 0.0
        %3218 = vmatpush1.msra.mxu0 0.0
        %3219 = vmatprep.subr.mxu0 0.0
        %3220 = vmatpush1.msra.mxu0 0.0
        %3221 = vmatprep.subr.mxu0 0.0
        %3222 = vmatpush1.msra.mxu0 0.0
        %3223 = vmatprep.subr.mxu0 0.0
        %3224 = vmatpush1.msra.mxu0 0.0
        %3225 = vmatprep.subr.mxu0 0.0
        %3226 = vmatpush1.msra.mxu0 0.0
        %3227 = vmatprep.subr.mxu0 0.0
        %3228 = vmatpush1.msra.mxu0 0.0
        %3229 = vmatprep.mubr.f32.mxu0 0.0
        %3230 = vmatmul.mubr.f32.gmra.mrb[0].mxu0 %v3160
        %v3231 = vpop.f32.mrb[0].mxu0
        %v3232 = vadd.f32 0.0, %v3231
        %v3233 = vpop.f32.mrb[0].mxu0
        %3234 = vdwg.mxu0
        %v3235 = vsel %vm1921, %v3232, -inf
        %3236 = vmax.xlane.f32.xlu0 %v3235
        %v3237 = vpop.xlane.xlu0 %3236
        %v3238 = vsub.f32 %v3232, %v3237
        %v3239 = vmul.f32 %v3238, 1.442695
        %v3240 = vpow.pop %v3239
        %v3241 = vsel %vm1921, %v3240, 0.0
        %3242 = vadd.xlane.f32.xlu0 %v3241
        %v3243 = vpop.xlane.xlu0 %3242
        %v3244 = vrcp.pop %v3243
        %v3245 = vmul.f32 %v3240, %v3244
        %v3247 = vsel %vm1921, %v3245, 0
        %v3250 = vsel %vm1921, %v3158, 0
        %3252 = vmatprep.subr.mxu0 0.0
        %3253 = vmatpush1.xpose.msra.mxu0 %v3250
        %3254 = vmatprep.subr.mxu0 0.0
        %3255 = vmatpush1.xpose.msra.mxu0 0.0
        %3256 = vmatprep.subr.mxu0 0.0
        %3257 = vmatpush1.xpose.msra.mxu0 0.0
        %3258 = vmatprep.subr.mxu0 0.0
        %3259 = vmatpush1.xpose.msra.mxu0 0.0
        %3260 = vmatprep.subr.mxu0 0.0
        %3261 = vmatpush1.xpose.msra.mxu0 0.0
        %3262 = vmatprep.subr.mxu0 0.0
        %3263 = vmatpush1.xpose.msra.mxu0 0.0
        %3264 = vmatprep.subr.mxu0 0.0
        %3265 = vmatpush1.xpose.msra.mxu0 0.0
        %3266 = vmatprep.subr.mxu0 0.0
        %3267 = vmatpush1.xpose.msra.mxu0 0.0
        %3268 = vmatprep.subr.mxu0 0.0
        %3269 = vmatpush1.xpose.msra.mxu0 0.0
        %3270 = vmatprep.subr.mxu0 0.0
        %3271 = vmatpush1.xpose.msra.mxu0 0.0
        %3272 = vmatprep.subr.mxu0 0.0
        %3273 = vmatpush1.xpose.msra.mxu0 0.0
        %3274 = vmatprep.subr.mxu0 0.0
        %3275 = vmatpush1.xpose.msra.mxu0 0.0
        %3276 = vmatprep.subr.mxu0 0.0
        %3277 = vmatpush1.xpose.msra.mxu0 0.0
        %3278 = vmatprep.subr.mxu0 0.0
        %3279 = vmatpush1.xpose.msra.mxu0 0.0
        %3280 = vmatprep.subr.mxu0 0.0
        %3281 = vmatpush1.xpose.msra.mxu0 0.0
        %3282 = vmatprep.subr.mxu0 0.0
        %3283 = vmatpush1.xpose.msra.mxu0 0.0
        %3284 = vmatprep.subr.mxu0 0.0
        %3285 = vmatpush1.xpose.msra.mxu0 0.0
        %3286 = vmatprep.subr.mxu0 0.0
        %3287 = vmatpush1.xpose.msra.mxu0 0.0
        %3288 = vmatprep.subr.mxu0 0.0
        %3289 = vmatpush1.xpose.msra.mxu0 0.0
        %3290 = vmatprep.subr.mxu0 0.0
        %3291 = vmatpush1.xpose.msra.mxu0 0.0
        %3292 = vmatprep.subr.mxu0 0.0
        %3293 = vmatpush1.xpose.msra.mxu0 0.0
        %3294 = vmatprep.subr.mxu0 0.0
        %3295 = vmatpush1.xpose.msra.mxu0 0.0
        %3296 = vmatprep.subr.mxu0 0.0
        %3297 = vmatpush1.xpose.msra.mxu0 0.0
        %3298 = vmatprep.subr.mxu0 0.0
        %3299 = vmatpush1.xpose.msra.mxu0 0.0
        %3300 = vmatprep.subr.mxu0 0.0
        %3301 = vmatpush1.xpose.msra.mxu0 0.0
        %3302 = vmatprep.subr.mxu0 0.0
        %3303 = vmatpush1.xpose.msra.mxu0 0.0
        %3304 = vmatprep.subr.mxu0 0.0
        %3305 = vmatpush1.xpose.msra.mxu0 0.0
        %3306 = vmatprep.subr.mxu0 0.0
        %3307 = vmatpush1.xpose.msra.mxu0 0.0
        %3308 = vmatprep.subr.mxu0 0.0
        %3309 = vmatpush1.xpose.msra.mxu0 0.0
        %3310 = vmatprep.subr.mxu0 0.0
        %3311 = vmatpush1.xpose.msra.mxu0 0.0
        %3312 = vmatprep.subr.mxu0 0.0
        %3313 = vmatpush1.xpose.msra.mxu0 0.0
        %3314 = vmatprep.subr.mxu0 0.0
        %3315 = vmatpush1.xpose.msra.mxu0 0.0
        %3316 = vmatprep.mubr.f32.mxu0 0.0
        %3317 = vmatmul.mubr.f32.gmra.mrb[0].mxu0 %v3247
        %v3318 = vpop.f32.mrb[0].mxu0
        %v3319 = vadd.f32 0.0, %v3318
        %v3320 = vpop.f32.mrb[0].mxu0
        %3321 = vdwg.mxu0
        %s3322 = scalar_lea.vmem %s8, 16
        %v3323 = vld [vmem:[%s3322] sm:$0xf]
        %v3325 = vsel %vm1843, %v3319, 0
        %v3328 = vsel %vm1847, %v3323, 0
        %3330 = vmatprep.subr.mxu0 0.0
        %3331 = vmatpush1.msra.mxu0 %v3328
        %3332 = vmatprep.subr.mxu0 0.0
        %3333 = vmatpush1.msra.mxu0 0.0
        %3334 = vmatprep.subr.mxu0 0.0
        %3335 = vmatpush1.msra.mxu0 0.0
        %3336 = vmatprep.subr.mxu0 0.0
        %3337 = vmatpush1.msra.mxu0 0.0
        %3338 = vmatprep.subr.mxu0 0.0
        %3339 = vmatpush1.msra.mxu0 0.0
        %3340 = vmatprep.subr.mxu0 0.0
        %3341 = vmatpush1.msra.mxu0 0.0
        %3342 = vmatprep.subr.mxu0 0.0
        %3343 = vmatpush1.msra.mxu0 0.0
        %3344 = vmatprep.subr.mxu0 0.0
        %3345 = vmatpush1.msra.mxu0 0.0
        %3346 = vmatprep.subr.mxu0 0.0
        %3347 = vmatpush1.msra.mxu0 0.0
        %3348 = vmatprep.subr.mxu0 0.0
        %3349 = vmatpush1.msra.mxu0 0.0
        %3350 = vmatprep.subr.mxu0 0.0
        %3351 = vmatpush1.msra.mxu0 0.0
        %3352 = vmatprep.subr.mxu0 0.0
        %3353 = vmatpush1.msra.mxu0 0.0
        %3354 = vmatprep.subr.mxu0 0.0
        %3355 = vmatpush1.msra.mxu0 0.0
        %3356 = vmatprep.subr.mxu0 0.0
        %3357 = vmatpush1.msra.mxu0 0.0
        %3358 = vmatprep.subr.mxu0 0.0
        %3359 = vmatpush1.msra.mxu0 0.0
        %3360 = vmatprep.subr.mxu0 0.0
        %3361 = vmatpush1.msra.mxu0 0.0
        %3362 = vmatprep.subr.mxu0 0.0
        %3363 = vmatpush1.msra.mxu0 0.0
        %3364 = vmatprep.subr.mxu0 0.0
        %3365 = vmatpush1.msra.mxu0 0.0
        %3366 = vmatprep.subr.mxu0 0.0
        %3367 = vmatpush1.msra.mxu0 0.0
        %3368 = vmatprep.subr.mxu0 0.0
        %3369 = vmatpush1.msra.mxu0 0.0
        %3370 = vmatprep.subr.mxu0 0.0
        %3371 = vmatpush1.msra.mxu0 0.0
        %3372 = vmatprep.subr.mxu0 0.0
        %3373 = vmatpush1.msra.mxu0 0.0
        %3374 = vmatprep.subr.mxu0 0.0
        %3375 = vmatpush1.msra.mxu0 0.0
        %3376 = vmatprep.subr.mxu0 0.0
        %3377 = vmatpush1.msra.mxu0 0.0
        %3378 = vmatprep.subr.mxu0 0.0
        %3379 = vmatpush1.msra.mxu0 0.0
        %3380 = vmatprep.subr.mxu0 0.0
        %3381 = vmatpush1.msra.mxu0 0.0
        %3382 = vmatprep.subr.mxu0 0.0
        %3383 = vmatpush1.msra.mxu0 0.0
        %3384 = vmatprep.subr.mxu0 0.0
        %3385 = vmatpush1.msra.mxu0 0.0
        %3386 = vmatprep.subr.mxu0 0.0
        %3387 = vmatpush1.msra.mxu0 0.0
        %3388 = vmatprep.subr.mxu0 0.0
        %3389 = vmatpush1.msra.mxu0 0.0
        %3390 = vmatprep.subr.mxu0 0.0
        %3391 = vmatpush1.msra.mxu0 0.0
        %3392 = vmatprep.subr.mxu0 0.0
        %3393 = vmatpush1.msra.mxu0 0.0
        %3394 = vmatprep.mubr.f32.mxu0 0.0
        %3395 = vmatmul.mubr.f32.gmra.mrb[0].mxu0 %v3325
        %v3396 = vpop.f32.mrb[0].mxu0
        %v3397 = vadd.f32 0.0, %v3396
        %v3398 = vpop.f32.mrb[0].mxu0
        %3399 = vdwg.mxu0
        %v3400 = vadd.f32 %v3071, %v3397
        %s3401 = scalar_lea.vmem %s2, 160
        %v3402 = vld [vmem:[%s3401] sm:$0xff]
        %v3403 = vld [vmem:[%s3401 + $0x8] sm:$0xff]
        %v3404 = vld [vmem:[%s3401 + $0x10] sm:$0xff]
        %v3405 = vld [vmem:[%s3401 + $0x18] sm:$0xff]
        %s3406 = scalar_lea.vmem %s3, 5
        %v3407 = vld [vmem:[%s3406] sm:$0x1]
        %v3409 = vlaneseq
        %v3410 = vshrl.u32 %v3409, 7
        %v3411 = vsub.s32 0, %v3410
        %v3412 = vrot.slane %v3407, %v3411
        %3414 = vmatprep.subr.mxu0 0.0
        %3415 = vmatpush1.msra.mxu0 %v3402
        %3416 = vmatprep.subr.mxu0 0.0
        %3417 = vmatpush1.msra.mxu0 %v3403
        %3418 = vmatprep.subr.mxu0 0.0
        %3419 = vmatpush1.msra.mxu0 %v3404
        %3420 = vmatprep.subr.mxu0 0.0
        %3421 = vmatpush1.msra.mxu0 %v3405
        %3422 = vmatprep.subr.mxu0 0.0
        %3423 = vmatpush1.msra.mxu0 0.0
        %3424 = vmatprep.subr.mxu0 0.0
        %3425 = vmatpush1.msra.mxu0 0.0
        %3426 = vmatprep.subr.mxu0 0.0
        %3427 = vmatpush1.msra.mxu0 0.0
        %3428 = vmatprep.subr.mxu0 0.0
        %3429 = vmatpush1.msra.mxu0 0.0
        %3430 = vmatprep.subr.mxu0 0.0
        %3431 = vmatpush1.msra.mxu0 0.0
        %3432 = vmatprep.subr.mxu0 0.0
        %3433 = vmatpush1.msra.mxu0 0.0
        %3434 = vmatprep.subr.mxu0 0.0
        %3435 = vmatpush1.msra.mxu0 0.0
        %3436 = vmatprep.subr.mxu0 0.0
        %3437 = vmatpush1.msra.mxu0 0.0
        %3438 = vmatprep.subr.mxu0 0.0
        %3439 = vmatpush1.msra.mxu0 0.0
        %3440 = vmatprep.subr.mxu0 0.0
        %3441 = vmatpush1.msra.mxu0 0.0
        %3442 = vmatprep.subr.mxu0 0.0
        %3443 = vmatpush1.msra.mxu0 0.0
        %3444 = vmatprep.subr.mxu0 0.0
        %3445 = vmatpush1.msra.mxu0 0.0
        %3446 = vmatprep.subr.mxu0 0.0
        %3447 = vmatpush1.msra.mxu0 0.0
        %3448 = vmatprep.subr.mxu0 0.0
        %3449 = vmatpush1.msra.mxu0 0.0
        %3450 = vmatprep.subr.mxu0 0.0
        %3451 = vmatpush1.msra.mxu0 0.0
        %3452 = vmatprep.subr.mxu0 0.0
        %3453 = vmatpush1.msra.mxu0 0.0
        %3454 = vmatprep.subr.mxu0 0.0
        %3455 = vmatpush1.msra.mxu0 0.0
        %3456 = vmatprep.subr.mxu0 0.0
        %3457 = vmatpush1.msra.mxu0 0.0
        %3458 = vmatprep.subr.mxu0 0.0
        %3459 = vmatpush1.msra.mxu0 0.0
        %3460 = vmatprep.subr.mxu0 0.0
        %3461 = vmatpush1.msra.mxu0 0.0
        %3462 = vmatprep.subr.mxu0 0.0
        %3463 = vmatpush1.msra.mxu0 0.0
        %3464 = vmatprep.subr.mxu0 0.0
        %3465 = vmatpush1.msra.mxu0 0.0
        %3466 = vmatprep.subr.mxu0 0.0
        %3467 = vmatpush1.msra.mxu0 0.0
        %3468 = vmatprep.subr.mxu0 0.0
        %3469 = vmatpush1.msra.mxu0 0.0
        %3470 = vmatprep.subr.mxu0 0.0
        %3471 = vmatpush1.msra.mxu0 0.0
        %3472 = vmatprep.subr.mxu0 0.0
        %3473 = vmatpush1.msra.mxu0 0.0
        %3474 = vmatprep.subr.mxu0 0.0
        %3475 = vmatpush1.msra.mxu0 0.0
        %3476 = vmatprep.subr.mxu0 0.0
        %3477 = vmatpush1.msra.mxu0 0.0
        %3478 = vmatprep.mubr.f32.mxu0 0.0
        %3479 = vmatmul.mubr.f32.gmra.mrb[0].mxu0 %v1769
        %v3480 = vpop.f32.mrb[0].mxu0
        %v3481 = vadd.f32 %v3412, %v3480
        %v3482 = vpop.f32.mrb[0].mxu0
        %3483 = vdwg.mxu0
        %s3484 = scalar_lea.vmem [#allocation2], 20
        %v3485 = vld [vmem:[%s3484] sm:$0xf]
        %s3486 = scalar_lea.vmem [#allocation3], 20
        %v3487 = vld [vmem:[%s3486] sm:$0xf]
        %v3489 = vsel %vm1843, %v3481, 0
        %v3492 = vsel %vm1847, %v3485, 0
        %3494 = vmatprep.subr.mxu0 0.0
        %3495 = vmatpush1.msra.mxu0 %v3492
        %3496 = vmatprep.subr.mxu0 0.0
        %3497 = vmatpush1.msra.mxu0 0.0
        %3498 = vmatprep.subr.mxu0 0.0
        %3499 = vmatpush1.msra.mxu0 0.0
        %3500 = vmatprep.subr.mxu0 0.0
        %3501 = vmatpush1.msra.mxu0 0.0
        %3502 = vmatprep.subr.mxu0 0.0
        %3503 = vmatpush1.msra.mxu0 0.0
        %3504 = vmatprep.subr.mxu0 0.0
        %3505 = vmatpush1.msra.mxu0 0.0
        %3506 = vmatprep.subr.mxu0 0.0
        %3507 = vmatpush1.msra.mxu0 0.0
        %3508 = vmatprep.subr.mxu0 0.0
        %3509 = vmatpush1.msra.mxu0 0.0
        %3510 = vmatprep.subr.mxu0 0.0
        %3511 = vmatpush1.msra.mxu0 0.0
        %3512 = vmatprep.subr.mxu0 0.0
        %3513 = vmatpush1.msra.mxu0 0.0
        %3514 = vmatprep.subr.mxu0 0.0
        %3515 = vmatpush1.msra.mxu0 0.0
        %3516 = vmatprep.subr.mxu0 0.0
        %3517 = vmatpush1.msra.mxu0 0.0
        %3518 = vmatprep.subr.mxu0 0.0
        %3519 = vmatpush1.msra.mxu0 0.0
        %3520 = vmatprep.subr.mxu0 0.0
        %3521 = vmatpush1.msra.mxu0 0.0
        %3522 = vmatprep.subr.mxu0 0.0
        %3523 = vmatpush1.msra.mxu0 0.0
        %3524 = vmatprep.subr.mxu0 0.0
        %3525 = vmatpush1.msra.mxu0 0.0
        %3526 = vmatprep.subr.mxu0 0.0
        %3527 = vmatpush1.msra.mxu0 0.0
        %3528 = vmatprep.subr.mxu0 0.0
        %3529 = vmatpush1.msra.mxu0 0.0
        %3530 = vmatprep.subr.mxu0 0.0
        %3531 = vmatpush1.msra.mxu0 0.0
        %3532 = vmatprep.subr.mxu0 0.0
        %3533 = vmatpush1.msra.mxu0 0.0
        %3534 = vmatprep.subr.mxu0 0.0
        %3535 = vmatpush1.msra.mxu0 0.0
        %3536 = vmatprep.subr.mxu0 0.0
        %3537 = vmatpush1.msra.mxu0 0.0
        %3538 = vmatprep.subr.mxu0 0.0
        %3539 = vmatpush1.msra.mxu0 0.0
        %3540 = vmatprep.subr.mxu0 0.0
        %3541 = vmatpush1.msra.mxu0 0.0
        %3542 = vmatprep.subr.mxu0 0.0
        %3543 = vmatpush1.msra.mxu0 0.0
        %3544 = vmatprep.subr.mxu0 0.0
        %3545 = vmatpush1.msra.mxu0 0.0
        %3546 = vmatprep.subr.mxu0 0.0
        %3547 = vmatpush1.msra.mxu0 0.0
        %3548 = vmatprep.subr.mxu0 0.0
        %3549 = vmatpush1.msra.mxu0 0.0
        %3550 = vmatprep.subr.mxu0 0.0
        %3551 = vmatpush1.msra.mxu0 0.0
        %3552 = vmatprep.subr.mxu0 0.0
        %3553 = vmatpush1.msra.mxu0 0.0
        %3554 = vmatprep.subr.mxu0 0.0
        %3555 = vmatpush1.msra.mxu0 0.0
        %3556 = vmatprep.subr.mxu0 0.0
        %3557 = vmatpush1.msra.mxu0 0.0
        %3558 = vmatprep.mubr.f32.mxu0 0.0
        %3559 = vmatmul.mubr.f32.gmra.mrb[0].mxu0 %v3489
        %v3560 = vpop.f32.mrb[0].mxu0
        %v3561 = vadd.f32 0.0, %v3560
        %v3562 = vpop.f32.mrb[0].mxu0
        %3563 = vdwg.mxu0
        %v3564 = vsel %vm1921, %v3561, -inf
        %3565 = vmax.xlane.f32.xlu0 %v3564
        %v3566 = vpop.xlane.xlu0 %3565
        %v3567 = vsub.f32 %v3561, %v3566
        %v3568 = vmul.f32 %v3567, 1.442695
        %v3569 = vpow.pop %v3568
        %v3570 = vsel %vm1921, %v3569, 0.0
        %3571 = vadd.xlane.f32.xlu0 %v3570
        %v3572 = vpop.xlane.xlu0 %3571
        %v3573 = vrcp.pop %v3572
        %v3574 = vmul.f32 %v3569, %v3573
        %v3576 = vsel %vm1921, %v3574, 0
        %v3579 = vsel %vm1921, %v3487, 0
        %3581 = vmatprep.subr.mxu0 0.0
        %3582 = vmatpush1.xpose.msra.mxu0 %v3579
        %3583 = vmatprep.subr.mxu0 0.0
        %3584 = vmatpush1.xpose.msra.mxu0 0.0
        %3585 = vmatprep.subr.mxu0 0.0
        %3586 = vmatpush1.xpose.msra.mxu0 0.0
        %3587 = vmatprep.subr.mxu0 0.0
        %3588 = vmatpush1.xpose.msra.mxu0 0.0
        %3589 = vmatprep.subr.mxu0 0.0
        %3590 = vmatpush1.xpose.msra.mxu0 0.0
        %3591 = vmatprep.subr.mxu0 0.0
        %3592 = vmatpush1.xpose.msra.mxu0 0.0
        %3593 = vmatprep.subr.mxu0 0.0
        %3594 = vmatpush1.xpose.msra.mxu0 0.0
        %3595 = vmatprep.subr.mxu0 0.0
        %3596 = vmatpush1.xpose.msra.mxu0 0.0
        %3597 = vmatprep.subr.mxu0 0.0
        %3598 = vmatpush1.xpose.msra.mxu0 0.0
        %3599 = vmatprep.subr.mxu0 0.0
        %3600 = vmatpush1.xpose.msra.mxu0 0.0
        %3601 = vmatprep.subr.mxu0 0.0
        %3602 = vmatpush1.xpose.msra.mxu0 0.0
        %3603 = vmatprep.subr.mxu0 0.0
        %3604 = vmatpush1.xpose.msra.mxu0 0.0
        %3605 = vmatprep.subr.mxu0 0.0
        %3606 = vmatpush1.xpose.msra.mxu0 0.0
        %3607 = vmatprep.subr.mxu0 0.0
        %3608 = vmatpush1.xpose.msra.mxu0 0.0
        %3609 = vmatprep.subr.mxu0 0.0
        %3610 = vmatpush1.xpose.msra.mxu0 0.0
        %3611 = vmatprep.subr.mxu0 0.0
        %3612 = vmatpush1.xpose.msra.mxu0 0.0
        %3613 = vmatprep.subr.mxu0 0.0
        %3614 = vmatpush1.xpose.msra.mxu0 0.0
        %3615 = vmatprep.subr.mxu0 0.0
        %3616 = vmatpush1.xpose.msra.mxu0 0.0
        %3617 = vmatprep.subr.mxu0 0.0
        %3618 = vmatpush1.xpose.msra.mxu0 0.0
        %3619 = vmatprep.subr.mxu0 0.0
        %3620 = vmatpush1.xpose.msra.mxu0 0.0
        %3621 = vmatprep.subr.mxu0 0.0
        %3622 = vmatpush1.xpose.msra.mxu0 0.0
        %3623 = vmatprep.subr.mxu0 0.0
        %3624 = vmatpush1.xpose.msra.mxu0 0.0
        %3625 = vmatprep.subr.mxu0 0.0
        %3626 = vmatpush1.xpose.msra.mxu0 0.0
        %3627 = vmatprep.subr.mxu0 0.0
        %3628 = vmatpush1.xpose.msra.mxu0 0.0
        %3629 = vmatprep.subr.mxu0 0.0
        %3630 = vmatpush1.xpose.msra.mxu0 0.0
        %3631 = vmatprep.subr.mxu0 0.0
        %3632 = vmatpush1.xpose.msra.mxu0 0.0
        %3633 = vmatprep.subr.mxu0 0.0
        %3634 = vmatpush1.xpose.msra.mxu0 0.0
        %3635 = vmatprep.subr.mxu0 0.0
        %3636 = vmatpush1.xpose.msra.mxu0 0.0
        %3637 = vmatprep.subr.mxu0 0.0
        %3638 = vmatpush1.xpose.msra.mxu0 0.0
        %3639 = vmatprep.subr.mxu0 0.0
        %3640 = vmatpush1.xpose.msra.mxu0 0.0
        %3641 = vmatprep.subr.mxu0 0.0
        %3642 = vmatpush1.xpose.msra.mxu0 0.0
        %3643 = vmatprep.subr.mxu0 0.0
        %3644 = vmatpush1.xpose.msra.mxu0 0.0
        %3645 = vmatprep.mubr.f32.mxu0 0.0
        %3646 = vmatmul.mubr.f32.gmra.mrb[0].mxu0 %v3576
        %v3647 = vpop.f32.mrb[0].mxu0
        %v3648 = vadd.f32 0.0, %v3647
        %v3649 = vpop.f32.mrb[0].mxu0
        %3650 = vdwg.mxu0
        %s3651 = scalar_lea.vmem %s8, 20
        %v3652 = vld [vmem:[%s3651] sm:$0xf]
        %v3654 = vsel %vm1843, %v3648, 0
        %v3657 = vsel %vm1847, %v3652, 0
        %3659 = vmatprep.subr.mxu0 0.0
        %3660 = vmatpush1.msra.mxu0 %v3657
        %3661 = vmatprep.subr.mxu0 0.0
        %3662 = vmatpush1.msra.mxu0 0.0
        %3663 = vmatprep.subr.mxu0 0.0
        %3664 = vmatpush1.msra.mxu0 0.0
        %3665 = vmatprep.subr.mxu0 0.0
        %3666 = vmatpush1.msra.mxu0 0.0
        %3667 = vmatprep.subr.mxu0 0.0
        %3668 = vmatpush1.msra.mxu0 0.0
        %3669 = vmatprep.subr.mxu0 0.0
        %3670 = vmatpush1.msra.mxu0 0.0
        %3671 = vmatprep.subr.mxu0 0.0
        %3672 = vmatpush1.msra.mxu0 0.0
        %3673 = vmatprep.subr.mxu0 0.0
        %3674 = vmatpush1.msra.mxu0 0.0
        %3675 = vmatprep.subr.mxu0 0.0
        %3676 = vmatpush1.msra.mxu0 0.0
        %3677 = vmatprep.subr.mxu0 0.0
        %3678 = vmatpush1.msra.mxu0 0.0
        %3679 = vmatprep.subr.mxu0 0.0
        %3680 = vmatpush1.msra.mxu0 0.0
        %3681 = vmatprep.subr.mxu0 0.0
        %3682 = vmatpush1.msra.mxu0 0.0
        %3683 = vmatprep.subr.mxu0 0.0
        %3684 = vmatpush1.msra.mxu0 0.0
        %3685 = vmatprep.subr.mxu0 0.0
        %3686 = vmatpush1.msra.mxu0 0.0
        %3687 = vmatprep.subr.mxu0 0.0
        %3688 = vmatpush1.msra.mxu0 0.0
        %3689 = vmatprep.subr.mxu0 0.0
        %3690 = vmatpush1.msra.mxu0 0.0
        %3691 = vmatprep.subr.mxu0 0.0
        %3692 = vmatpush1.msra.mxu0 0.0
        %3693 = vmatprep.subr.mxu0 0.0
        %3694 = vmatpush1.msra.mxu0 0.0
        %3695 = vmatprep.subr.mxu0 0.0
        %3696 = vmatpush1.msra.mxu0 0.0
        %3697 = vmatprep.subr.mxu0 0.0
        %3698 = vmatpush1.msra.mxu0 0.0
        %3699 = vmatprep.subr.mxu0 0.0
        %3700 = vmatpush1.msra.mxu0 0.0
        %3701 = vmatprep.subr.mxu0 0.0
        %3702 = vmatpush1.msra.mxu0 0.0
        %3703 = vmatprep.subr.mxu0 0.0
        %3704 = vmatpush1.msra.mxu0 0.0
        %3705 = vmatprep.subr.mxu0 0.0
        %3706 = vmatpush1.msra.mxu0 0.0
        %3707 = vmatprep.subr.mxu0 0.0
        %3708 = vmatpush1.msra.mxu0 0.0
        %3709 = vmatprep.subr.mxu0 0.0
        %3710 = vmatpush1.msra.mxu0 0.0
        %3711 = vmatprep.subr.mxu0 0.0
        %3712 = vmatpush1.msra.mxu0 0.0
        %3713 = vmatprep.subr.mxu0 0.0
        %3714 = vmatpush1.msra.mxu0 0.0
        %3715 = vmatprep.subr.mxu0 0.0
        %3716 = vmatpush1.msra.mxu0 0.0
        %3717 = vmatprep.subr.mxu0 0.0
        %3718 = vmatpush1.msra.mxu0 0.0
        %3719 = vmatprep.subr.mxu0 0.0
        %3720 = vmatpush1.msra.mxu0 0.0
        %3721 = vmatprep.subr.mxu0 0.0
        %3722 = vmatpush1.msra.mxu0 0.0
        %3723 = vmatprep.mubr.f32.mxu0 0.0
        %3724 = vmatmul.mubr.f32.gmra.mrb[0].mxu0 %v3654
        %v3725 = vpop.f32.mrb[0].mxu0
        %v3726 = vadd.f32 0.0, %v3725
        %v3727 = vpop.f32.mrb[0].mxu0
        %3728 = vdwg.mxu0
        %v3729 = vadd.f32 %v3400, %v3726
        %s3730 = scalar_lea.vmem %s2, 192
        %v3731 = vld [vmem:[%s3730] sm:$0xff]
        %v3732 = vld [vmem:[%s3730 + $0x8] sm:$0xff]
        %v3733 = vld [vmem:[%s3730 + $0x10] sm:$0xff]
        %v3734 = vld [vmem:[%s3730 + $0x18] sm:$0xff]
        %s3735 = scalar_lea.vmem %s3, 6
        %v3736 = vld [vmem:[%s3735] sm:$0x1]
        %v3738 = vlaneseq
        %v3739 = vshrl.u32 %v3738, 7
        %v3740 = vsub.s32 0, %v3739
        %v3741 = vrot.slane %v3736, %v3740
        %3743 = vmatprep.subr.mxu0 0.0
        %3744 = vmatpush1.msra.mxu0 %v3731
        %3745 = vmatprep.subr.mxu0 0.0
        %3746 = vmatpush1.msra.mxu0 %v3732
        %3747 = vmatprep.subr.mxu0 0.0
        %3748 = vmatpush1.msra.mxu0 %v3733
        %3749 = vmatprep.subr.mxu0 0.0
        %3750 = vmatpush1.msra.mxu0 %v3734
        %3751 = vmatprep.subr.mxu0 0.0
        %3752 = vmatpush1.msra.mxu0 0.0
        %3753 = vmatprep.subr.mxu0 0.0
        %3754 = vmatpush1.msra.mxu0 0.0
        %3755 = vmatprep.subr.mxu0 0.0
        %3756 = vmatpush1.msra.mxu0 0.0
        %3757 = vmatprep.subr.mxu0 0.0
        %3758 = vmatpush1.msra.mxu0 0.0
        %3759 = vmatprep.subr.mxu0 0.0
        %3760 = vmatpush1.msra.mxu0 0.0
        %3761 = vmatprep.subr.mxu0 0.0
        %3762 = vmatpush1.msra.mxu0 0.0
        %3763 = vmatprep.subr.mxu0 0.0
        %3764 = vmatpush1.msra.mxu0 0.0
        %3765 = vmatprep.subr.mxu0 0.0
        %3766 = vmatpush1.msra.mxu0 0.0
        %3767 = vmatprep.subr.mxu0 0.0
        %3768 = vmatpush1.msra.mxu0 0.0
        %3769 = vmatprep.subr.mxu0 0.0
        %3770 = vmatpush1.msra.mxu0 0.0
        %3771 = vmatprep.subr.mxu0 0.0
        %3772 = vmatpush1.msra.mxu0 0.0
        %3773 = vmatprep.subr.mxu0 0.0
        %3774 = vmatpush1.msra.mxu0 0.0
        %3775 = vmatprep.subr.mxu0 0.0
        %3776 = vmatpush1.msra.mxu0 0.0
        %3777 = vmatprep.subr.mxu0 0.0
        %3778 = vmatpush1.msra.mxu0 0.0
        %3779 = vmatprep.subr.mxu0 0.0
        %3780 = vmatpush1.msra.mxu0 0.0
        %3781 = vmatprep.subr.mxu0 0.0
        %3782 = vmatpush1.msra.mxu0 0.0
        %3783 = vmatprep.subr.mxu0 0.0
        %3784 = vmatpush1.msra.mxu0 0.0
        %3785 = vmatprep.subr.mxu0 0.0
        %3786 = vmatpush1.msra.mxu0 0.0
        %3787 = vmatprep.subr.mxu0 0.0
        %3788 = vmatpush1.msra.mxu0 0.0
        %3789 = vmatprep.subr.mxu0 0.0
        %3790 = vmatpush1.msra.mxu0 0.0
        %3791 = vmatprep.subr.mxu0 0.0
        %3792 = vmatpush1.msra.mxu0 0.0
        %3793 = vmatprep.subr.mxu0 0.0
        %3794 = vmatpush1.msra.mxu0 0.0
        %3795 = vmatprep.subr.mxu0 0.0
        %3796 = vmatpush1.msra.mxu0 0.0
        %3797 = vmatprep.subr.mxu0 0.0
        %3798 = vmatpush1.msra.mxu0 0.0
        %3799 = vmatprep.subr.mxu0 0.0
        %3800 = vmatpush1.msra.mxu0 0.0
        %3801 = vmatprep.subr.mxu0 0.0
        %3802 = vmatpush1.msra.mxu0 0.0
        %3803 = vmatprep.subr.mxu0 0.0
        %3804 = vmatpush1.msra.mxu0 0.0
        %3805 = vmatprep.subr.mxu0 0.0
        %3806 = vmatpush1.msra.mxu0 0.0
        %3807 = vmatprep.mubr.f32.mxu0 0.0
        %3808 = vmatmul.mubr.f32.gmra.mrb[0].mxu0 %v1769
        %v3809 = vpop.f32.mrb[0].mxu0
        %v3810 = vadd.f32 %v3741, %v3809
        %v3811 = vpop.f32.mrb[0].mxu0
        %3812 = vdwg.mxu0
        %s3813 = scalar_lea.vmem [#allocation2], 24
        %v3814 = vld [vmem:[%s3813] sm:$0xf]
        %s3815 = scalar_lea.vmem [#allocation3], 24
        %v3816 = vld [vmem:[%s3815] sm:$0xf]
        %v3818 = vsel %vm1843, %v3810, 0
        %v3821 = vsel %vm1847, %v3814, 0
        %3823 = vmatprep.subr.mxu0 0.0
        %3824 = vmatpush1.msra.mxu0 %v3821
        %3825 = vmatprep.subr.mxu0 0.0
        %3826 = vmatpush1.msra.mxu0 0.0
        %3827 = vmatprep.subr.mxu0 0.0
        %3828 = vmatpush1.msra.mxu0 0.0
        %3829 = vmatprep.subr.mxu0 0.0
        %3830 = vmatpush1.msra.mxu0 0.0
        %3831 = vmatprep.subr.mxu0 0.0
        %3832 = vmatpush1.msra.mxu0 0.0
        %3833 = vmatprep.subr.mxu0 0.0
        %3834 = vmatpush1.msra.mxu0 0.0
        %3835 = vmatprep.subr.mxu0 0.0
        %3836 = vmatpush1.msra.mxu0 0.0
        %3837 = vmatprep.subr.mxu0 0.0
        %3838 = vmatpush1.msra.mxu0 0.0
        %3839 = vmatprep.subr.mxu0 0.0
        %3840 = vmatpush1.msra.mxu0 0.0
        %3841 = vmatprep.subr.mxu0 0.0
        %3842 = vmatpush1.msra.mxu0 0.0
        %3843 = vmatprep.subr.mxu0 0.0
        %3844 = vmatpush1.msra.mxu0 0.0
        %3845 = vmatprep.subr.mxu0 0.0
        %3846 = vmatpush1.msra.mxu0 0.0
        %3847 = vmatprep.subr.mxu0 0.0
        %3848 = vmatpush1.msra.mxu0 0.0
        %3849 = vmatprep.subr.mxu0 0.0
        %3850 = vmatpush1.msra.mxu0 0.0
        %3851 = vmatprep.subr.mxu0 0.0
        %3852 = vmatpush1.msra.mxu0 0.0
        %3853 = vmatprep.subr.mxu0 0.0
        %3854 = vmatpush1.msra.mxu0 0.0
        %3855 = vmatprep.subr.mxu0 0.0
        %3856 = vmatpush1.msra.mxu0 0.0
        %3857 = vmatprep.subr.mxu0 0.0
        %3858 = vmatpush1.msra.mxu0 0.0
        %3859 = vmatprep.subr.mxu0 0.0
        %3860 = vmatpush1.msra.mxu0 0.0
        %3861 = vmatprep.subr.mxu0 0.0
        %3862 = vmatpush1.msra.mxu0 0.0
        %3863 = vmatprep.subr.mxu0 0.0
        %3864 = vmatpush1.msra.mxu0 0.0
        %3865 = vmatprep.subr.mxu0 0.0
        %3866 = vmatpush1.msra.mxu0 0.0
        %3867 = vmatprep.subr.mxu0 0.0
        %3868 = vmatpush1.msra.mxu0 0.0
        %3869 = vmatprep.subr.mxu0 0.0
        %3870 = vmatpush1.msra.mxu0 0.0
        %3871 = vmatprep.subr.mxu0 0.0
        %3872 = vmatpush1.msra.mxu0 0.0
        %3873 = vmatprep.subr.mxu0 0.0
        %3874 = vmatpush1.msra.mxu0 0.0
        %3875 = vmatprep.subr.mxu0 0.0
        %3876 = vmatpush1.msra.mxu0 0.0
        %3877 = vmatprep.subr.mxu0 0.0
        %3878 = vmatpush1.msra.mxu0 0.0
        %3879 = vmatprep.subr.mxu0 0.0
        %3880 = vmatpush1.msra.mxu0 0.0
        %3881 = vmatprep.subr.mxu0 0.0
        %3882 = vmatpush1.msra.mxu0 0.0
        %3883 = vmatprep.subr.mxu0 0.0
        %3884 = vmatpush1.msra.mxu0 0.0
        %3885 = vmatprep.subr.mxu0 0.0
        %3886 = vmatpush1.msra.mxu0 0.0
        %3887 = vmatprep.mubr.f32.mxu0 0.0
        %3888 = vmatmul.mubr.f32.gmra.mrb[0].mxu0 %v3818
        %v3889 = vpop.f32.mrb[0].mxu0
        %v3890 = vadd.f32 0.0, %v3889
        %v3891 = vpop.f32.mrb[0].mxu0
        %3892 = vdwg.mxu0
        %v3893 = vsel %vm1921, %v3890, -inf
        %3894 = vmax.xlane.f32.xlu0 %v3893
        %v3895 = vpop.xlane.xlu0 %3894
        %v3896 = vsub.f32 %v3890, %v3895
        %v3897 = vmul.f32 %v3896, 1.442695
        %v3898 = vpow.pop %v3897
        %v3899 = vsel %vm1921, %v3898, 0.0
        %3900 = vadd.xlane.f32.xlu0 %v3899
        %v3901 = vpop.xlane.xlu0 %3900
        %v3902 = vrcp.pop %v3901
        %v3903 = vmul.f32 %v3898, %v3902
        %v3905 = vsel %vm1921, %v3903, 0
        %v3908 = vsel %vm1921, %v3816, 0
        %3910 = vmatprep.subr.mxu0 0.0
        %3911 = vmatpush1.xpose.msra.mxu0 %v3908
        %3912 = vmatprep.subr.mxu0 0.0
        %3913 = vmatpush1.xpose.msra.mxu0 0.0
        %3914 = vmatprep.subr.mxu0 0.0
        %3915 = vmatpush1.xpose.msra.mxu0 0.0
        %3916 = vmatprep.subr.mxu0 0.0
        %3917 = vmatpush1.xpose.msra.mxu0 0.0
        %3918 = vmatprep.subr.mxu0 0.0
        %3919 = vmatpush1.xpose.msra.mxu0 0.0
        %3920 = vmatprep.subr.mxu0 0.0
        %3921 = vmatpush1.xpose.msra.mxu0 0.0
        %3922 = vmatprep.subr.mxu0 0.0
        %3923 = vmatpush1.xpose.msra.mxu0 0.0
        %3924 = vmatprep.subr.mxu0 0.0
        %3925 = vmatpush1.xpose.msra.mxu0 0.0
        %3926 = vmatprep.subr.mxu0 0.0
        %3927 = vmatpush1.xpose.msra.mxu0 0.0
        %3928 = vmatprep.subr.mxu0 0.0
        %3929 = vmatpush1.xpose.msra.mxu0 0.0
        %3930 = vmatprep.subr.mxu0 0.0
        %3931 = vmatpush1.xpose.msra.mxu0 0.0
        %3932 = vmatprep.subr.mxu0 0.0
        %3933 = vmatpush1.xpose.msra.mxu0 0.0
        %3934 = vmatprep.subr.mxu0 0.0
        %3935 = vmatpush1.xpose.msra.mxu0 0.0
        %3936 = vmatprep.subr.mxu0 0.0
        %3937 = vmatpush1.xpose.msra.mxu0 0.0
        %3938 = vmatprep.subr.mxu0 0.0
        %3939 = vmatpush1.xpose.msra.mxu0 0.0
        %3940 = vmatprep.subr.mxu0 0.0
        %3941 = vmatpush1.xpose.msra.mxu0 0.0
        %3942 = vmatprep.subr.mxu0 0.0
        %3943 = vmatpush1.xpose.msra.mxu0 0.0
        %3944 = vmatprep.subr.mxu0 0.0
        %3945 = vmatpush1.xpose.msra.mxu0 0.0
        %3946 = vmatprep.subr.mxu0 0.0
        %3947 = vmatpush1.xpose.msra.mxu0 0.0
        %3948 = vmatprep.subr.mxu0 0.0
        %3949 = vmatpush1.xpose.msra.mxu0 0.0
        %3950 = vmatprep.subr.mxu0 0.0
        %3951 = vmatpush1.xpose.msra.mxu0 0.0
        %3952 = vmatprep.subr.mxu0 0.0
        %3953 = vmatpush1.xpose.msra.mxu0 0.0
        %3954 = vmatprep.subr.mxu0 0.0
        %3955 = vmatpush1.xpose.msra.mxu0 0.0
        %3956 = vmatprep.subr.mxu0 0.0
        %3957 = vmatpush1.xpose.msra.mxu0 0.0
        %3958 = vmatprep.subr.mxu0 0.0
        %3959 = vmatpush1.xpose.msra.mxu0 0.0
        %3960 = vmatprep.subr.mxu0 0.0
        %3961 = vmatpush1.xpose.msra.mxu0 0.0
        %3962 = vmatprep.subr.mxu0 0.0
        %3963 = vmatpush1.xpose.msra.mxu0 0.0
        %3964 = vmatprep.subr.mxu0 0.0
        %3965 = vmatpush1.xpose.msra.mxu0 0.0
        %3966 = vmatprep.subr.mxu0 0.0
        %3967 = vmatpush1.xpose.msra.mxu0 0.0
        %3968 = vmatprep.subr.mxu0 0.0
        %3969 = vmatpush1.xpose.msra.mxu0 0.0
        %3970 = vmatprep.subr.mxu0 0.0
        %3971 = vmatpush1.xpose.msra.mxu0 0.0
        %3972 = vmatprep.subr.mxu0 0.0
        %3973 = vmatpush1.xpose.msra.mxu0 0.0
        %3974 = vmatprep.mubr.f32.mxu0 0.0
        %3975 = vmatmul.mubr.f32.gmra.mrb[0].mxu0 %v3905
        %v3976 = vpop.f32.mrb[0].mxu0
        %v3977 = vadd.f32 0.0, %v3976
        %v3978 = vpop.f32.mrb[0].mxu0
        %3979 = vdwg.mxu0
        %s3980 = scalar_lea.vmem %s8, 24
        %v3981 = vld [vmem:[%s3980] sm:$0xf]
        %v3983 = vsel %vm1843, %v3977, 0
        %v3986 = vsel %vm1847, %v3981, 0
        %3988 = vmatprep.subr.mxu0 0.0
        %3989 = vmatpush1.msra.mxu0 %v3986
        %3990 = vmatprep.subr.mxu0 0.0
        %3991 = vmatpush1.msra.mxu0 0.0
        %3992 = vmatprep.subr.mxu0 0.0
        %3993 = vmatpush1.msra.mxu0 0.0
        %3994 = vmatprep.subr.mxu0 0.0
        %3995 = vmatpush1.msra.mxu0 0.0
        %3996 = vmatprep.subr.mxu0 0.0
        %3997 = vmatpush1.msra.mxu0 0.0
        %3998 = vmatprep.subr.mxu0 0.0
        %3999 = vmatpush1.msra.mxu0 0.0
        %4000 = vmatprep.subr.mxu0 0.0
        %4001 = vmatpush1.msra.mxu0 0.0
        %4002 = vmatprep.subr.mxu0 0.0
        %4003 = vmatpush1.msra.mxu0 0.0
        %4004 = vmatprep.subr.mxu0 0.0
        %4005 = vmatpush1.msra.mxu0 0.0
        %4006 = vmatprep.subr.mxu0 0.0
        %4007 = vmatpush1.msra.mxu0 0.0
        %4008 = vmatprep.subr.mxu0 0.0
        %4009 = vmatpush1.msra.mxu0 0.0
        %4010 = vmatprep.subr.mxu0 0.0
        %4011 = vmatpush1.msra.mxu0 0.0
        %4012 = vmatprep.subr.mxu0 0.0
        %4013 = vmatpush1.msra.mxu0 0.0
        %4014 = vmatprep.subr.mxu0 0.0
        %4015 = vmatpush1.msra.mxu0 0.0
        %4016 = vmatprep.subr.mxu0 0.0
        %4017 = vmatpush1.msra.mxu0 0.0
        %4018 = vmatprep.subr.mxu0 0.0
        %4019 = vmatpush1.msra.mxu0 0.0
        %4020 = vmatprep.subr.mxu0 0.0
        %4021 = vmatpush1.msra.mxu0 0.0
        %4022 = vmatprep.subr.mxu0 0.0
        %4023 = vmatpush1.msra.mxu0 0.0
        %4024 = vmatprep.subr.mxu0 0.0
        %4025 = vmatpush1.msra.mxu0 0.0
        %4026 = vmatprep.subr.mxu0 0.0
        %4027 = vmatpush1.msra.mxu0 0.0
        %4028 = vmatprep.subr.mxu0 0.0
        %4029 = vmatpush1.msra.mxu0 0.0
        %4030 = vmatprep.subr.mxu0 0.0
        %4031 = vmatpush1.msra.mxu0 0.0
        %4032 = vmatprep.subr.mxu0 0.0
        %4033 = vmatpush1.msra.mxu0 0.0
        %4034 = vmatprep.subr.mxu0 0.0
        %4035 = vmatpush1.msra.mxu0 0.0
        %4036 = vmatprep.subr.mxu0 0.0
        %4037 = vmatpush1.msra.mxu0 0.0
        %4038 = vmatprep.subr.mxu0 0.0
        %4039 = vmatpush1.msra.mxu0 0.0
        %4040 = vmatprep.subr.mxu0 0.0
        %4041 = vmatpush1.msra.mxu0 0.0
        %4042 = vmatprep.subr.mxu0 0.0
        %4043 = vmatpush1.msra.mxu0 0.0
        %4044 = vmatprep.subr.mxu0 0.0
        %4045 = vmatpush1.msra.mxu0 0.0
        %4046 = vmatprep.subr.mxu0 0.0
        %4047 = vmatpush1.msra.mxu0 0.0
        %4048 = vmatprep.subr.mxu0 0.0
        %4049 = vmatpush1.msra.mxu0 0.0
        %4050 = vmatprep.subr.mxu0 0.0
        %4051 = vmatpush1.msra.mxu0 0.0
        %4052 = vmatprep.mubr.f32.mxu0 0.0
        %4053 = vmatmul.mubr.f32.gmra.mrb[0].mxu0 %v3983
        %v4054 = vpop.f32.mrb[0].mxu0
        %v4055 = vadd.f32 0.0, %v4054
        %v4056 = vpop.f32.mrb[0].mxu0
        %4057 = vdwg.mxu0
        %v4058 = vadd.f32 %v3729, %v4055
        %s4059 = scalar_lea.vmem %s2, 224
        %v4060 = vld [vmem:[%s4059] sm:$0xff]
        %v4061 = vld [vmem:[%s4059 + $0x8] sm:$0xff]
        %v4062 = vld [vmem:[%s4059 + $0x10] sm:$0xff]
        %v4063 = vld [vmem:[%s4059 + $0x18] sm:$0xff]
        %s4064 = scalar_lea.vmem %s3, 7
        %v4065 = vld [vmem:[%s4064] sm:$0x1]
        %v4067 = vlaneseq
        %v4068 = vshrl.u32 %v4067, 7
        %v4069 = vsub.s32 0, %v4068
        %v4070 = vrot.slane %v4065, %v4069
        %4072 = vmatprep.subr.mxu0 0.0
        %4073 = vmatpush1.msra.mxu0 %v4060
        %4074 = vmatprep.subr.mxu0 0.0
        %4075 = vmatpush1.msra.mxu0 %v4061
        %4076 = vmatprep.subr.mxu0 0.0
        %4077 = vmatpush1.msra.mxu0 %v4062
        %4078 = vmatprep.subr.mxu0 0.0
        %4079 = vmatpush1.msra.mxu0 %v4063
        %4080 = vmatprep.subr.mxu0 0.0
        %4081 = vmatpush1.msra.mxu0 0.0
        %4082 = vmatprep.subr.mxu0 0.0
        %4083 = vmatpush1.msra.mxu0 0.0
        %4084 = vmatprep.subr.mxu0 0.0
        %4085 = vmatpush1.msra.mxu0 0.0
        %4086 = vmatprep.subr.mxu0 0.0
        %4087 = vmatpush1.msra.mxu0 0.0
        %4088 = vmatprep.subr.mxu0 0.0
        %4089 = vmatpush1.msra.mxu0 0.0
        %4090 = vmatprep.subr.mxu0 0.0
        %4091 = vmatpush1.msra.mxu0 0.0
        %4092 = vmatprep.subr.mxu0 0.0
        %4093 = vmatpush1.msra.mxu0 0.0
        %4094 = vmatprep.subr.mxu0 0.0
        %4095 = vmatpush1.msra.mxu0 0.0
        %4096 = vmatprep.subr.mxu0 0.0
        %4097 = vmatpush1.msra.mxu0 0.0
        %4098 = vmatprep.subr.mxu0 0.0
        %4099 = vmatpush1.msra.mxu0 0.0
        %4100 = vmatprep.subr.mxu0 0.0
        %4101 = vmatpush1.msra.mxu0 0.0
        %4102 = vmatprep.subr.mxu0 0.0
        %4103 = vmatpush1.msra.mxu0 0.0
        %4104 = vmatprep.subr.mxu0 0.0
        %4105 = vmatpush1.msra.mxu0 0.0
        %4106 = vmatprep.subr.mxu0 0.0
        %4107 = vmatpush1.msra.mxu0 0.0
        %4108 = vmatprep.subr.mxu0 0.0
        %4109 = vmatpush1.msra.mxu0 0.0
        %4110 = vmatprep.subr.mxu0 0.0
        %4111 = vmatpush1.msra.mxu0 0.0
        %4112 = vmatprep.subr.mxu0 0.0
        %4113 = vmatpush1.msra.mxu0 0.0
        %4114 = vmatprep.subr.mxu0 0.0
        %4115 = vmatpush1.msra.mxu0 0.0
        %4116 = vmatprep.subr.mxu0 0.0
        %4117 = vmatpush1.msra.mxu0 0.0
        %4118 = vmatprep.subr.mxu0 0.0
        %4119 = vmatpush1.msra.mxu0 0.0
        %4120 = vmatprep.subr.mxu0 0.0
        %4121 = vmatpush1.msra.mxu0 0.0
        %4122 = vmatprep.subr.mxu0 0.0
        %4123 = vmatpush1.msra.mxu0 0.0
        %4124 = vmatprep.subr.mxu0 0.0
        %4125 = vmatpush1.msra.mxu0 0.0
        %4126 = vmatprep.subr.mxu0 0.0
        %4127 = vmatpush1.msra.mxu0 0.0
        %4128 = vmatprep.subr.mxu0 0.0
        %4129 = vmatpush1.msra.mxu0 0.0
        %4130 = vmatprep.subr.mxu0 0.0
        %4131 = vmatpush1.msra.mxu0 0.0
        %4132 = vmatprep.subr.mxu0 0.0
        %4133 = vmatpush1.msra.mxu0 0.0
        %4134 = vmatprep.subr.mxu0 0.0
        %4135 = vmatpush1.msra.mxu0 0.0
        %4136 = vmatprep.mubr.f32.mxu0 0.0
        %4137 = vmatmul.mubr.f32.gmra.mrb[0].mxu0 %v1769
        %v4138 = vpop.f32.mrb[0].mxu0
        %v4139 = vadd.f32 %v4070, %v4138
        %v4140 = vpop.f32.mrb[0].mxu0
        %4141 = vdwg.mxu0
        %s4142 = scalar_lea.vmem [#allocation2], 28
        %v4143 = vld [vmem:[%s4142] sm:$0xf]
        %s4144 = scalar_lea.vmem [#allocation3], 28
        %v4145 = vld [vmem:[%s4144] sm:$0xf]
        %v4147 = vsel %vm1843, %v4139, 0
        %v4150 = vsel %vm1847, %v4143, 0
        %4152 = vmatprep.subr.mxu0 0.0
        %4153 = vmatpush1.msra.mxu0 %v4150
        %4154 = vmatprep.subr.mxu0 0.0
        %4155 = vmatpush1.msra.mxu0 0.0
        %4156 = vmatprep.subr.mxu0 0.0
        %4157 = vmatpush1.msra.mxu0 0.0
        %4158 = vmatprep.subr.mxu0 0.0
        %4159 = vmatpush1.msra.mxu0 0.0
        %4160 = vmatprep.subr.mxu0 0.0
        %4161 = vmatpush1.msra.mxu0 0.0
        %4162 = vmatprep.subr.mxu0 0.0
        %4163 = vmatpush1.msra.mxu0 0.0
        %4164 = vmatprep.subr.mxu0 0.0
        %4165 = vmatpush1.msra.mxu0 0.0
        %4166 = vmatprep.subr.mxu0 0.0
        %4167 = vmatpush1.msra.mxu0 0.0
        %4168 = vmatprep.subr.mxu0 0.0
        %4169 = vmatpush1.msra.mxu0 0.0
        %4170 = vmatprep.subr.mxu0 0.0
        %4171 = vmatpush1.msra.mxu0 0.0
        %4172 = vmatprep.subr.mxu0 0.0
        %4173 = vmatpush1.msra.mxu0 0.0
        %4174 = vmatprep.subr.mxu0 0.0
        %4175 = vmatpush1.msra.mxu0 0.0
        %4176 = vmatprep.subr.mxu0 0.0
        %4177 = vmatpush1.msra.mxu0 0.0
        %4178 = vmatprep.subr.mxu0 0.0
        %4179 = vmatpush1.msra.mxu0 0.0
        %4180 = vmatprep.subr.mxu0 0.0
        %4181 = vmatpush1.msra.mxu0 0.0
        %4182 = vmatprep.subr.mxu0 0.0
        %4183 = vmatpush1.msra.mxu0 0.0
        %4184 = vmatprep.subr.mxu0 0.0
        %4185 = vmatpush1.msra.mxu0 0.0
        %4186 = vmatprep.subr.mxu0 0.0
        %4187 = vmatpush1.msra.mxu0 0.0
        %4188 = vmatprep.subr.mxu0 0.0
        %4189 = vmatpush1.msra.mxu0 0.0
        %4190 = vmatprep.subr.mxu0 0.0
        %4191 = vmatpush1.msra.mxu0 0.0
        %4192 = vmatprep.subr.mxu0 0.0
        %4193 = vmatpush1.msra.mxu0 0.0
        %4194 = vmatprep.subr.mxu0 0.0
        %4195 = vmatpush1.msra.mxu0 0.0
        %4196 = vmatprep.subr.mxu0 0.0
        %4197 = vmatpush1.msra.mxu0 0.0
        %4198 = vmatprep.subr.mxu0 0.0
        %4199 = vmatpush1.msra.mxu0 0.0
        %4200 = vmatprep.subr.mxu0 0.0
        %4201 = vmatpush1.msra.mxu0 0.0
        %4202 = vmatprep.subr.mxu0 0.0
        %4203 = vmatpush1.msra.mxu0 0.0
        %4204 = vmatprep.subr.mxu0 0.0
        %4205 = vmatpush1.msra.mxu0 0.0
        %4206 = vmatprep.subr.mxu0 0.0
        %4207 = vmatpush1.msra.mxu0 0.0
        %4208 = vmatprep.subr.mxu0 0.0
        %4209 = vmatpush1.msra.mxu0 0.0
        %4210 = vmatprep.subr.mxu0 0.0
        %4211 = vmatpush1.msra.mxu0 0.0
        %4212 = vmatprep.subr.mxu0 0.0
        %4213 = vmatpush1.msra.mxu0 0.0
        %4214 = vmatprep.subr.mxu0 0.0
        %4215 = vmatpush1.msra.mxu0 0.0
        %4216 = vmatprep.mubr.f32.mxu0 0.0
        %4217 = vmatmul.mubr.f32.gmra.mrb[0].mxu0 %v4147
        %v4218 = vpop.f32.mrb[0].mxu0
        %v4219 = vadd.f32 0.0, %v4218
        %v4220 = vpop.f32.mrb[0].mxu0
        %4221 = vdwg.mxu0
        %v4222 = vsel %vm1921, %v4219, -inf
        %4223 = vmax.xlane.f32.xlu0 %v4222
        %v4224 = vpop.xlane.xlu0 %4223
        %v4225 = vsub.f32 %v4219, %v4224
        %v4226 = vmul.f32 %v4225, 1.442695
        %v4227 = vpow.pop %v4226
        %v4228 = vsel %vm1921, %v4227, 0.0
        %4229 = vadd.xlane.f32.xlu0 %v4228
        %v4230 = vpop.xlane.xlu0 %4229
        %v4231 = vrcp.pop %v4230
        %v4232 = vmul.f32 %v4227, %v4231
        %v4234 = vsel %vm1921, %v4232, 0
        %v4237 = vsel %vm1921, %v4145, 0
        %4239 = vmatprep.subr.mxu0 0.0
        %4240 = vmatpush1.xpose.msra.mxu0 %v4237
        %4241 = vmatprep.subr.mxu0 0.0
        %4242 = vmatpush1.xpose.msra.mxu0 0.0
        %4243 = vmatprep.subr.mxu0 0.0
        %4244 = vmatpush1.xpose.msra.mxu0 0.0
        %4245 = vmatprep.subr.mxu0 0.0
        %4246 = vmatpush1.xpose.msra.mxu0 0.0
        %4247 = vmatprep.subr.mxu0 0.0
        %4248 = vmatpush1.xpose.msra.mxu0 0.0
        %4249 = vmatprep.subr.mxu0 0.0
        %4250 = vmatpush1.xpose.msra.mxu0 0.0
        %4251 = vmatprep.subr.mxu0 0.0
        %4252 = vmatpush1.xpose.msra.mxu0 0.0
        %4253 = vmatprep.subr.mxu0 0.0
        %4254 = vmatpush1.xpose.msra.mxu0 0.0
        %4255 = vmatprep.subr.mxu0 0.0
        %4256 = vmatpush1.xpose.msra.mxu0 0.0
        %4257 = vmatprep.subr.mxu0 0.0
        %4258 = vmatpush1.xpose.msra.mxu0 0.0
        %4259 = vmatprep.subr.mxu0 0.0
        %4260 = vmatpush1.xpose.msra.mxu0 0.0
        %4261 = vmatprep.subr.mxu0 0.0
        %4262 = vmatpush1.xpose.msra.mxu0 0.0
        %4263 = vmatprep.subr.mxu0 0.0
        %4264 = vmatpush1.xpose.msra.mxu0 0.0
        %4265 = vmatprep.subr.mxu0 0.0
        %4266 = vmatpush1.xpose.msra.mxu0 0.0
        %4267 = vmatprep.subr.mxu0 0.0
        %4268 = vmatpush1.xpose.msra.mxu0 0.0
        %4269 = vmatprep.subr.mxu0 0.0
        %4270 = vmatpush1.xpose.msra.mxu0 0.0
        %4271 = vmatprep.subr.mxu0 0.0
        %4272 = vmatpush1.xpose.msra.mxu0 0.0
        %4273 = vmatprep.subr.mxu0 0.0
        %4274 = vmatpush1.xpose.msra.mxu0 0.0
        %4275 = vmatprep.subr.mxu0 0.0
        %4276 = vmatpush1.xpose.msra.mxu0 0.0
        %4277 = vmatprep.subr.mxu0 0.0
        %4278 = vmatpush1.xpose.msra.mxu0 0.0
        %4279 = vmatprep.subr.mxu0 0.0
        %4280 = vmatpush1.xpose.msra.mxu0 0.0
        %4281 = vmatprep.subr.mxu0 0.0
        %4282 = vmatpush1.xpose.msra.mxu0 0.0
        %4283 = vmatprep.subr.mxu0 0.0
        %4284 = vmatpush1.xpose.msra.mxu0 0.0
        %4285 = vmatprep.subr.mxu0 0.0
        %4286 = vmatpush1.xpose.msra.mxu0 0.0
        %4287 = vmatprep.subr.mxu0 0.0
        %4288 = vmatpush1.xpose.msra.mxu0 0.0
        %4289 = vmatprep.subr.mxu0 0.0
        %4290 = vmatpush1.xpose.msra.mxu0 0.0
        %4291 = vmatprep.subr.mxu0 0.0
        %4292 = vmatpush1.xpose.msra.mxu0 0.0
        %4293 = vmatprep.subr.mxu0 0.0
        %4294 = vmatpush1.xpose.msra.mxu0 0.0
        %4295 = vmatprep.subr.mxu0 0.0
        %4296 = vmatpush1.xpose.msra.mxu0 0.0
        %4297 = vmatprep.subr.mxu0 0.0
        %4298 = vmatpush1.xpose.msra.mxu0 0.0
        %4299 = vmatprep.subr.mxu0 0.0
        %4300 = vmatpush1.xpose.msra.mxu0 0.0
        %4301 = vmatprep.subr.mxu0 0.0
        %4302 = vmatpush1.xpose.msra.mxu0 0.0
        %4303 = vmatprep.mubr.f32.mxu0 0.0
        %4304 = vmatmul.mubr.f32.gmra.mrb[0].mxu0 %v4234
        %v4305 = vpop.f32.mrb[0].mxu0
        %v4306 = vadd.f32 0.0, %v4305
        %v4307 = vpop.f32.mrb[0].mxu0
        %4308 = vdwg.mxu0
        %s4309 = scalar_lea.vmem %s8, 28
        %v4310 = vld [vmem:[%s4309] sm:$0xf]
        %v4312 = vsel %vm1843, %v4306, 0
        %v4315 = vsel %vm1847, %v4310, 0
        %4317 = vmatprep.subr.mxu0 0.0
        %4318 = vmatpush1.msra.mxu0 %v4315
        %4319 = vmatprep.subr.mxu0 0.0
        %4320 = vmatpush1.msra.mxu0 0.0
        %4321 = vmatprep.subr.mxu0 0.0
        %4322 = vmatpush1.msra.mxu0 0.0
        %4323 = vmatprep.subr.mxu0 0.0
        %4324 = vmatpush1.msra.mxu0 0.0
        %4325 = vmatprep.subr.mxu0 0.0
        %4326 = vmatpush1.msra.mxu0 0.0
        %4327 = vmatprep.subr.mxu0 0.0
        %4328 = vmatpush1.msra.mxu0 0.0
        %4329 = vmatprep.subr.mxu0 0.0
        %4330 = vmatpush1.msra.mxu0 0.0
        %4331 = vmatprep.subr.mxu0 0.0
        %4332 = vmatpush1.msra.mxu0 0.0
        %4333 = vmatprep.subr.mxu0 0.0
        %4334 = vmatpush1.msra.mxu0 0.0
        %4335 = vmatprep.subr.mxu0 0.0
        %4336 = vmatpush1.msra.mxu0 0.0
        %4337 = vmatprep.subr.mxu0 0.0
        %4338 = vmatpush1.msra.mxu0 0.0
        %4339 = vmatprep.subr.mxu0 0.0
        %4340 = vmatpush1.msra.mxu0 0.0
        %4341 = vmatprep.subr.mxu0 0.0
        %4342 = vmatpush1.msra.mxu0 0.0
        %4343 = vmatprep.subr.mxu0 0.0
        %4344 = vmatpush1.msra.mxu0 0.0
        %4345 = vmatprep.subr.mxu0 0.0
        %4346 = vmatpush1.msra.mxu0 0.0
        %4347 = vmatprep.subr.mxu0 0.0
        %4348 = vmatpush1.msra.mxu0 0.0
        %4349 = vmatprep.subr.mxu0 0.0
        %4350 = vmatpush1.msra.mxu0 0.0
        %4351 = vmatprep.subr.mxu0 0.0
        %4352 = vmatpush1.msra.mxu0 0.0
        %4353 = vmatprep.subr.mxu0 0.0
        %4354 = vmatpush1.msra.mxu0 0.0
        %4355 = vmatprep.subr.mxu0 0.0
        %4356 = vmatpush1.msra.mxu0 0.0
        %4357 = vmatprep.subr.mxu0 0.0
        %4358 = vmatpush1.msra.mxu0 0.0
        %4359 = vmatprep.subr.mxu0 0.0
        %4360 = vmatpush1.msra.mxu0 0.0
        %4361 = vmatprep.subr.mxu0 0.0
        %4362 = vmatpush1.msra.mxu0 0.0
        %4363 = vmatprep.subr.mxu0 0.0
        %4364 = vmatpush1.msra.mxu0 0.0
        %4365 = vmatprep.subr.mxu0 0.0
        %4366 = vmatpush1.msra.mxu0 0.0
        %4367 = vmatprep.subr.mxu0 0.0
        %4368 = vmatpush1.msra.mxu0 0.0
        %4369 = vmatprep.subr.mxu0 0.0
        %4370 = vmatpush1.msra.mxu0 0.0
        %4371 = vmatprep.subr.mxu0 0.0
        %4372 = vmatpush1.msra.mxu0 0.0
        %4373 = vmatprep.subr.mxu0 0.0
        %4374 = vmatpush1.msra.mxu0 0.0
        %4375 = vmatprep.subr.mxu0 0.0
        %4376 = vmatpush1.msra.mxu0 0.0
        %4377 = vmatprep.subr.mxu0 0.0
        %4378 = vmatpush1.msra.mxu0 0.0
        %4379 = vmatprep.subr.mxu0 0.0
        %4380 = vmatpush1.msra.mxu0 0.0
        %4381 = vmatprep.mubr.f32.mxu0 0.0
        %4382 = vmatmul.mubr.f32.gmra.mrb[0].mxu0 %v4312
        %v4383 = vpop.f32.mrb[0].mxu0
        %v4384 = vadd.f32 0.0, %v4383
        %v4385 = vpop.f32.mrb[0].mxu0
        %4386 = vdwg.mxu0
        %v4387 = vadd.f32 %v4058, %v4384
        %v4388 = vld [vmem:[%s9] sm:$0x1]
        %v4390 = vlaneseq
        %v4391 = vshrl.u32 %v4390, 7
        %v4392 = vsub.s32 0, %v4391
        %v4393 = vrot.slane %v4388, %v4392
        %v4395 = vadd.f32 %v4387, %v4393
        %4396 = vst.msk [vmem:[%s389] sm:$0xff] %vm1767, %v4395
        %s4397 = sand.u32 %s268, 1
        %s4398 = scalar_lea.sflag [#allocation5], %s4397
        %s4399 = sand.u32 %s268, 1
        %s4400 = smul.addr %s4399, 8
        %s4401 = scalar_lea.vmem [#allocation4], %s4400
        // Predicated region
        $region65: #{tpu_custom_call.1} parent=59 // pred_check
          %p4402 = pneg %p278
        $region66: #{tpu_custom_call.1} parent=59 // pred_check_branch
          %4404 = sbr.rel (%p4402) target = $region68
        $region67: #{tpu_custom_call.1} parent=59 // pred_region
          %s4406 = ssub.s32 128, 128
          %4407 = vsyncadd %s4398, %s4406
          %s4408 = smul.addr %s28, 2
          %s4409 = sadd.s32 %s29, %s4408
          %s4410 = smul.addr %s4409, 128
          %s4411 = scalar_lea.hbm %s10, %s4410
          %s4413 = sshll.u32 %s4401, 4
          %s4414 = int_to_ptr.vmem [resolvable:$true] %s4413
          %4416 = dma.vmem_to_hbm [thread:$0]  %s4414, 128, %s4411, %s4398
        $region68: #{tpu_custom_call.1} parent=59 // pred_fallthru
          _
      $region60: #{tpu_custom_call.1} parent=5 // pred_fallthru
        _
      %p4417 = scmp.le.s32.totalorder 2, %s19
      // Predicated region
      $region69: #{tpu_custom_call.1} parent=5 // pred_check
        %p4418 = pneg %p4417
      $region70: #{tpu_custom_call.1} parent=5 // pred_check_branch
        %4420 = sbr.rel (%p4418) target = $region72
      $region71: #{tpu_custom_call.1} parent=5 // pred_region
        %s4421 = ssub.s32 %s19, 2
        // Predicated region
        $region73: #{tpu_custom_call.1} parent=71 // pred_check
          %p4422 = pneg %p284
        $region74: #{tpu_custom_call.1} parent=71 // pred_check_branch
          %4424 = sbr.rel (%p4422) target = $region76
        $region75: #{tpu_custom_call.1} parent=71 // pred_region
          %s4425 = sand.u32 %s269, 1
          %s4426 = scalar_lea.sflag [#allocation5], %s4425
          %s4427 = sand.u32 %s269, 1
          %s4428 = smul.addr %s4427, 8
          %s4429 = scalar_lea.vmem [#allocation4], %s4428
          %4430 = dma.done %s4426, 128
        $region76: #{tpu_custom_call.1} parent=71 // pred_fallthru
          _
      $region72: #{tpu_custom_call.1} parent=5 // pred_fallthru
        _
    $region6: #{tpu_custom_call.1} parent=1 // loop_footer
      %s23 = sadd.s32 1, %s19
    $region7: #{tpu_custom_call.1} parent=1 // loop_footer_branch
      %18 = sbr.rel target = $region3
    $region8: #{tpu_custom_call.1} parent=1 // loop_exit
      _
    %4431 = vsyncpa [#allocation5], 1
    %s4432 = scalar_lea.sflag [#allocation5], 1
    %4433 = vsyncpa %s4432, 1

</llo_original>
